<compile_context>
chip_gen: v7x
topology: tpu7x:2x2x1
jax: 0.10.0
libtpu: 0.0.40
codegen_flags: <defaults>
</compile_context>

<pallas_src>
import functools
import math

import jax
import jax.numpy as jnp
from jax.experimental import pallas as pl
from jax.experimental.pallas import tpu as pltpu


# ----------------------------------------------------------------------------
# Helpers
# ----------------------------------------------------------------------------
def _gelu(x):
    c = 0.7978845608028654  # sqrt(2/pi)
    return 0.5 * x * (1.0 + jnp.tanh(c * (x + 0.044715 * x * x * x)))


def _pick_tile(dim, pref, align):
    """Largest tile <= pref that is either a multiple-of-`align` divisor of dim,
    or the full dim (keeps every BlockSpec (8,128)-legal and avoids padding)."""
    if dim <= pref:
        return dim
    t = (pref // align) * align
    while t >= align:
        if dim % t == 0:
            return t
        t -= align
    return dim


def _cparams(dimension_semantics):
    return pltpu.CompilerParams(
        dimension_semantics=dimension_semantics,
        vmem_limit_bytes=48 * 1024 * 1024,  # explicit; safe on v5e/v6e/v7x
    )


# ----------------------------------------------------------------------------
# Tiled GEMM (bias / GELU / residual fused in the epilogue)
# ----------------------------------------------------------------------------
def _linear_kernel(x_ref, w_ref, b_ref, o_ref, acc_ref, *, act):
    @pl.when(pl.program_id(2) == 0)
    def _():
        acc_ref[...] = jnp.zeros_like(acc_ref)

    acc_ref[...] += jnp.dot(
        x_ref[...].astype(jnp.bfloat16), w_ref[...],
        preferred_element_type=jnp.float32)

    @pl.when(pl.program_id(2) == pl.num_programs(2) - 1)
    def _():
        y = acc_ref[...] + b_ref[...]
        if act == "gelu":
            y = _gelu(y)
        o_ref[...] = y


def _linear_res_kernel(x_ref, w_ref, b_ref, r_ref, o_ref, acc_ref, *, act):
    @pl.when(pl.program_id(2) == 0)
    def _():
        acc_ref[...] = jnp.zeros_like(acc_ref)

    acc_ref[...] += jnp.dot(
        x_ref[...].astype(jnp.bfloat16), w_ref[...],
        preferred_element_type=jnp.float32)

    @pl.when(pl.program_id(2) == pl.num_programs(2) - 1)
    def _():
        y = acc_ref[...] + b_ref[...]
        if act == "gelu":
            y = _gelu(y)
        o_ref[...] = y + r_ref[...]


def pallas_linear(x, w, b, act=None, residual=None,
                  tm_pref=512, tn_pref=512, tk_pref=512):
    """y = act(x @ w + b) (+ residual).  x:(M,K) f32, w:(K,N) bf16, b:(N,) f32."""
    M, K = x.shape
    N = w.shape[1]
    tm = _pick_tile(M, tm_pref, 8)
    tn = _pick_tile(N, tn_pref, 128)
    tk = _pick_tile(K, tk_pref, 128)
    grid = (M // tm, N // tn, K // tk)

    in_specs = [
        pl.BlockSpec((tm, tk), lambda i, j, k: (i, k)),
        pl.BlockSpec((tk, tn), lambda i, j, k: (k, j)),
        pl.BlockSpec((1, tn), lambda i, j, k: (0, j)),
    ]
    inputs = [x, w, b.reshape(1, N).astype(jnp.float32)]
    if residual is not None:
        in_specs.append(pl.BlockSpec((tm, tn), lambda i, j, k: (i, j)))
        inputs.append(residual)
        kern = functools.partial(_linear_res_kernel, act=act)
    else:
        kern = functools.partial(_linear_kernel, act=act)

    return pl.pallas_call(
        kern,
        out_shape=jax.ShapeDtypeStruct((M, N), jnp.float32),
        grid=grid,
        in_specs=in_specs,
        out_specs=pl.BlockSpec((tm, tn), lambda i, j, k: (i, j)),
        scratch_shapes=[pltpu.VMEM((tm, tn), jnp.float32)],
        compiler_params=_cparams(("parallel", "parallel", "arbitrary")),
    )(*inputs)


# ----------------------------------------------------------------------------
# Row-tiled LayerNorm
# ----------------------------------------------------------------------------
def _layernorm_kernel(x_ref, g_ref, b_ref, o_ref):
    x = x_ref[...]
    mu = jnp.mean(x, axis=-1, keepdims=True)
    xc = x - mu
    var = jnp.mean(xc * xc, axis=-1, keepdims=True)
    o_ref[...] = xc * jax.lax.rsqrt(var + 1e-5) * g_ref[...] + b_ref[...]


def pallas_layernorm(x, gamma, beta, tm_pref=1024):
    M, D = x.shape
    tm = _pick_tile(M, tm_pref, 8)
    return pl.pallas_call(
        _layernorm_kernel,
        out_shape=jax.ShapeDtypeStruct((M, D), jnp.float32),
        grid=(M // tm,),
        in_specs=[
            pl.BlockSpec((tm, D), lambda i: (i, 0)),
            pl.BlockSpec((1, D), lambda i: (0, 0)),
            pl.BlockSpec((1, D), lambda i: (0, 0)),
        ],
        out_specs=pl.BlockSpec((tm, D), lambda i: (i, 0)),
        compiler_params=_cparams(("parallel",)),
    )(x, gamma.reshape(1, D), beta.reshape(1, D))


# ----------------------------------------------------------------------------
# Attention: heads selected via index_map, multiple heads packed per grid step
# ----------------------------------------------------------------------------
def _heads_per_block(n_heads, dh):
    for hpb in range(1, n_heads + 1):
        if n_heads % hpb == 0 and (hpb * dh) % 128 == 0:
            return hpb           # lane-dense (multiple of 128) head packing
    return n_heads               # fall back to the full (last-dim) block


def _attn_kernel(q_ref, k_ref, v_ref, o_ref, *, scale, hpb, dh):
    T = q_ref.shape[1]
    q = q_ref[0].reshape(T, hpb, dh).astype(jnp.bfloat16)
    k = k_ref[0].reshape(T, hpb, dh).astype(jnp.bfloat16)
    v = v_ref[0].reshape(T, hpb, dh).astype(jnp.bfloat16)

    s = jnp.einsum("qhd,khd->hqk", q, k,
                   preferred_element_type=jnp.float32) * scale     # (hpb, T, T)
    s = s - jnp.max(s, axis=-1, keepdims=True)
    p = jnp.exp(s)
    p = p * pl.reciprocal(jnp.sum(p, axis=-1, keepdims=True), approx=True)
    o = jnp.einsum("hqk,khd->qhd", p.astype(jnp.bfloat16), v,
                   preferred_element_type=jnp.float32)              # (T, hpb, dh)
    o_ref[0] = o.reshape(T, hpb * dh)


def pallas_attention(q, k, v, n_heads, scale):
    """q,k,v: (B, S, D) with heads contiguous in the last dim -> (B, S, D)."""
    B, S, D = q.shape
    dh = D // n_heads
    hpb = _heads_per_block(n_heads, dh)
    hd = hpb * dh
    spec = pl.BlockSpec((1, S, hd), lambda b, h: (b, 0, h))
    return pl.pallas_call(
        functools.partial(_attn_kernel, scale=scale, hpb=hpb, dh=dh),
        out_shape=jax.ShapeDtypeStruct((B, S, D), jnp.float32),
        grid=(B, n_heads // hpb),
        in_specs=[spec, spec, spec],
        out_specs=spec,
        compiler_params=_cparams(("parallel", "parallel")),
    )(q, k, v)
    # TODO(synk): for real Whisper S=1500, add KV tiling (flash-style online
    #             softmax) so the (T,T) score block fits comfortably on v7x.


# ----------------------------------------------------------------------------
# Conv1d stem: padded input split into `stride` phases, taps accumulated
# in-kernel via unit-stride pl.ds windows (no im2col materialization).
# ----------------------------------------------------------------------------
def _conv_kernel(x_ref, w_ref, b_ref, o_ref, *, taps, tt, act):
    # x_ref: (1, n_phase, Tp, Cin)   w_ref: (K, Cin, Cout) bf16
    # b_ref: (1, Cout)               o_ref: (1, tt, Cout)
    t0 = pl.program_id(1) * tt
    cout = o_ref.shape[-1]
    acc = jnp.zeros((tt, cout), jnp.float32)
    for kk, (phase, off) in enumerate(taps):
        xs = x_ref[0, phase, pl.ds(t0 + off, tt), :].astype(jnp.bfloat16)
        acc += jnp.dot(xs, w_ref[kk], preferred_element_type=jnp.float32)
    y = acc + b_ref[...]
    if act == "gelu":
        y = _gelu(y)
    o_ref[0] = y


def pallas_conv1d(x_nlc, w_kcc, b, *, stride, pad, act=None, tt_pref=512):
    """x_nlc:(B,T,Cin) f32, w_kcc:(K,Cin,Cout) bf16, b:(Cout,) -> (B,T_out,Cout)."""
    B, T, C_in = x_nlc.shape
    K, _, C_out = w_kcc.shape
    T_pad = T + 2 * pad
    T_out = (T_pad - K) // stride + 1

    x_pad = jnp.pad(x_nlc, ((0, 0), (pad, pad), (0, 0)))        # (B, T_pad, Cin)

    # Split the time axis into `stride` phases: conv tap k reads phase (k%stride)
    # at phase-row offset k//stride, so the kernel only needs unit-stride slices.
    taps = [(k % stride, k // stride) for k in range(K)]
    max_off = max(off for _, off in taps)
    Tp = T_out + max_off
    phases = []
    for p_idx in range(stride):
        ph = x_pad[:, p_idx::stride, :]
        if ph.shape[1] < Tp:
            ph = jnp.pad(ph, ((0, 0), (0, Tp - ph.shape[1]), (0, 0)))
        else:
            ph = ph[:, :Tp, :]
        phases.append(ph)
    xp = jnp.stack(phases, axis=1)                               # (B, stride, Tp, Cin)

    tt = _pick_tile(T_out, tt_pref, 8)
    return pl.pallas_call(
        functools.partial(_conv_kernel, taps=taps, tt=tt, act=act),
        out_shape=jax.ShapeDtypeStruct((B, T_out, C_out), jnp.float32),
        grid=(B, T_out // tt),
        in_specs=[
            pl.BlockSpec((1, stride, Tp, C_in), lambda bi, ti: (bi, 0, 0, 0)),
            pl.BlockSpec((K, C_in, C_out), lambda bi, ti: (0, 0, 0)),
            pl.BlockSpec((1, C_out), lambda bi, ti: (0, 0)),
        ],
        out_specs=pl.BlockSpec((1, tt, C_out), lambda bi, ti: (bi, ti, 0)),
        compiler_params=_cparams(("parallel", "parallel")),
    )(xp, w_kcc, b.reshape(1, C_out))


# ----------------------------------------------------------------------------
# Whisper-base-style encoder (scaled-down dims), deterministic params
# ----------------------------------------------------------------------------
def sinusoids(length, channels):
    inc = math.log(10000.0) / (channels // 2 - 1)
    inv = jnp.exp(-inc * jnp.arange(channels // 2, dtype=jnp.float32))
    t = jnp.arange(length, dtype=jnp.float32)[:, None] * inv[None, :]
    return jnp.concatenate([jnp.sin(t), jnp.cos(t)], axis=1)


def init_params(key, n_mels, d_model, n_heads, d_ffn, n_layers):
    def dense(k, shape):
        # weights stored bf16 once (MXU-native; halves weight DMA)
        return (0.02 * jax.random.normal(k, shape, dtype=jnp.float32)).astype(jnp.bfloat16)

    keys = iter(jax.random.split(key, 8 + 8 * n_layers))
    p = {
        "conv1_w": dense(next(keys), (3, n_mels, d_model)),     # (K, Cin, Cout)
        "conv1_b": jnp.zeros((d_model,), jnp.float32),
        "conv2_w": dense(next(keys), (3, d_model, d_model)),
        "conv2_b": jnp.zeros((d_model,), jnp.float32),
        "lnf_g": jnp.ones((d_model,), jnp.float32),
        "lnf_b": jnp.zeros((d_model,), jnp.float32),
        "layers": [],
    }
    for _ in range(n_layers):
        p["layers"].append({
            "ln1_g": jnp.ones((d_model,), jnp.float32),
            "ln1_b": jnp.zeros((d_model,), jnp.float32),
            # fused q|k|v projection; k_proj has no bias (kept zero)
            "w_qkv": dense(next(keys), (d_model, 3 * d_model)),
            "b_qkv": jnp.zeros((3 * d_model,), jnp.float32),
            "wo": dense(next(keys), (d_model, d_model)),
            "bo": jnp.zeros((d_model,), jnp.float32),
            "ln2_g": jnp.ones((d_model,), jnp.float32),
            "ln2_b": jnp.zeros((d_model,), jnp.float32),
            "w1": dense(next(keys), (d_model, d_ffn)),
            "b1": jnp.zeros((d_ffn,), jnp.float32),
            "w2": dense(next(keys), (d_ffn, d_model)),
            "b2": jnp.zeros((d_model,), jnp.float32),
        })
    return p


def encoder_layer(h, p, n_heads):
    B, S, D = h.shape
    dh = D // n_heads
    scale = dh ** -0.5
    h2 = h.reshape(B * S, D)

    # --- self-attention block (pre-norm), fused QKV + fused residual ---
    hn = pallas_layernorm(h2, p["ln1_g"], p["ln1_b"])
    qkv = pallas_linear(hn, p["w_qkv"], p["b_qkv"])              # (B*S, 3D)
    q = qkv[:, :D].reshape(B, S, D)
    k = qkv[:, D:2 * D].reshape(B, S, D)
    v = qkv[:, 2 * D:].reshape(B, S, D)
    attn = pallas_attention(q, k, v, n_heads, scale).reshape(B * S, D)
    h2 = pallas_linear(attn, p["wo"], p["bo"], residual=h2)      # out-proj + residual

    # --- MLP block (pre-norm), fused GELU + fused residual ---
    hn = pallas_layernorm(h2, p["ln2_g"], p["ln2_b"])
    f = pallas_linear(hn, p["w1"], p["b1"], act="gelu")
    h2 = pallas_linear(f, p["w2"], p["b2"], residual=h2)
    return h2.reshape(B, S, D)


def whisper_base_feats(params, x, n_heads):
    """x: (B, n_mels, T) mel features -> (B, T//2, d_model) encoder features."""
    h = x.transpose(0, 2, 1)                                     # (B, T, n_mels) once
    h = pallas_conv1d(h, params["conv1_w"], params["conv1_b"],
                      stride=1, pad=1, act="gelu")               # (B, T, D)
    h = pallas_conv1d(h, params["conv2_w"], params["conv2_b"],
                      stride=2, pad=1, act="gelu")               # (B, T//2, D)
    B, S, D = h.shape
    h = h + sinusoids(S, D)[None]                                # positional embedding
    for lp in params["layers"]:
        h = encoder_layer(h, lp, n_heads)
    h = pallas_layernorm(h.reshape(B * S, D), params["lnf_g"], params["lnf_b"])
    return h.reshape(B, S, D)


# ----------------------------------------------------------------------------
if __name__ == "__main__":
    # Small, Whisper-base-like dims
    B, N_MELS, T = 2, 16, 16
    D_MODEL, N_HEADS, D_FFN, N_LAYERS = 64, 4, 128, 2

    key = jax.random.PRNGKey(0)
    k_x, k_p = jax.random.split(key)
    x = jax.random.normal(k_x, (B, N_MELS, T), dtype=jnp.float32)   # mel features (NCL)
    params = init_params(k_p, N_MELS, D_MODEL, N_HEADS, D_FFN, N_LAYERS)

    fn = jax.jit(functools.partial(whisper_base_feats, n_heads=N_HEADS))
    out = fn(params, x)
    out = jax.block_until_ready(out)
    assert out.shape == (B, T // 2, D_MODEL), out.shape
    assert bool(jnp.all(jnp.isfinite(out)))
    print("KERNEL_OK")
</pallas_src>

<mosaic_0001>
module attributes {stable_mosaic.version = 11 : i64} {
  func.func @_conv_kernel(%arg0: i32, %arg1: i32, %arg2: memref<1x1x18x16xf32, #tpu.memory_space<vmem>>, %arg3: memref<3x16x64xbf16, #tpu.memory_space<vmem>>, %arg4: memref<1x64xf32, #tpu.memory_space<vmem>>, %arg5: memref<1x16x64xf32, #tpu.memory_space<vmem>>) attributes {dimension_semantics = [#tpu.dimension_semantics<parallel>, #tpu.dimension_semantics<parallel>], iteration_bounds = array<i64: 2, 1>, scalar_prefetch = 0 : i64, scratch_operands = 0 : i64, tpu.core_type = #tpu.core_type<tc>, window_params = [{transform_indices = @transform_0, window_bounds = array<i64: 1, 1, 18, 16>}, {pipeline_mode = #tpu.pipeline_mode<synchronous>, transform_indices = @transform_1, window_bounds = array<i64: 3, 16, 64>}, {pipeline_mode = #tpu.pipeline_mode<synchronous>, transform_indices = @transform_2, window_bounds = array<i64: 1, 64>}, {transform_indices = @transform_3, window_bounds = array<i64: 1, 16, 64>}]} {
    %c16_i32 = arith.constant 16 : i32
    %0 = arith.muli %arg1, %c16_i32 : i32
    %cst = arith.constant 0.000000e+00 : f32
    %1 = vector.broadcast %cst : f32 to vector<16x64xf32>
    %c0_i32 = arith.constant 0 : i32
    %2 = arith.addi %0, %c0_i32 : i32
    %c0 = arith.constant 0 : index
    %c0_0 = arith.constant 0 : index
    %3 = arith.index_cast %2 : i32 to index
    %c0_1 = arith.constant 0 : index
    %4 = vector.load %arg2[%c0, %c0_0, %3, %c0_1] : memref<1x1x18x16xf32, #tpu.memory_space<vmem>>, vector<1x1x16x16xf32>
    %5 = vector.shape_cast %4 : vector<1x1x16x16xf32> to vector<16x16xf32>
    %6 = arith.truncf %5 : vector<16x16xf32> to vector<16x16xbf16>
    %c0_2 = arith.constant 0 : index
    %c0_3 = arith.constant 0 : index
    %c0_4 = arith.constant 0 : index
    %7 = vector.load %arg3[%c0_2, %c0_3, %c0_4] : memref<3x16x64xbf16, #tpu.memory_space<vmem>>, vector<1x16x64xbf16>
    %8 = vector.shape_cast %7 : vector<1x16x64xbf16> to vector<16x64xbf16>
    %cst_5 = arith.constant dense<0.000000e+00> : vector<16x64xf32>
    %9 = tpu.matmul %6, %8, %cst_5 {dimension_numbers = #tpu.dot_dimension_numbers<[1], [0], [0], [1], [0, 0, 1, 1], [], []>} : vector<16x16xbf16>, vector<16x64xbf16>, vector<16x64xf32> -> vector<16x64xf32>
    %10 = arith.addf %1, %9 : vector<16x64xf32>
    %c1_i32 = arith.constant 1 : i32
    %11 = arith.addi %0, %c1_i32 : i32
    %c0_6 = arith.constant 0 : index
    %c0_7 = arith.constant 0 : index
    %12 = arith.index_cast %11 : i32 to index
    %c0_8 = arith.constant 0 : index
    %13 = vector.load %arg2[%c0_6, %c0_7, %12, %c0_8] : memref<1x1x18x16xf32, #tpu.memory_space<vmem>>, vector<1x1x16x16xf32>
    %14 = vector.shape_cast %13 : vector<1x1x16x16xf32> to vector<16x16xf32>
    %15 = arith.truncf %14 : vector<16x16xf32> to vector<16x16xbf16>
    %c1 = arith.constant 1 : index
    %c0_9 = arith.constant 0 : index
    %c0_10 = arith.constant 0 : index
    %16 = vector.load %arg3[%c1, %c0_9, %c0_10] : memref<3x16x64xbf16, #tpu.memory_space<vmem>>, vector<1x16x64xbf16>
    %17 = vector.shape_cast %16 : vector<1x16x64xbf16> to vector<16x64xbf16>
    %cst_11 = arith.constant dense<0.000000e+00> : vector<16x64xf32>
    %18 = tpu.matmul %15, %17, %cst_11 {dimension_numbers = #tpu.dot_dimension_numbers<[1], [0], [0], [1], [0, 0, 1, 1], [], []>} : vector<16x16xbf16>, vector<16x64xbf16>, vector<16x64xf32> -> vector<16x64xf32>
    %19 = arith.addf %10, %18 : vector<16x64xf32>
    %c2_i32 = arith.constant 2 : i32
    %20 = arith.addi %0, %c2_i32 : i32
    %c0_12 = arith.constant 0 : index
    %c0_13 = arith.constant 0 : index
    %21 = arith.index_cast %20 : i32 to index
    %c0_14 = arith.constant 0 : index
    %22 = vector.load %arg2[%c0_12, %c0_13, %21, %c0_14] : memref<1x1x18x16xf32, #tpu.memory_space<vmem>>, vector<1x1x16x16xf32>
    %23 = vector.shape_cast %22 : vector<1x1x16x16xf32> to vector<16x16xf32>
    %24 = arith.truncf %23 : vector<16x16xf32> to vector<16x16xbf16>
    %c2 = arith.constant 2 : index
    %c0_15 = arith.constant 0 : index
    %c0_16 = arith.constant 0 : index
    %25 = vector.load %arg3[%c2, %c0_15, %c0_16] : memref<3x16x64xbf16, #tpu.memory_space<vmem>>, vector<1x16x64xbf16>
    %26 = vector.shape_cast %25 : vector<1x16x64xbf16> to vector<16x64xbf16>
    %cst_17 = arith.constant dense<0.000000e+00> : vector<16x64xf32>
    %27 = tpu.matmul %24, %26, %cst_17 {dimension_numbers = #tpu.dot_dimension_numbers<[1], [0], [0], [1], [0, 0, 1, 1], [], []>} : vector<16x16xbf16>, vector<16x64xbf16>, vector<16x64xf32> -> vector<16x64xf32>
    %28 = arith.addf %19, %27 : vector<16x64xf32>
    %c0_18 = arith.constant 0 : index
    %c0_19 = arith.constant 0 : index
    %29 = vector.load %arg4[%c0_18, %c0_19] : memref<1x64xf32, #tpu.memory_space<vmem>>, vector<1x64xf32>
    %30 = vector.broadcast %29 : vector<1x64xf32> to vector<16x64xf32>
    %31 = arith.addf %28, %30 : vector<16x64xf32>
    %cst_20 = arith.constant 5.000000e-01 : f32
    %32 = vector.broadcast %cst_20 : f32 to vector<16x64xf32>
    %33 = arith.mulf %32, %31 : vector<16x64xf32>
    %cst_21 = arith.constant 4.471500e-02 : f32
    %34 = vector.broadcast %cst_21 : f32 to vector<16x64xf32>
    %35 = arith.mulf %34, %31 : vector<16x64xf32>
    %36 = arith.mulf %35, %31 : vector<16x64xf32>
    %37 = arith.mulf %36, %31 : vector<16x64xf32>
    %38 = arith.addf %31, %37 : vector<16x64xf32>
    %cst_22 = arith.constant 0.797884583 : f32
    %39 = vector.broadcast %cst_22 : f32 to vector<16x64xf32>
    %40 = arith.mulf %39, %38 : vector<16x64xf32>
    %41 = math.tanh %40 : vector<16x64xf32>
    %cst_23 = arith.constant 1.000000e+00 : f32
    %42 = vector.broadcast %cst_23 : f32 to vector<16x64xf32>
    %43 = arith.addf %42, %41 : vector<16x64xf32>
    %44 = arith.mulf %33, %43 : vector<16x64xf32>
    %c0_24 = arith.constant 0 : index
    %c0_25 = arith.constant 0 : index
    %c0_26 = arith.constant 0 : index
    %45 = vector.load %arg5[%c0_24, %c0_25, %c0_26] : memref<1x16x64xf32, #tpu.memory_space<vmem>>, vector<1x16x64xf32>
    %46 = vector.shape_cast %45 : vector<1x16x64xf32> to vector<16x64xf32>
    %47 = vector.shape_cast %44 : vector<16x64xf32> to vector<1x16x64xf32>
    tpu.vector_store %arg5[%c0_24, %c0_25, %c0_26], %47 {strides = array<i32>} : memref<1x16x64xf32, #tpu.memory_space<vmem>>, vector<1x16x64xf32>,
    return
  }
  func.func @transform_0(%arg0: i32, %arg1: i32) -> (i32, i32, i32, i32) {
    %c0_i32 = arith.constant 0 : i32
    %c0_i32_0 = arith.constant 0 : i32
    %c0_i32_1 = arith.constant 0 : i32
    %c0_i32_2 = arith.constant 0 : i32
    return %arg0, %c0_i32, %c0_i32_0, %c0_i32_1 : i32, i32, i32, i32
  }
  func.func @transform_1(%arg0: i32, %arg1: i32) -> (i32, i32, i32) {
    %c0_i32 = arith.constant 0 : i32
    %c0_i32_0 = arith.constant 0 : i32
    %c0_i32_1 = arith.constant 0 : i32
    %c0_i32_2 = arith.constant 0 : i32
    return %c0_i32, %c0_i32_0, %c0_i32_1 : i32, i32, i32
  }
  func.func @transform_2(%arg0: i32, %arg1: i32) -> (i32, i32) {
    %c0_i32 = arith.constant 0 : i32
    %c0_i32_0 = arith.constant 0 : i32
    %c0_i32_1 = arith.constant 0 : i32
    return %c0_i32, %c0_i32_0 : i32, i32
  }
  func.func @transform_3(%arg0: i32, %arg1: i32) -> (i32, i32, i32) {
    %c0_i32 = arith.constant 0 : i32
    %c0_i32_0 = arith.constant 0 : i32
    return %arg0, %arg1, %c0_i32 : i32, i32, i32
  }
}

module attributes {stable_mosaic.version = 11 : i64} {
  func.func @_conv_kernel(%arg0: i32, %arg1: i32, %arg2: memref<1x2x9x64xf32, #tpu.memory_space<vmem>>, %arg3: memref<3x64x64xbf16, #tpu.memory_space<vmem>>, %arg4: memref<1x64xf32, #tpu.memory_space<vmem>>, %arg5: memref<1x8x64xf32, #tpu.memory_space<vmem>>) attributes {dimension_semantics = [#tpu.dimension_semantics<parallel>, #tpu.dimension_semantics<parallel>], iteration_bounds = array<i64: 2, 1>, scalar_prefetch = 0 : i64, scratch_operands = 0 : i64, tpu.core_type = #tpu.core_type<tc>, window_params = [{transform_indices = @transform_0, window_bounds = array<i64: 1, 2, 9, 64>}, {pipeline_mode = #tpu.pipeline_mode<synchronous>, transform_indices = @transform_1, window_bounds = array<i64: 3, 64, 64>}, {pipeline_mode = #tpu.pipeline_mode<synchronous>, transform_indices = @transform_2, window_bounds = array<i64: 1, 64>}, {transform_indices = @transform_3, window_bounds = array<i64: 1, 8, 64>}]} {
    %c8_i32 = arith.constant 8 : i32
    %0 = arith.muli %arg1, %c8_i32 : i32
    %cst = arith.constant 0.000000e+00 : f32
    %1 = vector.broadcast %cst : f32 to vector<8x64xf32>
    %c0_i32 = arith.constant 0 : i32
    %2 = arith.addi %0, %c0_i32 : i32
    %c0 = arith.constant 0 : index
    %c0_0 = arith.constant 0 : index
    %3 = arith.index_cast %2 : i32 to index
    %c0_1 = arith.constant 0 : index
    %4 = vector.load %arg2[%c0, %c0_0, %3, %c0_1] : memref<1x2x9x64xf32, #tpu.memory_space<vmem>>, vector<1x1x8x64xf32>
    %5 = vector.shape_cast %4 : vector<1x1x8x64xf32> to vector<8x64xf32>
    %6 = arith.truncf %5 : vector<8x64xf32> to vector<8x64xbf16>
    %c0_2 = arith.constant 0 : index
    %c0_3 = arith.constant 0 : index
    %c0_4 = arith.constant 0 : index
    %7 = vector.load %arg3[%c0_2, %c0_3, %c0_4] : memref<3x64x64xbf16, #tpu.memory_space<vmem>>, vector<1x64x64xbf16>
    %8 = vector.shape_cast %7 : vector<1x64x64xbf16> to vector<64x64xbf16>
    %cst_5 = arith.constant dense<0.000000e+00> : vector<8x64xf32>
    %9 = tpu.matmul %6, %8, %cst_5 {dimension_numbers = #tpu.dot_dimension_numbers<[1], [0], [0], [1], [0, 0, 1, 1], [], []>} : vector<8x64xbf16>, vector<64x64xbf16>, vector<8x64xf32> -> vector<8x64xf32>
    %10 = arith.addf %1, %9 : vector<8x64xf32>
    %c0_i32_6 = arith.constant 0 : i32
    %11 = arith.addi %0, %c0_i32_6 : i32
    %c0_7 = arith.constant 0 : index
    %c1 = arith.constant 1 : index
    %12 = arith.index_cast %11 : i32 to index
    %c0_8 = arith.constant 0 : index
    %13 = vector.load %arg2[%c0_7, %c1, %12, %c0_8] : memref<1x2x9x64xf32, #tpu.memory_space<vmem>>, vector<1x1x8x64xf32>
    %14 = vector.shape_cast %13 : vector<1x1x8x64xf32> to vector<8x64xf32>
    %15 = arith.truncf %14 : vector<8x64xf32> to vector<8x64xbf16>
    %c1_9 = arith.constant 1 : index
    %c0_10 = arith.constant 0 : index
    %c0_11 = arith.constant 0 : index
    %16 = vector.load %arg3[%c1_9, %c0_10, %c0_11] : memref<3x64x64xbf16, #tpu.memory_space<vmem>>, vector<1x64x64xbf16>
    %17 = vector.shape_cast %16 : vector<1x64x64xbf16> to vector<64x64xbf16>
    %cst_12 = arith.constant dense<0.000000e+00> : vector<8x64xf32>
    %18 = tpu.matmul %15, %17, %cst_12 {dimension_numbers = #tpu.dot_dimension_numbers<[1], [0], [0], [1], [0, 0, 1, 1], [], []>} : vector<8x64xbf16>, vector<64x64xbf16>, vector<8x64xf32> -> vector<8x64xf32>
    %19 = arith.addf %10, %18 : vector<8x64xf32>
    %c1_i32 = arith.constant 1 : i32
    %20 = arith.addi %0, %c1_i32 : i32
    %c0_13 = arith.constant 0 : index
    %c0_14 = arith.constant 0 : index
    %21 = arith.index_cast %20 : i32 to index
    %c0_15 = arith.constant 0 : index
    %22 = vector.load %arg2[%c0_13, %c0_14, %21, %c0_15] : memref<1x2x9x64xf32, #tpu.memory_space<vmem>>, vector<1x1x8x64xf32>
    %23 = vector.shape_cast %22 : vector<1x1x8x64xf32> to vector<8x64xf32>
    %24 = arith.truncf %23 : vector<8x64xf32> to vector<8x64xbf16>
    %c2 = arith.constant 2 : index
    %c0_16 = arith.constant 0 : index
    %c0_17 = arith.constant 0 : index
    %25 = vector.load %arg3[%c2, %c0_16, %c0_17] : memref<3x64x64xbf16, #tpu.memory_space<vmem>>, vector<1x64x64xbf16>
    %26 = vector.shape_cast %25 : vector<1x64x64xbf16> to vector<64x64xbf16>
    %cst_18 = arith.constant dense<0.000000e+00> : vector<8x64xf32>
    %27 = tpu.matmul %24, %26, %cst_18 {dimension_numbers = #tpu.dot_dimension_numbers<[1], [0], [0], [1], [0, 0, 1, 1], [], []>} : vector<8x64xbf16>, vector<64x64xbf16>, vector<8x64xf32> -> vector<8x64xf32>
    %28 = arith.addf %19, %27 : vector<8x64xf32>
    %c0_19 = arith.constant 0 : index
    %c0_20 = arith.constant 0 : index
    %29 = vector.load %arg4[%c0_19, %c0_20] : memref<1x64xf32, #tpu.memory_space<vmem>>, vector<1x64xf32>
    %30 = vector.broadcast %29 : vector<1x64xf32> to vector<8x64xf32>
    %31 = arith.addf %28, %30 : vector<8x64xf32>
    %cst_21 = arith.constant 5.000000e-01 : f32
    %32 = vector.broadcast %cst_21 : f32 to vector<8x64xf32>
    %33 = arith.mulf %32, %31 : vector<8x64xf32>
    %cst_22 = arith.constant 4.471500e-02 : f32
    %34 = vector.broadcast %cst_22 : f32 to vector<8x64xf32>
    %35 = arith.mulf %34, %31 : vector<8x64xf32>
    %36 = arith.mulf %35, %31 : vector<8x64xf32>
    %37 = arith.mulf %36, %31 : vector<8x64xf32>
    %38 = arith.addf %31, %37 : vector<8x64xf32>
    %cst_23 = arith.constant 0.797884583 : f32
    %39 = vector.broadcast %cst_23 : f32 to vector<8x64xf32>
    %40 = arith.mulf %39, %38 : vector<8x64xf32>
    %41 = math.tanh %40 : vector<8x64xf32>
    %cst_24 = arith.constant 1.000000e+00 : f32
    %42 = vector.broadcast %cst_24 : f32 to vector<8x64xf32>
    %43 = arith.addf %42, %41 : vector<8x64xf32>
    %44 = arith.mulf %33, %43 : vector<8x64xf32>
    %c0_25 = arith.constant 0 : index
    %c0_26 = arith.constant 0 : index
    %c0_27 = arith.constant 0 : index
    %45 = vector.load %arg5[%c0_25, %c0_26, %c0_27] : memref<1x8x64xf32, #tpu.memory_space<vmem>>, vector<1x8x64xf32>
    %46 = vector.shape_cast %45 : vector<1x8x64xf32> to vector<8x64xf32>
    %47 = vector.shape_cast %44 : vector<8x64xf32> to vector<1x8x64xf32>
    tpu.vector_store %arg5[%c0_25, %c0_26, %c0_27], %47 {strides = array<i32>} : memref<1x8x64xf32, #tpu.memory_space<vmem>>, vector<1x8x64xf32>,
    return
  }
  func.func @transform_0(%arg0: i32, %arg1: i32) -> (i32, i32, i32, i32) {
    %c0_i32 = arith.constant 0 : i32
    %c0_i32_0 = arith.constant 0 : i32
    %c0_i32_1 = arith.constant 0 : i32
    %c0_i32_2 = arith.constant 0 : i32
    return %arg0, %c0_i32, %c0_i32_0, %c0_i32_1 : i32, i32, i32, i32
  }
  func.func @transform_1(%arg0: i32, %arg1: i32) -> (i32, i32, i32) {
    %c0_i32 = arith.constant 0 : i32
    %c0_i32_0 = arith.constant 0 : i32
    %c0_i32_1 = arith.constant 0 : i32
    %c0_i32_2 = arith.constant 0 : i32
    return %c0_i32, %c0_i32_0, %c0_i32_1 : i32, i32, i32
  }
  func.func @transform_2(%arg0: i32, %arg1: i32) -> (i32, i32) {
    %c0_i32 = arith.constant 0 : i32
    %c0_i32_0 = arith.constant 0 : i32
    %c0_i32_1 = arith.constant 0 : i32
    return %c0_i32, %c0_i32_0 : i32, i32
  }
  func.func @transform_3(%arg0: i32, %arg1: i32) -> (i32, i32, i32) {
    %c0_i32 = arith.constant 0 : i32
    %c0_i32_0 = arith.constant 0 : i32
    return %arg0, %arg1, %c0_i32 : i32, i32, i32
  }
}

module attributes {stable_mosaic.version = 11 : i64} {
  func.func @_layernorm_kernel(%arg0: i32, %arg1: memref<16x64xf32, #tpu.memory_space<vmem>>, %arg2: memref<1x64xf32, #tpu.memory_space<vmem>>, %arg3: memref<1x64xf32, #tpu.memory_space<vmem>>, %arg4: memref<16x64xf32, #tpu.memory_space<vmem>>) attributes {dimension_semantics = [#tpu.dimension_semantics<parallel>], iteration_bounds = array<i64: 1>, scalar_prefetch = 0 : i64, scratch_operands = 0 : i64, tpu.core_type = #tpu.core_type<tc>, window_params = [{transform_indices = @transform_0, window_bounds = array<i64: 16, 64>}, {pipeline_mode = #tpu.pipeline_mode<synchronous>, transform_indices = @transform_1, window_bounds = array<i64: 1, 64>}, {pipeline_mode = #tpu.pipeline_mode<synchronous>, transform_indices = @transform_2, window_bounds = array<i64: 1, 64>}, {transform_indices = @transform_3, window_bounds = array<i64: 16, 64>}]} {
    %c0 = arith.constant 0 : index
    %c0_0 = arith.constant 0 : index
    %0 = vector.load %arg1[%c0, %c0_0] : memref<16x64xf32, #tpu.memory_space<vmem>>, vector<16x64xf32>
    %cst = arith.constant dense<0.000000e+00> : vector<16xf32>
    %1 = vector.multi_reduction <add>, %0, %cst [1] : vector<16x64xf32> to vector<16xf32>
    %2 = vector.shape_cast %1 : vector<16xf32> to vector<16x1xf32>
    %cst_1 = arith.constant 6.400000e+01 : f32
    %3 = vector.broadcast %cst_1 : f32 to vector<16x1xf32>
    %4 = arith.divf %2, %3 : vector<16x1xf32>
    %5 = vector.broadcast %4 : vector<16x1xf32> to vector<16x64xf32>
    %6 = arith.subf %0, %5 : vector<16x64xf32>
    %7 = arith.mulf %6, %6 : vector<16x64xf32>
    %cst_2 = arith.constant dense<0.000000e+00> : vector<16xf32>
    %8 = vector.multi_reduction <add>, %7, %cst_2 [1] : vector<16x64xf32> to vector<16xf32>
    %9 = vector.shape_cast %8 : vector<16xf32> to vector<16x1xf32>
    %cst_3 = arith.constant 6.400000e+01 : f32
    %10 = vector.broadcast %cst_3 : f32 to vector<16x1xf32>
    %11 = arith.divf %9, %10 : vector<16x1xf32>
    %cst_4 = arith.constant 9.99999974E-6 : f32
    %12 = vector.broadcast %cst_4 : f32 to vector<16x1xf32>
    %13 = arith.addf %11, %12 : vector<16x1xf32>
    %14 = math.rsqrt %13 : vector<16x1xf32>
    %15 = vector.broadcast %14 : vector<16x1xf32> to vector<16x64xf32>
    %16 = arith.mulf %6, %15 : vector<16x64xf32>
    %c0_5 = arith.constant 0 : index
    %c0_6 = arith.constant 0 : index
    %17 = vector.load %arg2[%c0_5, %c0_6] : memref<1x64xf32, #tpu.memory_space<vmem>>, vector<1x64xf32>
    %18 = vector.broadcast %17 : vector<1x64xf32> to vector<16x64xf32>
    %19 = arith.mulf %16, %18 : vector<16x64xf32>
    %c0_7 = arith.constant 0 : index
    %c0_8 = arith.constant 0 : index
    %20 = vector.load %arg3[%c0_7, %c0_8] : memref<1x64xf32, #tpu.memory_space<vmem>>, vector<1x64xf32>
    %21 = vector.broadcast %20 : vector<1x64xf32> to vector<16x64xf32>
    %22 = arith.addf %19, %21 : vector<16x64xf32>
    %c0_9 = arith.constant 0 : index
    %c0_10 = arith.constant 0 : index
    %23 = vector.load %arg4[%c0_9, %c0_10] : memref<16x64xf32, #tpu.memory_space<vmem>>, vector<16x64xf32>
    tpu.vector_store %arg4[%c0_9, %c0_10], %22 {strides = array<i32>} : memref<16x64xf32, #tpu.memory_space<vmem>>, vector<16x64xf32>,
    return
  }
  func.func @transform_0(%arg0: i32) -> (i32, i32) {
    %c0_i32 = arith.constant 0 : i32
    %c0_i32_0 = arith.constant 0 : i32
    return %arg0, %c0_i32 : i32, i32
  }
  func.func @transform_1(%arg0: i32) -> (i32, i32) {
    %c0_i32 = arith.constant 0 : i32
    %c0_i32_0 = arith.constant 0 : i32
    %c0_i32_1 = arith.constant 0 : i32
    return %c0_i32, %c0_i32_0 : i32, i32
  }
  func.func @transform_2(%arg0: i32) -> (i32, i32) {
    %c0_i32 = arith.constant 0 : i32
    %c0_i32_0 = arith.constant 0 : i32
    %c0_i32_1 = arith.constant 0 : i32
    return %c0_i32, %c0_i32_0 : i32, i32
  }
  func.func @transform_3(%arg0: i32) -> (i32, i32) {
    %c0_i32 = arith.constant 0 : i32
    %c0_i32_0 = arith.constant 0 : i32
    return %arg0, %c0_i32 : i32, i32
  }
}

module attributes {stable_mosaic.version = 11 : i64} {
  func.func @_linear_kernel(%arg0: i32, %arg1: i32, %arg2: i32, %arg3: memref<16x64xf32, #tpu.memory_space<vmem>>, %arg4: memref<64x192xbf16, #tpu.memory_space<vmem>>, %arg5: memref<1x192xf32, #tpu.memory_space<vmem>>, %arg6: memref<16x192xf32, #tpu.memory_space<vmem>>, %arg7: memref<16x192xf32, #tpu.memory_space<vmem>>) attributes {dimension_semantics = [#tpu.dimension_semantics<parallel>, #tpu.dimension_semantics<parallel>, #tpu.dimension_semantics<arbitrary>], iteration_bounds = array<i64: 1, 1, 1>, scalar_prefetch = 0 : i64, scratch_operands = 1 : i64, tpu.core_type = #tpu.core_type<tc>, window_params = [{transform_indices = @transform_0, window_bounds = array<i64: 16, 64>}, {transform_indices = @transform_1, window_bounds = array<i64: 64, 192>}, {transform_indices = @transform_2, window_bounds = array<i64: 1, 192>}, {transform_indices = @transform_3, window_bounds = array<i64: 16, 192>}]} {
    %c0_i32 = arith.constant 0 : i32
    %0 = arith.cmpi eq, %arg2, %c0_i32 : i32
    %1 = arith.extui %0 : i1 to i32
    %c0_i32_0 = arith.constant 0 : i32
    %2 = arith.cmpi ne, %1, %c0_i32_0 : i32
    scf.if %2 {
      %cst_10 = arith.constant 0.000000e+00 : f32
      %13 = vector.broadcast %cst_10 : f32 to vector<16x192xf32>
      %c0_11 = arith.constant 0 : index
      %c0_12 = arith.constant 0 : index
      %14 = vector.load %arg7[%c0_11, %c0_12] : memref<16x192xf32, #tpu.memory_space<vmem>>, vector<16x192xf32>
      tpu.vector_store %arg7[%c0_11, %c0_12], %13 {strides = array<i32>} : memref<16x192xf32, #tpu.memory_space<vmem>>, vector<16x192xf32>,
    } else {
    }
    %c0 = arith.constant 0 : index
    %c0_1 = arith.constant 0 : index
    %3 = vector.load %arg7[%c0, %c0_1] : memref<16x192xf32, #tpu.memory_space<vmem>>, vector<16x192xf32>
    %c0_2 = arith.constant 0 : index
    %c0_3 = arith.constant 0 : index
    %4 = vector.load %arg3[%c0_2, %c0_3] : memref<16x64xf32, #tpu.memory_space<vmem>>, vector<16x64xf32>
    %5 = arith.truncf %4 : vector<16x64xf32> to vector<16x64xbf16>
    %c0_4 = arith.constant 0 : index
    %c0_5 = arith.constant 0 : index
    %6 = vector.load %arg4[%c0_4, %c0_5] : memref<64x192xbf16, #tpu.memory_space<vmem>>, vector<64x192xbf16>
    %cst = arith.constant dense<0.000000e+00> : vector<16x192xf32>
    %7 = tpu.matmul %5, %6, %cst {dimension_numbers = #tpu.dot_dimension_numbers<[1], [0], [0], [1], [0, 0, 1, 1], [], []>} : vector<16x64xbf16>, vector<64x192xbf16>, vector<16x192xf32> -> vector<16x192xf32>
    %8 = arith.addf %3, %7 : vector<16x192xf32>
    %c0_6 = arith.constant 0 : index
    %c0_7 = arith.constant 0 : index
    %9 = vector.load %arg7[%c0_6, %c0_7] : memref<16x192xf32, #tpu.memory_space<vmem>>, vector<16x192xf32>
    tpu.vector_store %arg7[%c0_6, %c0_7], %8 {strides = array<i32>} : memref<16x192xf32, #tpu.memory_space<vmem>>, vector<16x192xf32>,
    %c0_i32_8 = arith.constant 0 : i32
    %10 = arith.cmpi eq, %arg2, %c0_i32_8 : i32
    %11 = arith.extui %10 : i1 to i32
    %c0_i32_9 = arith.constant 0 : i32
    %12 = arith.cmpi ne, %11, %c0_i32_9 : i32
    scf.if %12 {
      %c0_10 = arith.constant 0 : index
      %c0_11 = arith.constant 0 : index
      %13 = vector.load %arg7[%c0_10, %c0_11] : memref<16x192xf32, #tpu.memory_space<vmem>>, vector<16x192xf32>
      %c0_12 = arith.constant 0 : index
      %c0_13 = arith.constant 0 : index
      %14 = vector.load %arg5[%c0_12, %c0_13] : memref<1x192xf32, #tpu.memory_space<vmem>>, vector<1x192xf32>
      %15 = vector.broadcast %14 : vector<1x192xf32> to vector<16x192xf32>
      %16 = arith.addf %13, %15 : vector<16x192xf32>
      %c0_14 = arith.constant 0 : index
      %c0_15 = arith.constant 0 : index
      %17 = vector.load %arg6[%c0_14, %c0_15] : memref<16x192xf32, #tpu.memory_space<vmem>>, vector<16x192xf32>
      tpu.vector_store %arg6[%c0_14, %c0_15], %16 {strides = array<i32>} : memref<16x192xf32, #tpu.memory_space<vmem>>, vector<16x192xf32>,
    } else {
    }
    return
  }
  func.func @transform_0(%arg0: i32, %arg1: i32, %arg2: i32) -> (i32, i32) {
    %c0_i32 = arith.constant 0 : i32
    return %arg0, %arg2 : i32, i32
  }
  func.func @transform_1(%arg0: i32, %arg1: i32, %arg2: i32) -> (i32, i32) {
    %c0_i32 = arith.constant 0 : i32
    return %arg2, %arg1 : i32, i32
  }
  func.func @transform_2(%arg0: i32, %arg1: i32, %arg2: i32) -> (i32, i32) {
    %c0_i32 = arith.constant 0 : i32
    %c0_i32_0 = arith.constant 0 : i32
    return %c0_i32, %arg1 : i32, i32
  }
  func.func @transform_3(%arg0: i32, %arg1: i32, %arg2: i32) -> (i32, i32) {
    %c0_i32 = arith.constant 0 : i32
    return %arg0, %arg1 : i32, i32
  }
}

module attributes {stable_mosaic.version = 11 : i64} {
  func.func @_attn_kernel(%arg0: i32, %arg1: i32, %arg2: memref<1x8x64xf32, #tpu.memory_space<vmem>>, %arg3: memref<1x8x64xf32, #tpu.memory_space<vmem>>, %arg4: memref<1x8x64xf32, #tpu.memory_space<vmem>>, %arg5: memref<1x8x64xf32, #tpu.memory_space<vmem>>) attributes {dimension_semantics = [#tpu.dimension_semantics<parallel>, #tpu.dimension_semantics<parallel>], iteration_bounds = array<i64: 2, 1>, scalar_prefetch = 0 : i64, scratch_operands = 0 : i64, tpu.core_type = #tpu.core_type<tc>, window_params = [{transform_indices = @transform_0, window_bounds = array<i64: 1, 8, 64>}, {transform_indices = @transform_1, window_bounds = array<i64: 1, 8, 64>}, {transform_indices = @transform_2, window_bounds = array<i64: 1, 8, 64>}, {transform_indices = @transform_3, window_bounds = array<i64: 1, 8, 64>}]} {
    %c0 = arith.constant 0 : index
    %c0_0 = arith.constant 0 : index
    %c0_1 = arith.constant 0 : index
    %0 = vector.load %arg2[%c0, %c0_0, %c0_1] : memref<1x8x64xf32, #tpu.memory_space<vmem>>, vector<1x8x64xf32>
    %1 = vector.shape_cast %0 : vector<1x8x64xf32> to vector<8x64xf32>
    %2 = vector.shape_cast %1 : vector<8x64xf32> to vector<8x4x16xf32>
    %3 = arith.truncf %2 : vector<8x4x16xf32> to vector<8x4x16xbf16>
    %c0_2 = arith.constant 0 : index
    %c0_3 = arith.constant 0 : index
    %c0_4 = arith.constant 0 : index
    %4 = vector.load %arg3[%c0_2, %c0_3, %c0_4] : memref<1x8x64xf32, #tpu.memory_space<vmem>>, vector<1x8x64xf32>
    %5 = vector.shape_cast %4 : vector<1x8x64xf32> to vector<8x64xf32>
    %6 = vector.shape_cast %5 : vector<8x64xf32> to vector<8x4x16xf32>
    %7 = arith.truncf %6 : vector<8x4x16xf32> to vector<8x4x16xbf16>
    %c0_5 = arith.constant 0 : index
    %c0_6 = arith.constant 0 : index
    %c0_7 = arith.constant 0 : index
    %8 = vector.load %arg4[%c0_5, %c0_6, %c0_7] : memref<1x8x64xf32, #tpu.memory_space<vmem>>, vector<1x8x64xf32>
    %9 = vector.shape_cast %8 : vector<1x8x64xf32> to vector<8x64xf32>
    %10 = vector.shape_cast %9 : vector<8x64xf32> to vector<8x4x16xf32>
    %11 = arith.truncf %10 : vector<8x4x16xf32> to vector<8x4x16xbf16>
    "tpu.trace_start"() <{level = 10 : i32, message = "qhd,khd->hqk"}> : () -> ()
    %cst = arith.constant dense<0.000000e+00> : vector<4x8x8xf32>
    %12 = tpu.matmul %3, %7, %cst {dimension_numbers = #tpu.dot_dimension_numbers<[2], [2], [0], [0], [0, 1, 0, 0, 1, 0], [1], [1]>} : vector<8x4x16xbf16>, vector<8x4x16xbf16>, vector<4x8x8xf32> -> vector<4x8x8xf32>
    "tpu.trace_stop"() : () -> ()
    %cst_8 = arith.constant 2.500000e-01 : f32
    %13 = vector.broadcast %cst_8 : f32 to vector<4x8x8xf32>
    %14 = arith.mulf %12, %13 : vector<4x8x8xf32>
    %cst_9 = arith.constant dense<0xFF800000> : vector<4x8xf32>
    %15 = vector.multi_reduction <maximumf>, %14, %cst_9 [2] : vector<4x8x8xf32> to vector<4x8xf32>
    %16 = vector.shape_cast %15 : vector<4x8xf32> to vector<4x8x1xf32>
    %17 = vector.broadcast %16 : vector<4x8x1xf32> to vector<4x8x8xf32>
    %18 = arith.subf %14, %17 : vector<4x8x8xf32>
    %19 = math.exp %18 : vector<4x8x8xf32>
    %cst_10 = arith.constant dense<0.000000e+00> : vector<4x8xf32>
    %20 = vector.multi_reduction <add>, %19, %cst_10 [2] : vector<4x8x8xf32> to vector<4x8xf32>
    %21 = vector.shape_cast %20 : vector<4x8xf32> to vector<4x8x1xf32>
    %22 = tpu.reciprocal %21 {approx = true} : vector<4x8x1xf32> -> vector<4x8x1xf32>
    %23 = vector.broadcast %22 : vector<4x8x1xf32> to vector<4x8x8xf32>
    %24 = arith.mulf %19, %23 : vector<4x8x8xf32>
    %25 = arith.truncf %24 : vector<4x8x8xf32> to vector<4x8x8xbf16>
    "tpu.trace_start"() <{level = 10 : i32, message = "hqk,khd->qhd"}> : () -> ()
    %cst_11 = arith.constant dense<0.000000e+00> : vector<4x16x8xf32>
    %26 = tpu.matmul %11, %25, %cst_11 {dimension_numbers = #tpu.dot_dimension_numbers<[0], [2], [2], [1], [0, 1, 0, 2, 1, 1], [1], [0]>} : vector<8x4x16xbf16>, vector<4x8x8xbf16>, vector<4x16x8xf32> -> vector<4x16x8xf32>
    %27 = tpu.transpose %26, [2, 0, 1] : vector<4x16x8xf32> -> vector<8x4x16xf32>
    "tpu.trace_stop"() : () -> ()
    %28 = vector.shape_cast %27 : vector<8x4x16xf32> to vector<8x64xf32>
    %c0_12 = arith.constant 0 : index
    %c0_13 = arith.constant 0 : index
    %c0_14 = arith.constant 0 : index
    %29 = vector.load %arg5[%c0_12, %c0_13, %c0_14] : memref<1x8x64xf32, #tpu.memory_space<vmem>>, vector<1x8x64xf32>
    %30 = vector.shape_cast %29 : vector<1x8x64xf32> to vector<8x64xf32>
    %31 = vector.shape_cast %28 : vector<8x64xf32> to vector<1x8x64xf32>
    tpu.vector_store %arg5[%c0_12, %c0_13, %c0_14], %31 {strides = array<i32>} : memref<1x8x64xf32, #tpu.memory_space<vmem>>, vector<1x8x64xf32>,
    return
  }
  func.func @transform_0(%arg0: i32, %arg1: i32) -> (i32, i32, i32) {
    %c0_i32 = arith.constant 0 : i32
    %c0_i32_0 = arith.constant 0 : i32
    return %arg0, %c0_i32, %arg1 : i32, i32, i32
  }
  func.func @transform_1(%arg0: i32, %arg1: i32) -> (i32, i32, i32) {
    %c0_i32 = arith.constant 0 : i32
    %c0_i32_0 = arith.constant 0 : i32
    return %arg0, %c0_i32, %arg1 : i32, i32, i32
  }
  func.func @transform_2(%arg0: i32, %arg1: i32) -> (i32, i32, i32) {
    %c0_i32 = arith.constant 0 : i32
    %c0_i32_0 = arith.constant 0 : i32
    return %arg0, %c0_i32, %arg1 : i32, i32, i32
  }
  func.func @transform_3(%arg0: i32, %arg1: i32) -> (i32, i32, i32) {
    %c0_i32 = arith.constant 0 : i32
    %c0_i32_0 = arith.constant 0 : i32
    return %arg0, %c0_i32, %arg1 : i32, i32, i32
  }
}

module attributes {stable_mosaic.version = 11 : i64} {
  func.func @_linear_res_kernel(%arg0: i32, %arg1: i32, %arg2: i32, %arg3: memref<16x64xf32, #tpu.memory_space<vmem>>, %arg4: memref<64x64xbf16, #tpu.memory_space<vmem>>, %arg5: memref<1x64xf32, #tpu.memory_space<vmem>>, %arg6: memref<16x64xf32, #tpu.memory_space<vmem>>, %arg7: memref<16x64xf32, #tpu.memory_space<vmem>>, %arg8: memref<16x64xf32, #tpu.memory_space<vmem>>) attributes {dimension_semantics = [#tpu.dimension_semantics<parallel>, #tpu.dimension_semantics<parallel>, #tpu.dimension_semantics<arbitrary>], iteration_bounds = array<i64: 1, 1, 1>, scalar_prefetch = 0 : i64, scratch_operands = 1 : i64, tpu.core_type = #tpu.core_type<tc>, window_params = [{transform_indices = @transform_0, window_bounds = array<i64: 16, 64>}, {transform_indices = @transform_1, window_bounds = array<i64: 64, 64>}, {transform_indices = @transform_2, window_bounds = array<i64: 1, 64>}, {transform_indices = @transform_3, window_bounds = array<i64: 16, 64>}, {transform_indices = @transform_4, window_bounds = array<i64: 16, 64>}]} {
    %c0_i32 = arith.constant 0 : i32
    %0 = arith.cmpi eq, %arg2, %c0_i32 : i32
    %1 = arith.extui %0 : i1 to i32
    %c0_i32_0 = arith.constant 0 : i32
    %2 = arith.cmpi ne, %1, %c0_i32_0 : i32
    scf.if %2 {
      %cst_10 = arith.constant 0.000000e+00 : f32
      %13 = vector.broadcast %cst_10 : f32 to vector<16x64xf32>
      %c0_11 = arith.constant 0 : index
      %c0_12 = arith.constant 0 : index
      %14 = vector.load %arg8[%c0_11, %c0_12] : memref<16x64xf32, #tpu.memory_space<vmem>>, vector<16x64xf32>
      tpu.vector_store %arg8[%c0_11, %c0_12], %13 {strides = array<i32>} : memref<16x64xf32, #tpu.memory_space<vmem>>, vector<16x64xf32>,
    } else {
    }
    %c0 = arith.constant 0 : index
    %c0_1 = arith.constant 0 : index
    %3 = vector.load %arg8[%c0, %c0_1] : memref<16x64xf32, #tpu.memory_space<vmem>>, vector<16x64xf32>
    %c0_2 = arith.constant 0 : index
    %c0_3 = arith.constant 0 : index
    %4 = vector.load %arg3[%c0_2, %c0_3] : memref<16x64xf32, #tpu.memory_space<vmem>>, vector<16x64xf32>
    %5 = arith.truncf %4 : vector<16x64xf32> to vector<16x64xbf16>
    %c0_4 = arith.constant 0 : index
    %c0_5 = arith.constant 0 : index
    %6 = vector.load %arg4[%c0_4, %c0_5] : memref<64x64xbf16, #tpu.memory_space<vmem>>, vector<64x64xbf16>
    %cst = arith.constant dense<0.000000e+00> : vector<16x64xf32>
    %7 = tpu.matmul %5, %6, %cst {dimension_numbers = #tpu.dot_dimension_numbers<[1], [0], [0], [1], [0, 0, 1, 1], [], []>} : vector<16x64xbf16>, vector<64x64xbf16>, vector<16x64xf32> -> vector<16x64xf32>
    %8 = arith.addf %3, %7 : vector<16x64xf32>
    %c0_6 = arith.constant 0 : index
    %c0_7 = arith.constant 0 : index
    %9 = vector.load %arg8[%c0_6, %c0_7] : memref<16x64xf32, #tpu.memory_space<vmem>>, vector<16x64xf32>
    tpu.vector_store %arg8[%c0_6, %c0_7], %8 {strides = array<i32>} : memref<16x64xf32, #tpu.memory_space<vmem>>, vector<16x64xf32>,
    %c0_i32_8 = arith.constant 0 : i32
    %10 = arith.cmpi eq, %arg2, %c0_i32_8 : i32
    %11 = arith.extui %10 : i1 to i32
    %c0_i32_9 = arith.constant 0 : i32
    %12 = arith.cmpi ne, %11, %c0_i32_9 : i32
    scf.if %12 {
      %c0_10 = arith.constant 0 : index
      %c0_11 = arith.constant 0 : index
      %13 = vector.load %arg8[%c0_10, %c0_11] : memref<16x64xf32, #tpu.memory_space<vmem>>, vector<16x64xf32>
      %c0_12 = arith.constant 0 : index
      %c0_13 = arith.constant 0 : index
      %14 = vector.load %arg5[%c0_12, %c0_13] : memref<1x64xf32, #tpu.memory_space<vmem>>, vector<1x64xf32>
      %15 = vector.broadcast %14 : vector<1x64xf32> to vector<16x64xf32>
      %16 = arith.addf %13, %15 : vector<16x64xf32>
      %c0_14 = arith.constant 0 : index
      %c0_15 = arith.constant 0 : index
      %17 = vector.load %arg6[%c0_14, %c0_15] : memref<16x64xf32, #tpu.memory_space<vmem>>, vector<16x64xf32>
      %18 = arith.addf %16, %17 : vector<16x64xf32>
      %c0_16 = arith.constant 0 : index
      %c0_17 = arith.constant 0 : index
      %19 = vector.load %arg7[%c0_16, %c0_17] : memref<16x64xf32, #tpu.memory_space<vmem>>, vector<16x64xf32>
      tpu.vector_store %arg7[%c0_16, %c0_17], %18 {strides = array<i32>} : memref<16x64xf32, #tpu.memory_space<vmem>>, vector<16x64xf32>,
    } else {
    }
    return
  }
  func.func @transform_0(%arg0: i32, %arg1: i32, %arg2: i32) -> (i32, i32) {
    %c0_i32 = arith.constant 0 : i32
    return %arg0, %arg2 : i32, i32
  }
  func.func @transform_1(%arg0: i32, %arg1: i32, %arg2: i32) -> (i32, i32) {
    %c0_i32 = arith.constant 0 : i32
    return %arg2, %arg1 : i32, i32
  }
  func.func @transform_2(%arg0: i32, %arg1: i32, %arg2: i32) -> (i32, i32) {
    %c0_i32 = arith.constant 0 : i32
    %c0_i32_0 = arith.constant 0 : i32
    return %c0_i32, %arg1 : i32, i32
  }
  func.func @transform_3(%arg0: i32, %arg1: i32, %arg2: i32) -> (i32, i32) {
    %c0_i32 = arith.constant 0 : i32
    return %arg0, %arg1 : i32, i32
  }
  func.func @transform_4(%arg0: i32, %arg1: i32, %arg2: i32) -> (i32, i32) {
    %c0_i32 = arith.constant 0 : i32
    return %arg0, %arg1 : i32, i32
  }
}

module attributes {stable_mosaic.version = 11 : i64} {
  func.func @_linear_kernel(%arg0: i32, %arg1: i32, %arg2: i32, %arg3: memref<16x64xf32, #tpu.memory_space<vmem>>, %arg4: memref<64x128xbf16, #tpu.memory_space<vmem>>, %arg5: memref<1x128xf32, #tpu.memory_space<vmem>>, %arg6: memref<16x128xf32, #tpu.memory_space<vmem>>, %arg7: memref<16x128xf32, #tpu.memory_space<vmem>>) attributes {dimension_semantics = [#tpu.dimension_semantics<parallel>, #tpu.dimension_semantics<parallel>, #tpu.dimension_semantics<arbitrary>], iteration_bounds = array<i64: 1, 1, 1>, scalar_prefetch = 0 : i64, scratch_operands = 1 : i64, tpu.core_type = #tpu.core_type<tc>, window_params = [{transform_indices = @transform_0, window_bounds = array<i64: 16, 64>}, {transform_indices = @transform_1, window_bounds = array<i64: 64, 128>}, {transform_indices = @transform_2, window_bounds = array<i64: 1, 128>}, {transform_indices = @transform_3, window_bounds = array<i64: 16, 128>}]} {
    %c0_i32 = arith.constant 0 : i32
    %0 = arith.cmpi eq, %arg2, %c0_i32 : i32
    %1 = arith.extui %0 : i1 to i32
    %c0_i32_0 = arith.constant 0 : i32
    %2 = arith.cmpi ne, %1, %c0_i32_0 : i32
    scf.if %2 {
      %cst_10 = arith.constant 0.000000e+00 : f32
      %13 = vector.broadcast %cst_10 : f32 to vector<16x128xf32>
      %c0_11 = arith.constant 0 : index
      %c0_12 = arith.constant 0 : index
      %14 = vector.load %arg7[%c0_11, %c0_12] : memref<16x128xf32, #tpu.memory_space<vmem>>, vector<16x128xf32>
      tpu.vector_store %arg7[%c0_11, %c0_12], %13 {strides = array<i32>} : memref<16x128xf32, #tpu.memory_space<vmem>>, vector<16x128xf32>,
    } else {
    }
    %c0 = arith.constant 0 : index
    %c0_1 = arith.constant 0 : index
    %3 = vector.load %arg7[%c0, %c0_1] : memref<16x128xf32, #tpu.memory_space<vmem>>, vector<16x128xf32>
    %c0_2 = arith.constant 0 : index
    %c0_3 = arith.constant 0 : index
    %4 = vector.load %arg3[%c0_2, %c0_3] : memref<16x64xf32, #tpu.memory_space<vmem>>, vector<16x64xf32>
    %5 = arith.truncf %4 : vector<16x64xf32> to vector<16x64xbf16>
    %c0_4 = arith.constant 0 : index
    %c0_5 = arith.constant 0 : index
    %6 = vector.load %arg4[%c0_4, %c0_5] : memref<64x128xbf16, #tpu.memory_space<vmem>>, vector<64x128xbf16>
    %cst = arith.constant dense<0.000000e+00> : vector<16x128xf32>
    %7 = tpu.matmul %5, %6, %cst {dimension_numbers = #tpu.dot_dimension_numbers<[1], [0], [0], [1], [0, 0, 1, 1], [], []>} : vector<16x64xbf16>, vector<64x128xbf16>, vector<16x128xf32> -> vector<16x128xf32>
    %8 = arith.addf %3, %7 : vector<16x128xf32>
    %c0_6 = arith.constant 0 : index
    %c0_7 = arith.constant 0 : index
    %9 = vector.load %arg7[%c0_6, %c0_7] : memref<16x128xf32, #tpu.memory_space<vmem>>, vector<16x128xf32>
    tpu.vector_store %arg7[%c0_6, %c0_7], %8 {strides = array<i32>} : memref<16x128xf32, #tpu.memory_space<vmem>>, vector<16x128xf32>,
    %c0_i32_8 = arith.constant 0 : i32
    %10 = arith.cmpi eq, %arg2, %c0_i32_8 : i32
    %11 = arith.extui %10 : i1 to i32
    %c0_i32_9 = arith.constant 0 : i32
    %12 = arith.cmpi ne, %11, %c0_i32_9 : i32
    scf.if %12 {
      %c0_10 = arith.constant 0 : index
      %c0_11 = arith.constant 0 : index
      %13 = vector.load %arg7[%c0_10, %c0_11] : memref<16x128xf32, #tpu.memory_space<vmem>>, vector<16x128xf32>
      %c0_12 = arith.constant 0 : index
      %c0_13 = arith.constant 0 : index
      %14 = vector.load %arg5[%c0_12, %c0_13] : memref<1x128xf32, #tpu.memory_space<vmem>>, vector<1x128xf32>
      %15 = vector.broadcast %14 : vector<1x128xf32> to vector<16x128xf32>
      %16 = arith.addf %13, %15 : vector<16x128xf32>
      %cst_14 = arith.constant 5.000000e-01 : f32
      %17 = vector.broadcast %cst_14 : f32 to vector<16x128xf32>
      %18 = arith.mulf %17, %16 : vector<16x128xf32>
      %cst_15 = arith.constant 4.471500e-02 : f32
      %19 = vector.broadcast %cst_15 : f32 to vector<16x128xf32>
      %20 = arith.mulf %19, %16 : vector<16x128xf32>
      %21 = arith.mulf %20, %16 : vector<16x128xf32>
      %22 = arith.mulf %21, %16 : vector<16x128xf32>
      %23 = arith.addf %16, %22 : vector<16x128xf32>
      %cst_16 = arith.constant 0.797884583 : f32
      %24 = vector.broadcast %cst_16 : f32 to vector<16x128xf32>
      %25 = arith.mulf %24, %23 : vector<16x128xf32>
      %26 = math.tanh %25 : vector<16x128xf32>
      %cst_17 = arith.constant 1.000000e+00 : f32
      %27 = vector.broadcast %cst_17 : f32 to vector<16x128xf32>
      %28 = arith.addf %27, %26 : vector<16x128xf32>
      %29 = arith.mulf %18, %28 : vector<16x128xf32>
      %c0_18 = arith.constant 0 : index
      %c0_19 = arith.constant 0 : index
      %30 = vector.load %arg6[%c0_18, %c0_19] : memref<16x128xf32, #tpu.memory_space<vmem>>, vector<16x128xf32>
      tpu.vector_store %arg6[%c0_18, %c0_19], %29 {strides = array<i32>} : memref<16x128xf32, #tpu.memory_space<vmem>>, vector<16x128xf32>,
    } else {
    }
    return
  }
  func.func @transform_0(%arg0: i32, %arg1: i32, %arg2: i32) -> (i32, i32) {
    %c0_i32 = arith.constant 0 : i32
    return %arg0, %arg2 : i32, i32
  }
  func.func @transform_1(%arg0: i32, %arg1: i32, %arg2: i32) -> (i32, i32) {
    %c0_i32 = arith.constant 0 : i32
    return %arg2, %arg1 : i32, i32
  }
  func.func @transform_2(%arg0: i32, %arg1: i32, %arg2: i32) -> (i32, i32) {
    %c0_i32 = arith.constant 0 : i32
    %c0_i32_0 = arith.constant 0 : i32
    return %c0_i32, %arg1 : i32, i32
  }
  func.func @transform_3(%arg0: i32, %arg1: i32, %arg2: i32) -> (i32, i32) {
    %c0_i32 = arith.constant 0 : i32
    return %arg0, %arg1 : i32, i32
  }
}

module attributes {stable_mosaic.version = 11 : i64} {
  func.func @_linear_res_kernel(%arg0: i32, %arg1: i32, %arg2: i32, %arg3: memref<16x128xf32, #tpu.memory_space<vmem>>, %arg4: memref<128x64xbf16, #tpu.memory_space<vmem>>, %arg5: memref<1x64xf32, #tpu.memory_space<vmem>>, %arg6: memref<16x64xf32, #tpu.memory_space<vmem>>, %arg7: memref<16x64xf32, #tpu.memory_space<vmem>>, %arg8: memref<16x64xf32, #tpu.memory_space<vmem>>) attributes {dimension_semantics = [#tpu.dimension_semantics<parallel>, #tpu.dimension_semantics<parallel>, #tpu.dimension_semantics<arbitrary>], iteration_bounds = array<i64: 1, 1, 1>, scalar_prefetch = 0 : i64, scratch_operands = 1 : i64, tpu.core_type = #tpu.core_type<tc>, window_params = [{transform_indices = @transform_0, window_bounds = array<i64: 16, 128>}, {transform_indices = @transform_1, window_bounds = array<i64: 128, 64>}, {transform_indices = @transform_2, window_bounds = array<i64: 1, 64>}, {transform_indices = @transform_3, window_bounds = array<i64: 16, 64>}, {transform_indices = @transform_4, window_bounds = array<i64: 16, 64>}]} {
    %c0_i32 = arith.constant 0 : i32
    %0 = arith.cmpi eq, %arg2, %c0_i32 : i32
    %1 = arith.extui %0 : i1 to i32
    %c0_i32_0 = arith.constant 0 : i32
    %2 = arith.cmpi ne, %1, %c0_i32_0 : i32
    scf.if %2 {
      %cst_10 = arith.constant 0.000000e+00 : f32
      %13 = vector.broadcast %cst_10 : f32 to vector<16x64xf32>
      %c0_11 = arith.constant 0 : index
      %c0_12 = arith.constant 0 : index
      %14 = vector.load %arg8[%c0_11, %c0_12] : memref<16x64xf32, #tpu.memory_space<vmem>>, vector<16x64xf32>
      tpu.vector_store %arg8[%c0_11, %c0_12], %13 {strides = array<i32>} : memref<16x64xf32, #tpu.memory_space<vmem>>, vector<16x64xf32>,
    } else {
    }
    %c0 = arith.constant 0 : index
    %c0_1 = arith.constant 0 : index
    %3 = vector.load %arg8[%c0, %c0_1] : memref<16x64xf32, #tpu.memory_space<vmem>>, vector<16x64xf32>
    %c0_2 = arith.constant 0 : index
    %c0_3 = arith.constant 0 : index
    %4 = vector.load %arg3[%c0_2, %c0_3] : memref<16x128xf32, #tpu.memory_space<vmem>>, vector<16x128xf32>
    %5 = arith.truncf %4 : vector<16x128xf32> to vector<16x128xbf16>
    %c0_4 = arith.constant 0 : index
    %c0_5 = arith.constant 0 : index
    %6 = vector.load %arg4[%c0_4, %c0_5] : memref<128x64xbf16, #tpu.memory_space<vmem>>, vector<128x64xbf16>
    %cst = arith.constant dense<0.000000e+00> : vector<16x64xf32>
    %7 = tpu.matmul %5, %6, %cst {dimension_numbers = #tpu.dot_dimension_numbers<[1], [0], [0], [1], [0, 0, 1, 1], [], []>} : vector<16x128xbf16>, vector<128x64xbf16>, vector<16x64xf32> -> vector<16x64xf32>
    %8 = arith.addf %3, %7 : vector<16x64xf32>
    %c0_6 = arith.constant 0 : index
    %c0_7 = arith.constant 0 : index
    %9 = vector.load %arg8[%c0_6, %c0_7] : memref<16x64xf32, #tpu.memory_space<vmem>>, vector<16x64xf32>
    tpu.vector_store %arg8[%c0_6, %c0_7], %8 {strides = array<i32>} : memref<16x64xf32, #tpu.memory_space<vmem>>, vector<16x64xf32>,
    %c0_i32_8 = arith.constant 0 : i32
    %10 = arith.cmpi eq, %arg2, %c0_i32_8 : i32
    %11 = arith.extui %10 : i1 to i32
    %c0_i32_9 = arith.constant 0 : i32
    %12 = arith.cmpi ne, %11, %c0_i32_9 : i32
    scf.if %12 {
      %c0_10 = arith.constant 0 : index
      %c0_11 = arith.constant 0 : index
      %13 = vector.load %arg8[%c0_10, %c0_11] : memref<16x64xf32, #tpu.memory_space<vmem>>, vector<16x64xf32>
      %c0_12 = arith.constant 0 : index
      %c0_13 = arith.constant 0 : index
      %14 = vector.load %arg5[%c0_12, %c0_13] : memref<1x64xf32, #tpu.memory_space<vmem>>, vector<1x64xf32>
      %15 = vector.broadcast %14 : vector<1x64xf32> to vector<16x64xf32>
      %16 = arith.addf %13, %15 : vector<16x64xf32>
      %c0_14 = arith.constant 0 : index
      %c0_15 = arith.constant 0 : index
      %17 = vector.load %arg6[%c0_14, %c0_15] : memref<16x64xf32, #tpu.memory_space<vmem>>, vector<16x64xf32>
      %18 = arith.addf %16, %17 : vector<16x64xf32>
      %c0_16 = arith.constant 0 : index
      %c0_17 = arith.constant 0 : index
      %19 = vector.load %arg7[%c0_16, %c0_17] : memref<16x64xf32, #tpu.memory_space<vmem>>, vector<16x64xf32>
      tpu.vector_store %arg7[%c0_16, %c0_17], %18 {strides = array<i32>} : memref<16x64xf32, #tpu.memory_space<vmem>>, vector<16x64xf32>,
    } else {
    }
    return
  }
  func.func @transform_0(%arg0: i32, %arg1: i32, %arg2: i32) -> (i32, i32) {
    %c0_i32 = arith.constant 0 : i32
    return %arg0, %arg2 : i32, i32
  }
  func.func @transform_1(%arg0: i32, %arg1: i32, %arg2: i32) -> (i32, i32) {
    %c0_i32 = arith.constant 0 : i32
    return %arg2, %arg1 : i32, i32
  }
  func.func @transform_2(%arg0: i32, %arg1: i32, %arg2: i32) -> (i32, i32) {
    %c0_i32 = arith.constant 0 : i32
    %c0_i32_0 = arith.constant 0 : i32
    return %c0_i32, %arg1 : i32, i32
  }
  func.func @transform_3(%arg0: i32, %arg1: i32, %arg2: i32) -> (i32, i32) {
    %c0_i32 = arith.constant 0 : i32
    return %arg0, %arg1 : i32, i32
  }
  func.func @transform_4(%arg0: i32, %arg1: i32, %arg2: i32) -> (i32, i32) {
    %c0_i32 = arith.constant 0 : i32
    return %arg0, %arg1 : i32, i32
  }
}

module attributes {stable_mosaic.version = 11 : i64} {
  func.func @_layernorm_kernel(%arg0: i32, %arg1: memref<16x64xf32, #tpu.memory_space<vmem>>, %arg2: memref<1x64xf32, #tpu.memory_space<vmem>>, %arg3: memref<1x64xf32, #tpu.memory_space<vmem>>, %arg4: memref<16x64xf32, #tpu.memory_space<vmem>>) attributes {dimension_semantics = [#tpu.dimension_semantics<parallel>], iteration_bounds = array<i64: 1>, scalar_prefetch = 0 : i64, scratch_operands = 0 : i64, tpu.core_type = #tpu.core_type<tc>, window_params = [{transform_indices = @transform_0, window_bounds = array<i64: 16, 64>}, {pipeline_mode = #tpu.pipeline_mode<synchronous>, transform_indices = @transform_1, window_bounds = array<i64: 1, 64>}, {pipeline_mode = #tpu.pipeline_mode<synchronous>, transform_indices = @transform_2, window_bounds = array<i64: 1, 64>}, {transform_indices = @transform_3, window_bounds = array<i64: 16, 64>}]} {
    %c0 = arith.constant 0 : index
    %c0_0 = arith.constant 0 : index
    %0 = vector.load %arg1[%c0, %c0_0] : memref<16x64xf32, #tpu.memory_space<vmem>>, vector<16x64xf32>
    %cst = arith.constant dense<0.000000e+00> : vector<16xf32>
    %1 = vector.multi_reduction <add>, %0, %cst [1] : vector<16x64xf32> to vector<16xf32>
    %2 = vector.shape_cast %1 : vector<16xf32> to vector<16x1xf32>
    %cst_1 = arith.constant 6.400000e+01 : f32
    %3 = vector.broadcast %cst_1 : f32 to vector<16x1xf32>
    %4 = arith.divf %2, %3 : vector<16x1xf32>
    %5 = vector.broadcast %4 : vector<16x1xf32> to vector<16x64xf32>
    %6 = arith.subf %0, %5 : vector<16x64xf32>
    %7 = arith.mulf %6, %6 : vector<16x64xf32>
    %cst_2 = arith.constant dense<0.000000e+00> : vector<16xf32>
    %8 = vector.multi_reduction <add>, %7, %cst_2 [1] : vector<16x64xf32> to vector<16xf32>
    %9 = vector.shape_cast %8 : vector<16xf32> to vector<16x1xf32>
    %cst_3 = arith.constant 6.400000e+01 : f32
    %10 = vector.broadcast %cst_3 : f32 to vector<16x1xf32>
    %11 = arith.divf %9, %10 : vector<16x1xf32>
    %cst_4 = arith.constant 9.99999974E-6 : f32
    %12 = vector.broadcast %cst_4 : f32 to vector<16x1xf32>
    %13 = arith.addf %11, %12 : vector<16x1xf32>
    %14 = math.rsqrt %13 : vector<16x1xf32>
    %15 = vector.broadcast %14 : vector<16x1xf32> to vector<16x64xf32>
    %16 = arith.mulf %6, %15 : vector<16x64xf32>
    %c0_5 = arith.constant 0 : index
    %c0_6 = arith.constant 0 : index
    %17 = vector.load %arg2[%c0_5, %c0_6] : memref<1x64xf32, #tpu.memory_space<vmem>>, vector<1x64xf32>
    %18 = vector.broadcast %17 : vector<1x64xf32> to vector<16x64xf32>
    %19 = arith.mulf %16, %18 : vector<16x64xf32>
    %c0_7 = arith.constant 0 : index
    %c0_8 = arith.constant 0 : index
    %20 = vector.load %arg3[%c0_7, %c0_8] : memref<1x64xf32, #tpu.memory_space<vmem>>, vector<1x64xf32>
    %21 = vector.broadcast %20 : vector<1x64xf32> to vector<16x64xf32>
    %22 = arith.addf %19, %21 : vector<16x64xf32>
    %c0_9 = arith.constant 0 : index
    %c0_10 = arith.constant 0 : index
    %23 = vector.load %arg4[%c0_9, %c0_10] : memref<16x64xf32, #tpu.memory_space<vmem>>, vector<16x64xf32>
    tpu.vector_store %arg4[%c0_9, %c0_10], %22 {strides = array<i32>} : memref<16x64xf32, #tpu.memory_space<vmem>>, vector<16x64xf32>,
    return
  }
  func.func @transform_0(%arg0: i32) -> (i32, i32) {
    %c0_i32 = arith.constant 0 : i32
    %c0_i32_0 = arith.constant 0 : i32
    return %arg0, %c0_i32 : i32, i32
  }
  func.func @transform_1(%arg0: i32) -> (i32, i32) {
    %c0_i32 = arith.constant 0 : i32
    %c0_i32_0 = arith.constant 0 : i32
    %c0_i32_1 = arith.constant 0 : i32
    return %c0_i32, %c0_i32_0 : i32, i32
  }
  func.func @transform_2(%arg0: i32) -> (i32, i32) {
    %c0_i32 = arith.constant 0 : i32
    %c0_i32_0 = arith.constant 0 : i32
    %c0_i32_1 = arith.constant 0 : i32
    return %c0_i32, %c0_i32_0 : i32, i32
  }
  func.func @transform_3(%arg0: i32) -> (i32, i32) {
    %c0_i32 = arith.constant 0 : i32
    %c0_i32_0 = arith.constant 0 : i32
    return %arg0, %c0_i32 : i32, i32
  }
}

</mosaic_0001>

<llo_original>
// kernel: whisper_base_feats.18
$region0: #{whisper_base_feats.18}
  #allocation0 [shape = 'u32[]', space=smem, size = 0x4, offset = 0x4, fixed_abs, tag = 'smem constant byte address 0x4 - core index']
  #allocation1 [shape = 'u32[144,128]{1,0:T(1,128)}', space=vmem, size = 0x12000, scoped, tag = 'internal scratch']
  %s0 = inlined_call_operand.vmem [shape: f32[2,2,9,64], index: 0, kind: input, shape index: {}]
  %s1 = inlined_call_operand.vmem [shape: bf16[3,64,64], index: 1, kind: input, shape index: {}]
  %s2 = inlined_call_operand.vmem [shape: f32[1,64], index: 2, kind: input, shape index: {}]
  %s3 = inlined_call_operand.vmem [shape: f32[2,8,64], index: 3, kind: output, shape index: {}]
  %s4 = sld [smem:[#allocation0]]
  $region45: #{whisper_base_feats.18} parent=0
    _
  %s6 = ssub.s32 1, %s4
  %s7 = scalar_select 0, %s6, %s4
  loop: start=0, step=1, limit=4
  $region2: #{whisper_base_feats.18} parent=0 // loop_pre_header
    _
  $region3: #{whisper_base_feats.18} parent=0 // loop_header
    %s9 = sphi 0, %s13
    %p10 = scmp.ge.s32.totalorder %s9, 4
    %s16 = sphi 0, %s28
    %s17 = sphi 0, %s24
    %s18 = sphi 0, %s16
    %s19 = sphi 0, %s17
    %s20 = sphi 0, %s18
    %s21 = sphi 0, %s19
    %s31 = sphi 0, %s33
    %s34 = sphi 0, %s31
    %s35 = sphi 0, %s34
    %s51 = sphi 0, %s35
    %s55 = sphi 0, %s55
    %s57 = sphi 0, %s55
    %s58 = sphi 0, %s57
    %s72 = sphi 0, %s58
    %s76 = sphi 0, %s76
    %s78 = sphi 0, %s76
    %s79 = sphi 0, %s78
    %s93 = sphi 0, %s79
    %s101 = sphi 0, %s103
    %s104 = sphi 0, %s101
    %s105 = sphi 0, %s104
    %s121 = sphi 0, %s105
  $region4: #{whisper_base_feats.18} parent=0 // loop_header_branch
    %12 = sbr.rel (%p10) target = $region8
  $region5: #{whisper_base_feats.18} parent=0 // loop_body
    %s14 = ssub.s32 %s9, 1
    %s15 = ssub.s32 %s9, 2
    %s22 = sadd.s32 1, %s17
    %p23 = scmp.ge.s32.totalorder %s22, 1
    %s24 = scalar_select %p23, 0, %s22
    %s25 = sadd.s32 1, %s16
    %s26 = scalar_select %p23, %s25, %s16
    %p27 = scmp.ge.s32.totalorder %s26, 2
    %s28 = scalar_select %p27, 0, %s26
    %s29 = ssub.s32 %s16, %s28
    %p30 = scmp.eq.s32.totalorder %s29, 0
    %s32 = sadd.s32 %s31, 1
    %s33 = scalar_select %p30, %s31, %s32
    %p36 = pneg %p30
    %p37 = scmp.eq.s32.totalorder %s9, 1
    %p38 = por %p36, %p37
    %p39 = scmp.ne.s32.totalorder %s31, %s34
    %p40 = scmp.eq.s32.totalorder %s9, 0
    %p41 = por %p39, %p40
    %p42 = scmp.ne.s32.totalorder %s31, %s34
    %p43 = scmp.eq.s32.totalorder %s14, 1
    %p44 = por %p42, %p43
    %p45 = scmp.ne.s32.totalorder %s34, %s35
    %p46 = scmp.eq.s32.totalorder %s14, 0
    %p47 = por %p45, %p46
    %p48 = scmp.ne.s32.totalorder %s34, %s35
    %p49 = scmp.eq.s32.totalorder %s15, 1
    %p50 = por %p48, %p49
    %p52 = scmp.ne.s32.totalorder %s35, %s51
    %p53 = scmp.eq.s32.totalorder %s15, 0
    %p54 = por %p52, %p53
    %s56 = sadd.s32 %s55, 1
    %p59 = scmp.eq.s32.totalorder %s9, 1
    %p60 = scmp.ne.s32.totalorder %s55, %s57
    %p61 = scmp.eq.s32.totalorder %s9, 0
    %p62 = por %p60, %p61
    %p63 = scmp.ne.s32.totalorder %s55, %s57
    %p64 = scmp.eq.s32.totalorder %s14, 1
    %p65 = por %p63, %p64
    %p66 = scmp.ne.s32.totalorder %s57, %s58
    %p67 = scmp.eq.s32.totalorder %s14, 0
    %p68 = por %p66, %p67
    %p69 = scmp.ne.s32.totalorder %s57, %s58
    %p70 = scmp.eq.s32.totalorder %s15, 1
    %p71 = por %p69, %p70
    %p73 = scmp.ne.s32.totalorder %s58, %s72
    %p74 = scmp.eq.s32.totalorder %s15, 0
    %p75 = por %p73, %p74
    %s77 = sadd.s32 %s76, 1
    %p80 = scmp.eq.s32.totalorder %s9, 1
    %p81 = scmp.ne.s32.totalorder %s76, %s78
    %p82 = scmp.eq.s32.totalorder %s9, 0
    %p83 = por %p81, %p82
    %p84 = scmp.ne.s32.totalorder %s76, %s78
    %p85 = scmp.eq.s32.totalorder %s14, 1
    %p86 = por %p84, %p85
    %p87 = scmp.ne.s32.totalorder %s78, %s79
    %p88 = scmp.eq.s32.totalorder %s14, 0
    %p89 = por %p87, %p88
    %p90 = scmp.ne.s32.totalorder %s78, %s79
    %p91 = scmp.eq.s32.totalorder %s15, 1
    %p92 = por %p90, %p91
    %p94 = scmp.ne.s32.totalorder %s79, %s93
    %p95 = scmp.eq.s32.totalorder %s15, 0
    %p96 = por %p94, %p95
    %s97 = ssub.s32 %s16, %s28
    %s98 = ssub.s32 %s17, %s24
    %s99 = sor.u32 %s97, %s98
    %p100 = scmp.eq.s32.totalorder %s99, 0
    %s102 = sadd.s32 %s101, 1
    %s103 = scalar_select %p100, %s101, %s102
    %p106 = pneg %p100
    %p107 = scmp.eq.s32.totalorder %s9, 1
    %p108 = por %p106, %p107
    %p109 = scmp.ne.s32.totalorder %s101, %s104
    %p110 = scmp.eq.s32.totalorder %s9, 0
    %p111 = por %p109, %p110
    %p112 = scmp.ne.s32.totalorder %s101, %s104
    %p113 = scmp.eq.s32.totalorder %s14, 1
    %p114 = por %p112, %p113
    %p115 = scmp.ne.s32.totalorder %s104, %s105
    %p116 = scmp.eq.s32.totalorder %s14, 0
    %p117 = por %p115, %p116
    %p118 = scmp.ne.s32.totalorder %s104, %s105
    %p119 = scmp.eq.s32.totalorder %s15, 1
    %p120 = por %p118, %p119
    %p122 = scmp.ne.s32.totalorder %s105, %s121
    %p123 = scmp.eq.s32.totalorder %s15, 0
    %p124 = por %p122, %p123
    %p125 = scmp.le.s32.totalorder 1, %s9
    %p126 = scmp.lt.s32.totalorder %s9, 3
    %p127 = pnand %p125, %p126
    %p128 = pneg %p127
    // Predicated region
    $region9: #{whisper_base_feats.18} parent=5 // pred_check
      _
    $region10: #{whisper_base_feats.18} parent=5 // pred_check_branch
      %130 = sbr.rel (%p127) target = $region12
    $region11: #{whisper_base_feats.18} parent=5 // pred_region
      %s131 = ssub.s32 %s9, 1
      // Predicated region
      $region13: #{whisper_base_feats.18} parent=11 // pred_check
        %p132 = pneg %p68
      $region14: #{whisper_base_feats.18} parent=11 // pred_check_branch
        %134 = sbr.rel (%p132) target = $region16
      $region15: #{whisper_base_feats.18} parent=11 // pred_region
        _
      $region16: #{whisper_base_feats.18} parent=11 // pred_fallthru
        _
      // Predicated region
      $region17: #{whisper_base_feats.18} parent=11 // pred_check
        %p135 = pneg %p89
      $region18: #{whisper_base_feats.18} parent=11 // pred_check_branch
        %137 = sbr.rel (%p135) target = $region20
      $region19: #{whisper_base_feats.18} parent=11 // pred_region
        _
      $region20: #{whisper_base_feats.18} parent=11 // pred_fallthru
        _
    $region12: #{whisper_base_feats.18} parent=5 // pred_fallthru
      _
    %p138 = scmp.lt.s32.totalorder %s9, 2
    // Predicated region
    $region21: #{whisper_base_feats.18} parent=5 // pred_check
      %p139 = pneg %p138
    $region22: #{whisper_base_feats.18} parent=5 // pred_check_branch
      %141 = sbr.rel (%p139) target = $region24
    $region23: #{whisper_base_feats.18} parent=5 // pred_region
      // Predicated region
      $region25: #{whisper_base_feats.18} parent=23 // pred_check
        %p142 = pneg %p41
      $region26: #{whisper_base_feats.18} parent=23 // pred_check_branch
        %144 = sbr.rel (%p142) target = $region28
      $region27: #{whisper_base_feats.18} parent=23 // pred_region
        %p145 = scmp.lt.s32.totalorder %s16, 1
        %s146 = scalar_select %p145, %s16, 1
        %s147 = smul.addr %s146, 4
        %s148 = smul.addr %s147, 8
        %s149 = scalar_lea.vmem %s0, %s148
      $region28: #{whisper_base_feats.18} parent=23 // pred_fallthru
        _
    $region24: #{whisper_base_feats.18} parent=5 // pred_fallthru
      _
    %p150 = scmp.le.s32.totalorder 1, %s9
    %p151 = scmp.lt.s32.totalorder %s9, 3
    %p152 = pnand %p150, %p151
    %p153 = pneg %p152
    // Predicated region
    $region29: #{whisper_base_feats.18} parent=5 // pred_check
      _
    $region30: #{whisper_base_feats.18} parent=5 // pred_check_branch
      %155 = sbr.rel (%p152) target = $region32
    $region31: #{whisper_base_feats.18} parent=5 // pred_region
      %s156 = ssub.s32 %s9, 1
      %p157 = scmp.lt.s32.totalorder %s18, 1
      %s158 = scalar_select %p157, %s18, 1
      %s159 = smul.addr %s158, 4
      %s160 = smul.addr %s159, 8
      %s161 = scalar_lea.vmem %s0, %s160
      %p162 = pneg %p47
      %p163 = pneg %p44
      %p164 = pneg %p68
      %p165 = pneg %p65
      %p166 = pneg %p89
      %p167 = pneg %p86
      %p168 = pneg %p117
      %p169 = pneg %p114
      %p170 = scmp.lt.s32.totalorder %s18, 1
      %s171 = scalar_select %p170, %s18, 1
      %p172 = scmp.lt.s32.totalorder %s19, 0
      %s173 = scalar_select %p172, %s19, 0
      %s174 = sadd.s32 %s173, %s171
      %s175 = smul.addr %s174, 8
      %s176 = scalar_lea.vmem %s3, %s175
      %p177 = scmp.lt.s32.totalorder %s18, 1
      %s178 = scalar_select %p177, %s18, 1
      %s179 = smul.addr %s178, 4
      %s180 = smul.addr %s179, 8
      %s181 = scalar_lea.vmem %s0, %s180
      %p182 = scmp.lt.s32.totalorder %s18, 1
      %s183 = scalar_select %p182, %s18, 1
      %p184 = scmp.lt.s32.totalorder %s19, 0
      %s185 = scalar_select %p184, %s19, 0
      %s186 = sadd.s32 %s185, %s183
      %s187 = smul.addr %s186, 8
      %s188 = scalar_lea.vmem %s3, %s187
      %s190 = smul.u32 %s19, 8
      %s191 = scalar_lea.vmem %s181, %s190
      %v192 = vld [vmem:[%s191] sm:$0xff]
      %v193 = vpack.c.bf16 %v192, %v192
      %v194 = vld [vmem:[%s1] sm:$0xf]
      %v195 = vld [vmem:[%s1 + $0x4] sm:$0xf]
      %v196 = vld [vmem:[%s1 + $0x8] sm:$0xf]
      %v197 = vld [vmem:[%s1 + $0xc] sm:$0xf]
      %v198 = vld [vmem:[%s1 + $0x10] sm:$0xf]
      %v199 = vld [vmem:[%s1 + $0x14] sm:$0xf]
      %v200 = vld [vmem:[%s1 + $0x18] sm:$0xf]
      %v201 = vld [vmem:[%s1 + $0x1c] sm:$0xf]
      %s202 = sadd.s32 %s190, 16
      %s203 = scalar_lea.vmem %s181, %s202
      %v204 = vld [vmem:[%s203] sm:$0xff]
      %v205 = vpack.c.bf16 %v204, %v204
      %s206 = scalar_lea.vmem %s1, 32
      %v207 = vld [vmem:[%s206] sm:$0xf]
      %v208 = vld [vmem:[%s206 + $0x4] sm:$0xf]
      %v209 = vld [vmem:[%s206 + $0x8] sm:$0xf]
      %v210 = vld [vmem:[%s206 + $0xc] sm:$0xf]
      %v211 = vld [vmem:[%s206 + $0x10] sm:$0xf]
      %v212 = vld [vmem:[%s206 + $0x14] sm:$0xf]
      %v213 = vld [vmem:[%s206 + $0x18] sm:$0xf]
      %v214 = vld [vmem:[%s206 + $0x1c] sm:$0xf]
      %v223 = vunpack.c.l.b16 %v207
      %v224 = vunpack.c.l.b16 %v208
      %v225 = vunpack.c.l.b16 %v209
      %v226 = vunpack.c.l.b16 %v210
      %v227 = vunpack.c.l.b16 %v211
      %v228 = vunpack.c.l.b16 %v212
      %v229 = vunpack.c.l.b16 %v213
      %v230 = vunpack.c.l.b16 %v214
      %v231 = vpack.c.b16 %v224, %v223
      %v232 = vpack.c.b16 %v226, %v225
      %v233 = vpack.c.b16 %v228, %v227
      %v234 = vpack.c.b16 %v230, %v229
      %vm239 = vcmask 523264
      %v241 = vsel %vm239, %v205, 0
      %243 = vmatprep.subr.bf16.mxu0 0
      %244 = vmatpush1.bf16.msra.mxu0 %v231
      %245 = vmatprep.subr.bf16.mxu0 0
      %246 = vmatpush1.bf16.msra.mxu0 %v232
      %247 = vmatprep.subr.bf16.mxu0 0
      %248 = vmatpush1.bf16.msra.mxu0 %v233
      %249 = vmatprep.subr.bf16.mxu0 0
      %250 = vmatpush1.bf16.msra.mxu0 %v234
      %251 = vmatprep.subr.bf16.mxu0 0
      %252 = vmatpush1.bf16.msra.mxu0 0
      %253 = vmatprep.subr.bf16.mxu0 0
      %254 = vmatpush1.bf16.msra.mxu0 0
      %255 = vmatprep.subr.bf16.mxu0 0
      %256 = vmatpush1.bf16.msra.mxu0 0
      %257 = vmatprep.subr.bf16.mxu0 0
      %258 = vmatpush1.bf16.msra.mxu0 0
      %259 = vmatprep.subr.bf16.mxu0 0
      %260 = vmatpush1.bf16.msra.mxu0 0
      %261 = vmatprep.subr.bf16.mxu0 0
      %262 = vmatpush1.bf16.msra.mxu0 0
      %263 = vmatprep.subr.bf16.mxu0 0
      %264 = vmatpush1.bf16.msra.mxu0 0
      %265 = vmatprep.subr.bf16.mxu0 0
      %266 = vmatpush1.bf16.msra.mxu0 0
      %267 = vmatprep.subr.bf16.mxu0 0
      %268 = vmatpush1.bf16.msra.mxu0 0
      %269 = vmatprep.subr.bf16.mxu0 0
      %270 = vmatpush1.bf16.msra.mxu0 0
      %271 = vmatprep.subr.bf16.mxu0 0
      %272 = vmatpush1.bf16.msra.mxu0 0
      %273 = vmatprep.subr.bf16.mxu0 0
      %274 = vmatpush1.bf16.msra.mxu0 0
      %275 = vmatprep.mubr.bf16.mxu0 0
      %276 = vmatmul.mubr.bf16.gmra.mrb[0].mxu0 %v241
      %v277 = vpop.f32.mrb[0].mxu0
      %v278 = vadd.f32 0.0, %v277
      %v279 = vpop.f32.mrb[0].mxu0
      %v280 = vpop.f32.mrb[0].mxu0
      %v281 = vpop.f32.mrb[0].mxu0
      %282 = vdwg.mxu0
      %v291 = vunpack.c.l.b16 %v194
      %v292 = vunpack.c.l.b16 %v195
      %v293 = vunpack.c.l.b16 %v196
      %v294 = vunpack.c.l.b16 %v197
      %v295 = vunpack.c.l.b16 %v198
      %v296 = vunpack.c.l.b16 %v199
      %v297 = vunpack.c.l.b16 %v200
      %v298 = vunpack.c.l.b16 %v201
      %v299 = vpack.c.b16 %v292, %v291
      %v300 = vpack.c.b16 %v294, %v293
      %v301 = vpack.c.b16 %v296, %v295
      %v302 = vpack.c.b16 %v298, %v297
      %v308 = vsel %vm239, %v193, 0
      %310 = vmatprep.subr.bf16.mxu0 0
      %311 = vmatpush1.bf16.msra.mxu0 %v299
      %312 = vmatprep.subr.bf16.mxu0 0
      %313 = vmatpush1.bf16.msra.mxu0 %v300
      %314 = vmatprep.subr.bf16.mxu0 0
      %315 = vmatpush1.bf16.msra.mxu0 %v301
      %316 = vmatprep.subr.bf16.mxu0 0
      %317 = vmatpush1.bf16.msra.mxu0 %v302
      %318 = vmatprep.subr.bf16.mxu0 0
      %319 = vmatpush1.bf16.msra.mxu0 0
      %320 = vmatprep.subr.bf16.mxu0 0
      %321 = vmatpush1.bf16.msra.mxu0 0
      %322 = vmatprep.subr.bf16.mxu0 0
      %323 = vmatpush1.bf16.msra.mxu0 0
      %324 = vmatprep.subr.bf16.mxu0 0
      %325 = vmatpush1.bf16.msra.mxu0 0
      %326 = vmatprep.subr.bf16.mxu0 0
      %327 = vmatpush1.bf16.msra.mxu0 0
      %328 = vmatprep.subr.bf16.mxu0 0
      %329 = vmatpush1.bf16.msra.mxu0 0
      %330 = vmatprep.subr.bf16.mxu0 0
      %331 = vmatpush1.bf16.msra.mxu0 0
      %332 = vmatprep.subr.bf16.mxu0 0
      %333 = vmatpush1.bf16.msra.mxu0 0
      %334 = vmatprep.subr.bf16.mxu0 0
      %335 = vmatpush1.bf16.msra.mxu0 0
      %336 = vmatprep.subr.bf16.mxu0 0
      %337 = vmatpush1.bf16.msra.mxu0 0
      %338 = vmatprep.subr.bf16.mxu0 0
      %339 = vmatpush1.bf16.msra.mxu0 0
      %340 = vmatprep.subr.bf16.mxu0 0
      %341 = vmatpush1.bf16.msra.mxu0 0
      %342 = vmatprep.mubr.bf16.mxu0 0
      %343 = vmatmul.mubr.bf16.gmra.mrb[0].mxu0 %v308
      %v344 = vpop.f32.mrb[0].mxu0
      %v345 = vadd.f32 %v278, %v344
      %v346 = vpop.f32.mrb[0].mxu0
      %v347 = vpop.f32.mrb[0].mxu0
      %v348 = vpop.f32.mrb[0].mxu0
      %349 = vdwg.mxu0
      %s350 = sadd.s32 %s190, 1
      %s351 = scalar_lea.vmem %s181, %s350
      %v352 = vld [vmem:[%s351] sm:$0xff]
      %v353 = vpack.c.bf16 %v352, %v352
      %s354 = scalar_lea.vmem %s1, 64
      %v355 = vld [vmem:[%s354] sm:$0xf]
      %v356 = vld [vmem:[%s354 + $0x4] sm:$0xf]
      %v357 = vld [vmem:[%s354 + $0x8] sm:$0xf]
      %v358 = vld [vmem:[%s354 + $0xc] sm:$0xf]
      %v359 = vld [vmem:[%s354 + $0x10] sm:$0xf]
      %v360 = vld [vmem:[%s354 + $0x14] sm:$0xf]
      %v361 = vld [vmem:[%s354 + $0x18] sm:$0xf]
      %v362 = vld [vmem:[%s354 + $0x1c] sm:$0xf]
      %v371 = vunpack.c.l.b16 %v355
      %v372 = vunpack.c.l.b16 %v356
      %v373 = vunpack.c.l.b16 %v357
      %v374 = vunpack.c.l.b16 %v358
      %v375 = vunpack.c.l.b16 %v359
      %v376 = vunpack.c.l.b16 %v360
      %v377 = vunpack.c.l.b16 %v361
      %v378 = vunpack.c.l.b16 %v362
      %v379 = vpack.c.b16 %v372, %v371
      %v380 = vpack.c.b16 %v374, %v373
      %v381 = vpack.c.b16 %v376, %v375
      %v382 = vpack.c.b16 %v378, %v377
      %v388 = vsel %vm239, %v353, 0
      %390 = vmatprep.subr.bf16.mxu0 0
      %391 = vmatpush1.bf16.msra.mxu0 %v379
      %392 = vmatprep.subr.bf16.mxu0 0
      %393 = vmatpush1.bf16.msra.mxu0 %v380
      %394 = vmatprep.subr.bf16.mxu0 0
      %395 = vmatpush1.bf16.msra.mxu0 %v381
      %396 = vmatprep.subr.bf16.mxu0 0
      %397 = vmatpush1.bf16.msra.mxu0 %v382
      %398 = vmatprep.subr.bf16.mxu0 0
      %399 = vmatpush1.bf16.msra.mxu0 0
      %400 = vmatprep.subr.bf16.mxu0 0
      %401 = vmatpush1.bf16.msra.mxu0 0
      %402 = vmatprep.subr.bf16.mxu0 0
      %403 = vmatpush1.bf16.msra.mxu0 0
      %404 = vmatprep.subr.bf16.mxu0 0
      %405 = vmatpush1.bf16.msra.mxu0 0
      %406 = vmatprep.subr.bf16.mxu0 0
      %407 = vmatpush1.bf16.msra.mxu0 0
      %408 = vmatprep.subr.bf16.mxu0 0
      %409 = vmatpush1.bf16.msra.mxu0 0
      %410 = vmatprep.subr.bf16.mxu0 0
      %411 = vmatpush1.bf16.msra.mxu0 0
      %412 = vmatprep.subr.bf16.mxu0 0
      %413 = vmatpush1.bf16.msra.mxu0 0
      %414 = vmatprep.subr.bf16.mxu0 0
      %415 = vmatpush1.bf16.msra.mxu0 0
      %416 = vmatprep.subr.bf16.mxu0 0
      %417 = vmatpush1.bf16.msra.mxu0 0
      %418 = vmatprep.subr.bf16.mxu0 0
      %419 = vmatpush1.bf16.msra.mxu0 0
      %420 = vmatprep.subr.bf16.mxu0 0
      %421 = vmatpush1.bf16.msra.mxu0 0
      %422 = vmatprep.mubr.bf16.mxu0 0
      %423 = vmatmul.mubr.bf16.gmra.mrb[0].mxu0 %v388
      %v424 = vpop.f32.mrb[0].mxu0
      %v425 = vadd.f32 0.0, %v424
      %v426 = vpop.f32.mrb[0].mxu0
      %v427 = vpop.f32.mrb[0].mxu0
      %v428 = vpop.f32.mrb[0].mxu0
      %429 = vdwg.mxu0
      %v430 = vadd.f32 %v345, %v425
      %v431 = vld [vmem:[%s2] sm:$0x1]
      %v433 = vlaneseq
      %v434 = vshrl.u32 %v433, 7
      %v435 = vsub.s32 0, %v434
      %v436 = vrot.slane %v431, %v435
      %v438 = vadd.f32 %v430, %v436
      %v439 = vmul.f32 %v438, 0.5
      %v440 = vmul.f32 %v438, 0.044715
      %v441 = vmul.f32 %v440, %v438
      %v442 = vmul.f32 %v441, %v438
      %v443 = vadd.f32 %v438, %v442
      %v444 = vmul.f32 %v443, 0.7978846
      %v445 = vtanh.pop %v444
      %v446 = vadd.f32 %v445, 1.0
      %v447 = vmul.f32 %v439, %v446
      %448 = vst.msk [vmem:[%s188] sm:$0xff] %vm239, %v447
      %p449 = scmp.lt.s32.totalorder %s18, 1
      %s450 = scalar_select %p449, %s18, 1
      %p451 = scmp.lt.s32.totalorder %s19, 0
      %s452 = scalar_select %p451, %s19, 0
      %s453 = sadd.s32 %s452, %s450
      %s454 = smul.addr %s453, 8
      %s455 = scalar_lea.vmem %s3, %s454
      // Predicated region
      $region33: #{whisper_base_feats.18} parent=31 // pred_check
        %p456 = pneg %p114
      $region34: #{whisper_base_feats.18} parent=31 // pred_check_branch
        %458 = sbr.rel (%p456) target = $region36
      $region35: #{whisper_base_feats.18} parent=31 // pred_region
        _
      $region36: #{whisper_base_feats.18} parent=31 // pred_fallthru
        _
    $region32: #{whisper_base_feats.18} parent=5 // pred_fallthru
      _
    %p459 = scmp.le.s32.totalorder 2, %s9
    // Predicated region
    $region37: #{whisper_base_feats.18} parent=5 // pred_check
      %p460 = pneg %p459
    $region38: #{whisper_base_feats.18} parent=5 // pred_check_branch
      %462 = sbr.rel (%p460) target = $region40
    $region39: #{whisper_base_feats.18} parent=5 // pred_region
      %s463 = ssub.s32 %s9, 2
      // Predicated region
      $region41: #{whisper_base_feats.18} parent=39 // pred_check
        %p464 = pneg %p120
      $region42: #{whisper_base_feats.18} parent=39 // pred_check_branch
        %466 = sbr.rel (%p464) target = $region44
      $region43: #{whisper_base_feats.18} parent=39 // pred_region
        %p467 = scmp.lt.s32.totalorder %s20, 1
        %s468 = scalar_select %p467, %s20, 1
        %p469 = scmp.lt.s32.totalorder %s21, 0
        %s470 = scalar_select %p469, %s21, 0
        %s471 = sadd.s32 %s470, %s468
        %s472 = smul.addr %s471, 8
        %s473 = scalar_lea.vmem %s3, %s472
      $region44: #{whisper_base_feats.18} parent=39 // pred_fallthru
        _
    $region40: #{whisper_base_feats.18} parent=5 // pred_fallthru
      _
  $region6: #{whisper_base_feats.18} parent=0 // loop_footer
    %s13 = sadd.s32 1, %s9
  $region7: #{whisper_base_feats.18} parent=0 // loop_footer_branch
    %8 = sbr.rel target = $region3
  $region8: #{whisper_base_feats.18} parent=0 // loop_exit
    _

// kernel: whisper_base_feats.17
$region0: #{whisper_base_feats.17}
  #allocation0 [shape = 'u32[]', space=smem, size = 0x4, offset = 0x4, fixed_abs, tag = 'smem constant byte address 0x4 - core index']
  #allocation1 [shape = 'u32[144,128]{1,0:T(1,128)}', space=vmem, size = 0x12000, scoped, tag = 'internal scratch']
  %s0 = inlined_call_operand.vmem [shape: f32[2,1,18,16], index: 0, kind: input, shape index: {}]
  %s1 = inlined_call_operand.vmem [shape: bf16[3,16,64], index: 1, kind: input, shape index: {}]
  %s2 = inlined_call_operand.vmem [shape: f32[1,64], index: 2, kind: input, shape index: {}]
  %s3 = inlined_call_operand.vmem [shape: f32[2,16,64], index: 3, kind: output, shape index: {}]
  %s4 = sld [smem:[#allocation0]]
  $region45: #{whisper_base_feats.17} parent=0
    _
  %s6 = ssub.s32 1, %s4
  %s7 = scalar_select 0, %s6, %s4
  loop: start=0, step=1, limit=4
  $region2: #{whisper_base_feats.17} parent=0 // loop_pre_header
    _
  $region3: #{whisper_base_feats.17} parent=0 // loop_header
    %s9 = sphi 0, %s13
    %p10 = scmp.ge.s32.totalorder %s9, 4
    %s16 = sphi 0, %s28
    %s17 = sphi 0, %s24
    %s18 = sphi 0, %s16
    %s19 = sphi 0, %s17
    %s20 = sphi 0, %s18
    %s21 = sphi 0, %s19
    %s31 = sphi 0, %s33
    %s34 = sphi 0, %s31
    %s35 = sphi 0, %s34
    %s51 = sphi 0, %s35
    %s55 = sphi 0, %s55
    %s57 = sphi 0, %s55
    %s58 = sphi 0, %s57
    %s72 = sphi 0, %s58
    %s76 = sphi 0, %s76
    %s78 = sphi 0, %s76
    %s79 = sphi 0, %s78
    %s93 = sphi 0, %s79
    %s101 = sphi 0, %s103
    %s104 = sphi 0, %s101
    %s105 = sphi 0, %s104
    %s121 = sphi 0, %s105
  $region4: #{whisper_base_feats.17} parent=0 // loop_header_branch
    %12 = sbr.rel (%p10) target = $region8
  $region5: #{whisper_base_feats.17} parent=0 // loop_body
    %s14 = ssub.s32 %s9, 1
    %s15 = ssub.s32 %s9, 2
    %s22 = sadd.s32 1, %s17
    %p23 = scmp.ge.s32.totalorder %s22, 1
    %s24 = scalar_select %p23, 0, %s22
    %s25 = sadd.s32 1, %s16
    %s26 = scalar_select %p23, %s25, %s16
    %p27 = scmp.ge.s32.totalorder %s26, 2
    %s28 = scalar_select %p27, 0, %s26
    %s29 = ssub.s32 %s16, %s28
    %p30 = scmp.eq.s32.totalorder %s29, 0
    %s32 = sadd.s32 %s31, 1
    %s33 = scalar_select %p30, %s31, %s32
    %p36 = pneg %p30
    %p37 = scmp.eq.s32.totalorder %s9, 1
    %p38 = por %p36, %p37
    %p39 = scmp.ne.s32.totalorder %s31, %s34
    %p40 = scmp.eq.s32.totalorder %s9, 0
    %p41 = por %p39, %p40
    %p42 = scmp.ne.s32.totalorder %s31, %s34
    %p43 = scmp.eq.s32.totalorder %s14, 1
    %p44 = por %p42, %p43
    %p45 = scmp.ne.s32.totalorder %s34, %s35
    %p46 = scmp.eq.s32.totalorder %s14, 0
    %p47 = por %p45, %p46
    %p48 = scmp.ne.s32.totalorder %s34, %s35
    %p49 = scmp.eq.s32.totalorder %s15, 1
    %p50 = por %p48, %p49
    %p52 = scmp.ne.s32.totalorder %s35, %s51
    %p53 = scmp.eq.s32.totalorder %s15, 0
    %p54 = por %p52, %p53
    %s56 = sadd.s32 %s55, 1
    %p59 = scmp.eq.s32.totalorder %s9, 1
    %p60 = scmp.ne.s32.totalorder %s55, %s57
    %p61 = scmp.eq.s32.totalorder %s9, 0
    %p62 = por %p60, %p61
    %p63 = scmp.ne.s32.totalorder %s55, %s57
    %p64 = scmp.eq.s32.totalorder %s14, 1
    %p65 = por %p63, %p64
    %p66 = scmp.ne.s32.totalorder %s57, %s58
    %p67 = scmp.eq.s32.totalorder %s14, 0
    %p68 = por %p66, %p67
    %p69 = scmp.ne.s32.totalorder %s57, %s58
    %p70 = scmp.eq.s32.totalorder %s15, 1
    %p71 = por %p69, %p70
    %p73 = scmp.ne.s32.totalorder %s58, %s72
    %p74 = scmp.eq.s32.totalorder %s15, 0
    %p75 = por %p73, %p74
    %s77 = sadd.s32 %s76, 1
    %p80 = scmp.eq.s32.totalorder %s9, 1
    %p81 = scmp.ne.s32.totalorder %s76, %s78
    %p82 = scmp.eq.s32.totalorder %s9, 0
    %p83 = por %p81, %p82
    %p84 = scmp.ne.s32.totalorder %s76, %s78
    %p85 = scmp.eq.s32.totalorder %s14, 1
    %p86 = por %p84, %p85
    %p87 = scmp.ne.s32.totalorder %s78, %s79
    %p88 = scmp.eq.s32.totalorder %s14, 0
    %p89 = por %p87, %p88
    %p90 = scmp.ne.s32.totalorder %s78, %s79
    %p91 = scmp.eq.s32.totalorder %s15, 1
    %p92 = por %p90, %p91
    %p94 = scmp.ne.s32.totalorder %s79, %s93
    %p95 = scmp.eq.s32.totalorder %s15, 0
    %p96 = por %p94, %p95
    %s97 = ssub.s32 %s16, %s28
    %s98 = ssub.s32 %s17, %s24
    %s99 = sor.u32 %s97, %s98
    %p100 = scmp.eq.s32.totalorder %s99, 0
    %s102 = sadd.s32 %s101, 1
    %s103 = scalar_select %p100, %s101, %s102
    %p106 = pneg %p100
    %p107 = scmp.eq.s32.totalorder %s9, 1
    %p108 = por %p106, %p107
    %p109 = scmp.ne.s32.totalorder %s101, %s104
    %p110 = scmp.eq.s32.totalorder %s9, 0
    %p111 = por %p109, %p110
    %p112 = scmp.ne.s32.totalorder %s101, %s104
    %p113 = scmp.eq.s32.totalorder %s14, 1
    %p114 = por %p112, %p113
    %p115 = scmp.ne.s32.totalorder %s104, %s105
    %p116 = scmp.eq.s32.totalorder %s14, 0
    %p117 = por %p115, %p116
    %p118 = scmp.ne.s32.totalorder %s104, %s105
    %p119 = scmp.eq.s32.totalorder %s15, 1
    %p120 = por %p118, %p119
    %p122 = scmp.ne.s32.totalorder %s105, %s121
    %p123 = scmp.eq.s32.totalorder %s15, 0
    %p124 = por %p122, %p123
    %p125 = scmp.le.s32.totalorder 1, %s9
    %p126 = scmp.lt.s32.totalorder %s9, 3
    %p127 = pnand %p125, %p126
    %p128 = pneg %p127
    // Predicated region
    $region9: #{whisper_base_feats.17} parent=5 // pred_check
      _
    $region10: #{whisper_base_feats.17} parent=5 // pred_check_branch
      %130 = sbr.rel (%p127) target = $region12
    $region11: #{whisper_base_feats.17} parent=5 // pred_region
      %s131 = ssub.s32 %s9, 1
      // Predicated region
      $region13: #{whisper_base_feats.17} parent=11 // pred_check
        %p132 = pneg %p68
      $region14: #{whisper_base_feats.17} parent=11 // pred_check_branch
        %134 = sbr.rel (%p132) target = $region16
      $region15: #{whisper_base_feats.17} parent=11 // pred_region
        _
      $region16: #{whisper_base_feats.17} parent=11 // pred_fallthru
        _
      // Predicated region
      $region17: #{whisper_base_feats.17} parent=11 // pred_check
        %p135 = pneg %p89
      $region18: #{whisper_base_feats.17} parent=11 // pred_check_branch
        %137 = sbr.rel (%p135) target = $region20
      $region19: #{whisper_base_feats.17} parent=11 // pred_region
        _
      $region20: #{whisper_base_feats.17} parent=11 // pred_fallthru
        _
    $region12: #{whisper_base_feats.17} parent=5 // pred_fallthru
      _
    %p138 = scmp.lt.s32.totalorder %s9, 2
    // Predicated region
    $region21: #{whisper_base_feats.17} parent=5 // pred_check
      %p139 = pneg %p138
    $region22: #{whisper_base_feats.17} parent=5 // pred_check_branch
      %141 = sbr.rel (%p139) target = $region24
    $region23: #{whisper_base_feats.17} parent=5 // pred_region
      // Predicated region
      $region25: #{whisper_base_feats.17} parent=23 // pred_check
        %p142 = pneg %p41
      $region26: #{whisper_base_feats.17} parent=23 // pred_check_branch
        %144 = sbr.rel (%p142) target = $region28
      $region27: #{whisper_base_feats.17} parent=23 // pred_region
        %p145 = scmp.lt.s32.totalorder %s16, 1
        %s146 = scalar_select %p145, %s16, 1
        %s147 = smul.addr %s146, 3
        %s148 = smul.addr %s147, 8
        %s149 = scalar_lea.vmem %s0, %s148
      $region28: #{whisper_base_feats.17} parent=23 // pred_fallthru
        _
    $region24: #{whisper_base_feats.17} parent=5 // pred_fallthru
      _
    %p150 = scmp.le.s32.totalorder 1, %s9
    %p151 = scmp.lt.s32.totalorder %s9, 3
    %p152 = pnand %p150, %p151
    %p153 = pneg %p152
    // Predicated region
    $region29: #{whisper_base_feats.17} parent=5 // pred_check
      _
    $region30: #{whisper_base_feats.17} parent=5 // pred_check_branch
      %155 = sbr.rel (%p152) target = $region32
    $region31: #{whisper_base_feats.17} parent=5 // pred_region
      %s156 = ssub.s32 %s9, 1
      %p157 = scmp.lt.s32.totalorder %s18, 1
      %s158 = scalar_select %p157, %s18, 1
      %s159 = smul.addr %s158, 3
      %s160 = smul.addr %s159, 8
      %s161 = scalar_lea.vmem %s0, %s160
      %p162 = pneg %p47
      %p163 = pneg %p44
      %p164 = pneg %p68
      %p165 = pneg %p65
      %p166 = pneg %p89
      %p167 = pneg %p86
      %p168 = pneg %p117
      %p169 = pneg %p114
      %s170 = smul.u32 2, %s19
      %p171 = scmp.lt.s32.totalorder %s18, 1
      %s172 = scalar_select %p171, %s18, 1
      %p173 = scmp.lt.s32.totalorder %s170, 1
      %s174 = scalar_select %p173, %s170, 1
      %s175 = smul.addr %s172, 2
      %s176 = sadd.s32 %s174, %s175
      %s177 = smul.addr %s176, 8
      %s178 = scalar_lea.vmem %s3, %s177
      %p179 = scmp.lt.s32.totalorder %s18, 1
      %s180 = scalar_select %p179, %s18, 1
      %s181 = smul.addr %s180, 3
      %s182 = smul.addr %s181, 8
      %s183 = scalar_lea.vmem %s0, %s182
      %s184 = smul.u32 2, %s19
      %p185 = scmp.lt.s32.totalorder %s18, 1
      %s186 = scalar_select %p185, %s18, 1
      %p187 = scmp.lt.s32.totalorder %s184, 1
      %s188 = scalar_select %p187, %s184, 1
      %s189 = smul.addr %s186, 2
      %s190 = sadd.s32 %s188, %s189
      %s191 = smul.addr %s190, 8
      %s192 = scalar_lea.vmem %s3, %s191
      %s193 = smul.u32 2, %s19
      %s195 = smul.u32 %s19, 16
      %s196 = scalar_lea.vmem %s183, %s195
      %v197 = vld [vmem:[%s196] sm:$0xff]
      %v198 = vld [vmem:[%s196 + $0x8] sm:$0xff]
      %v199 = vpack.c.bf16 %v198, %v197
      %v200 = vld [vmem:[%s1] sm:$0xf]
      %v201 = vld [vmem:[%s1 + $0x4] sm:$0xf]
      %s202 = sadd.s32 %s195, 1
      %s203 = scalar_lea.vmem %s183, %s202
      %v204 = vld [vmem:[%s203] sm:$0xff]
      %v205 = vld [vmem:[%s203 + $0x8] sm:$0xff]
      %v206 = vpack.c.bf16 %v205, %v204
      %s207 = scalar_lea.vmem %s1, 8
      %v208 = vld [vmem:[%s207] sm:$0xf]
      %v209 = vld [vmem:[%s207 + $0x4] sm:$0xf]
      %v212 = vunpack.c.l.b16 %v208
      %v213 = vunpack.c.l.b16 %v209
      %v214 = vpack.c.b16 %v213, %v212
      %vm216 = vcmask 130048
      %v218 = vsel %vm216, %v206, 0
      %220 = vmatprep.subr.bf16.mxu0 0
      %221 = vmatpush1.bf16.msra.mxu0 %v214
      %222 = vmatprep.subr.bf16.mxu0 0
      %223 = vmatpush1.bf16.msra.mxu0 0
      %224 = vmatprep.subr.bf16.mxu0 0
      %225 = vmatpush1.bf16.msra.mxu0 0
      %226 = vmatprep.subr.bf16.mxu0 0
      %227 = vmatpush1.bf16.msra.mxu0 0
      %228 = vmatprep.subr.bf16.mxu0 0
      %229 = vmatpush1.bf16.msra.mxu0 0
      %230 = vmatprep.subr.bf16.mxu0 0
      %231 = vmatpush1.bf16.msra.mxu0 0
      %232 = vmatprep.subr.bf16.mxu0 0
      %233 = vmatpush1.bf16.msra.mxu0 0
      %234 = vmatprep.subr.bf16.mxu0 0
      %235 = vmatpush1.bf16.msra.mxu0 0
      %236 = vmatprep.subr.bf16.mxu0 0
      %237 = vmatpush1.bf16.msra.mxu0 0
      %238 = vmatprep.subr.bf16.mxu0 0
      %239 = vmatpush1.bf16.msra.mxu0 0
      %240 = vmatprep.subr.bf16.mxu0 0
      %241 = vmatpush1.bf16.msra.mxu0 0
      %242 = vmatprep.subr.bf16.mxu0 0
      %243 = vmatpush1.bf16.msra.mxu0 0
      %244 = vmatprep.subr.bf16.mxu0 0
      %245 = vmatpush1.bf16.msra.mxu0 0
      %246 = vmatprep.subr.bf16.mxu0 0
      %247 = vmatpush1.bf16.msra.mxu0 0
      %248 = vmatprep.subr.bf16.mxu0 0
      %249 = vmatpush1.bf16.msra.mxu0 0
      %250 = vmatprep.subr.bf16.mxu0 0
      %251 = vmatpush1.bf16.msra.mxu0 0
      %252 = vmatprep.mubr.bf16.mxu0 0
      %253 = vmatmul.mubr.bf16.gmra.mrb[0].mxu0 %v218
      %v254 = vpop.f32.mrb[0].mxu0
      %v255 = vadd.f32 0.0, %v254
      %v256 = vpop.f32.mrb[0].mxu0
      %v257 = vpop.f32.mrb[0].mxu0
      %v258 = vadd.f32 0.0, %v257
      %v259 = vpop.f32.mrb[0].mxu0
      %260 = vdwg.mxu0
      %v263 = vunpack.c.l.b16 %v200
      %v264 = vunpack.c.l.b16 %v201
      %v265 = vpack.c.b16 %v264, %v263
      %v268 = vsel %vm216, %v199, 0
      %270 = vmatprep.subr.bf16.mxu0 0
      %271 = vmatpush1.bf16.msra.mxu0 %v265
      %272 = vmatprep.subr.bf16.mxu0 0
      %273 = vmatpush1.bf16.msra.mxu0 0
      %274 = vmatprep.subr.bf16.mxu0 0
      %275 = vmatpush1.bf16.msra.mxu0 0
      %276 = vmatprep.subr.bf16.mxu0 0
      %277 = vmatpush1.bf16.msra.mxu0 0
      %278 = vmatprep.subr.bf16.mxu0 0
      %279 = vmatpush1.bf16.msra.mxu0 0
      %280 = vmatprep.subr.bf16.mxu0 0
      %281 = vmatpush1.bf16.msra.mxu0 0
      %282 = vmatprep.subr.bf16.mxu0 0
      %283 = vmatpush1.bf16.msra.mxu0 0
      %284 = vmatprep.subr.bf16.mxu0 0
      %285 = vmatpush1.bf16.msra.mxu0 0
      %286 = vmatprep.subr.bf16.mxu0 0
      %287 = vmatpush1.bf16.msra.mxu0 0
      %288 = vmatprep.subr.bf16.mxu0 0
      %289 = vmatpush1.bf16.msra.mxu0 0
      %290 = vmatprep.subr.bf16.mxu0 0
      %291 = vmatpush1.bf16.msra.mxu0 0
      %292 = vmatprep.subr.bf16.mxu0 0
      %293 = vmatpush1.bf16.msra.mxu0 0
      %294 = vmatprep.subr.bf16.mxu0 0
      %295 = vmatpush1.bf16.msra.mxu0 0
      %296 = vmatprep.subr.bf16.mxu0 0
      %297 = vmatpush1.bf16.msra.mxu0 0
      %298 = vmatprep.subr.bf16.mxu0 0
      %299 = vmatpush1.bf16.msra.mxu0 0
      %300 = vmatprep.subr.bf16.mxu0 0
      %301 = vmatpush1.bf16.msra.mxu0 0
      %302 = vmatprep.mubr.bf16.mxu0 0
      %303 = vmatmul.mubr.bf16.gmra.mrb[0].mxu0 %v268
      %v304 = vpop.f32.mrb[0].mxu0
      %v305 = vadd.f32 %v255, %v304
      %v306 = vpop.f32.mrb[0].mxu0
      %v307 = vpop.f32.mrb[0].mxu0
      %v308 = vadd.f32 %v258, %v307
      %v309 = vpop.f32.mrb[0].mxu0
      %310 = vdwg.mxu0
      %s311 = sadd.s32 %s195, 2
      %s312 = scalar_lea.vmem %s183, %s311
      %v313 = vld [vmem:[%s312] sm:$0xff]
      %v314 = vld [vmem:[%s312 + $0x8] sm:$0xff]
      %v315 = vpack.c.bf16 %v314, %v313
      %s316 = scalar_lea.vmem %s1, 16
      %v317 = vld [vmem:[%s316] sm:$0xf]
      %v318 = vld [vmem:[%s316 + $0x4] sm:$0xf]
      %v321 = vunpack.c.l.b16 %v317
      %v322 = vunpack.c.l.b16 %v318
      %v323 = vpack.c.b16 %v322, %v321
      %v326 = vsel %vm216, %v315, 0
      %328 = vmatprep.subr.bf16.mxu0 0
      %329 = vmatpush1.bf16.msra.mxu0 %v323
      %330 = vmatprep.subr.bf16.mxu0 0
      %331 = vmatpush1.bf16.msra.mxu0 0
      %332 = vmatprep.subr.bf16.mxu0 0
      %333 = vmatpush1.bf16.msra.mxu0 0
      %334 = vmatprep.subr.bf16.mxu0 0
      %335 = vmatpush1.bf16.msra.mxu0 0
      %336 = vmatprep.subr.bf16.mxu0 0
      %337 = vmatpush1.bf16.msra.mxu0 0
      %338 = vmatprep.subr.bf16.mxu0 0
      %339 = vmatpush1.bf16.msra.mxu0 0
      %340 = vmatprep.subr.bf16.mxu0 0
      %341 = vmatpush1.bf16.msra.mxu0 0
      %342 = vmatprep.subr.bf16.mxu0 0
      %343 = vmatpush1.bf16.msra.mxu0 0
      %344 = vmatprep.subr.bf16.mxu0 0
      %345 = vmatpush1.bf16.msra.mxu0 0
      %346 = vmatprep.subr.bf16.mxu0 0
      %347 = vmatpush1.bf16.msra.mxu0 0
      %348 = vmatprep.subr.bf16.mxu0 0
      %349 = vmatpush1.bf16.msra.mxu0 0
      %350 = vmatprep.subr.bf16.mxu0 0
      %351 = vmatpush1.bf16.msra.mxu0 0
      %352 = vmatprep.subr.bf16.mxu0 0
      %353 = vmatpush1.bf16.msra.mxu0 0
      %354 = vmatprep.subr.bf16.mxu0 0
      %355 = vmatpush1.bf16.msra.mxu0 0
      %356 = vmatprep.subr.bf16.mxu0 0
      %357 = vmatpush1.bf16.msra.mxu0 0
      %358 = vmatprep.subr.bf16.mxu0 0
      %359 = vmatpush1.bf16.msra.mxu0 0
      %360 = vmatprep.mubr.bf16.mxu0 0
      %361 = vmatmul.mubr.bf16.gmra.mrb[0].mxu0 %v326
      %v362 = vpop.f32.mrb[0].mxu0
      %v363 = vadd.f32 0.0, %v362
      %v364 = vpop.f32.mrb[0].mxu0
      %v365 = vpop.f32.mrb[0].mxu0
      %v366 = vadd.f32 0.0, %v365
      %v367 = vpop.f32.mrb[0].mxu0
      %368 = vdwg.mxu0
      %v369 = vadd.f32 %v305, %v363
      %v370 = vadd.f32 %v308, %v366
      %v371 = vld [vmem:[%s2] sm:$0x1]
      %v373 = vlaneseq
      %v374 = vshrl.u32 %v373, 7
      %v375 = vsub.s32 0, %v374
      %v376 = vrot.slane %v371, %v375
      %v378 = vadd.f32 %v369, %v376
      %v379 = vadd.f32 %v370, %v376
      %v380 = vmul.f32 %v378, 0.5
      %v381 = vmul.f32 %v379, 0.5
      %v382 = vmul.f32 %v378, 0.044715
      %v383 = vmul.f32 %v379, 0.044715
      %v384 = vmul.f32 %v382, %v378
      %v385 = vmul.f32 %v383, %v379
      %v386 = vmul.f32 %v384, %v378
      %v387 = vmul.f32 %v385, %v379
      %v388 = vadd.f32 %v378, %v386
      %v389 = vadd.f32 %v379, %v387
      %v390 = vmul.f32 %v388, 0.7978846
      %v391 = vmul.f32 %v389, 0.7978846
      %v392 = vtanh.pop %v390
      %v393 = vtanh.pop %v391
      %v394 = vadd.f32 %v392, 1.0
      %v395 = vadd.f32 %v393, 1.0
      %v396 = vmul.f32 %v380, %v394
      %v397 = vmul.f32 %v381, %v395
      %vm398 = vcmask 523264
      %399 = vst.msk [vmem:[%s192] sm:$0xff] %vm398, %v396
      %400 = vst.msk [vmem:[%s192 + $0x8] sm:$0xff] %vm398, %v397
      %s401 = smul.u32 2, %s19
      %p402 = scmp.lt.s32.totalorder %s18, 1
      %s403 = scalar_select %p402, %s18, 1
      %p404 = scmp.lt.s32.totalorder %s401, 1
      %s405 = scalar_select %p404, %s401, 1
      %s406 = smul.addr %s403, 2
      %s407 = sadd.s32 %s405, %s406
      %s408 = smul.addr %s407, 8
      %s409 = scalar_lea.vmem %s3, %s408
      // Predicated region
      $region33: #{whisper_base_feats.17} parent=31 // pred_check
        %p410 = pneg %p114
      $region34: #{whisper_base_feats.17} parent=31 // pred_check_branch
        %412 = sbr.rel (%p410) target = $region36
      $region35: #{whisper_base_feats.17} parent=31 // pred_region
        %s413 = smul.u32 2, %s19
      $region36: #{whisper_base_feats.17} parent=31 // pred_fallthru
        _
    $region32: #{whisper_base_feats.17} parent=5 // pred_fallthru
      _
    %p414 = scmp.le.s32.totalorder 2, %s9
    // Predicated region
    $region37: #{whisper_base_feats.17} parent=5 // pred_check
      %p415 = pneg %p414
    $region38: #{whisper_base_feats.17} parent=5 // pred_check_branch
      %417 = sbr.rel (%p415) target = $region40
    $region39: #{whisper_base_feats.17} parent=5 // pred_region
      %s418 = ssub.s32 %s9, 2
      // Predicated region
      $region41: #{whisper_base_feats.17} parent=39 // pred_check
        %p419 = pneg %p120
      $region42: #{whisper_base_feats.17} parent=39 // pred_check_branch
        %421 = sbr.rel (%p419) target = $region44
      $region43: #{whisper_base_feats.17} parent=39 // pred_region
        %s422 = smul.u32 2, %s21
        %p423 = scmp.lt.s32.totalorder %s20, 1
        %s424 = scalar_select %p423, %s20, 1
        %p425 = scmp.lt.s32.totalorder %s422, 1
        %s426 = scalar_select %p425, %s422, 1
        %s427 = smul.addr %s424, 2
        %s428 = sadd.s32 %s426, %s427
        %s429 = smul.addr %s428, 8
        %s430 = scalar_lea.vmem %s3, %s429
      $region44: #{whisper_base_feats.17} parent=39 // pred_fallthru
        _
    $region40: #{whisper_base_feats.17} parent=5 // pred_fallthru
      _
  $region6: #{whisper_base_feats.17} parent=0 // loop_footer
    %s13 = sadd.s32 1, %s9
  $region7: #{whisper_base_feats.17} parent=0 // loop_footer_branch
    %8 = sbr.rel target = $region3
  $region8: #{whisper_base_feats.17} parent=0 // loop_exit
    _

// kernel: whisper_base_feats.19
$region0: #{whisper_base_feats.19}
  #allocation0 [shape = 'u32[]', space=smem, size = 0x4, offset = 0x4, fixed_abs, tag = 'smem constant byte address 0x4 - core index']
  #allocation1 [shape = 'u32[144,128]{1,0:T(1,128)}', space=vmem, size = 0x12000, scoped, tag = 'internal scratch']
  %s0 = inlined_call_operand.vmem [shape: f32[16,64], index: 0, kind: input, shape index: {}]
  %s1 = inlined_call_operand.vmem [shape: f32[1,64], index: 1, kind: input, shape index: {}]
  %s2 = inlined_call_operand.vmem [shape: f32[1,64], index: 2, kind: input, shape index: {}]
  %s3 = inlined_call_operand.vmem [shape: f32[16,64], index: 3, kind: output, shape index: {}]
  %s4 = sld [smem:[#allocation0]]
  $region22: #{whisper_base_feats.19} parent=0
    _
  %s6 = ssub.s32 1, %s4
  %s7 = scalar_select 0, %s6, %s4
  // Predicated region
  $region2: #{whisper_base_feats.19} parent=0 // pred_check
    _
  $region3: #{whisper_base_feats.19} parent=0 // pred_check_branch
    %9 = sbr.rel (0) target = $region5
  $region4: #{whisper_base_feats.19} parent=0 // pred_region
    _
  $region5: #{whisper_base_feats.19} parent=0 // pred_fallthru
    _
  // Predicated region
  $region6: #{whisper_base_feats.19} parent=0 // pred_check
    _
  $region7: #{whisper_base_feats.19} parent=0 // pred_check_branch
    %11 = sbr.rel (0) target = $region9
  $region8: #{whisper_base_feats.19} parent=0 // pred_region
    _
  $region9: #{whisper_base_feats.19} parent=0 // pred_fallthru
    _
  // Predicated region
  $region10: #{whisper_base_feats.19} parent=0 // pred_check
    _
  $region11: #{whisper_base_feats.19} parent=0 // pred_check_branch
    %13 = sbr.rel (0) target = $region13
  $region12: #{whisper_base_feats.19} parent=0 // pred_region
    _
  $region13: #{whisper_base_feats.19} parent=0 // pred_fallthru
    _
  %v14 = vld [vmem:[%s0] sm:$0xff]
  %v15 = vld [vmem:[%s0 + $0x8] sm:$0xff]
  %vm16 = vcmask 523264
  %v17 = vsel %vm16, %v14, 0.0
  %18 = vadd.xlane.f32.xlu0 %v17
  %v19 = vpop.xlane.xlu0 %18
  %v20 = vsel %vm16, %v15, 0.0
  %21 = vadd.xlane.f32.xlu0 %v20
  %v22 = vpop.xlane.xlu0 %21
  %v23 = vrcp.pop 64.0
  %v24 = vmul.f32 %v19, %v23
  %v25 = vmul.f32 %v22, %v23
  %v26 = vsub.f32 %v14, %v24
  %v27 = vsub.f32 %v15, %v25
  %v28 = vmul.f32 %v26, %v26
  %v29 = vmul.f32 %v27, %v27
  %v30 = vsel %vm16, %v28, 0.0
  %31 = vadd.xlane.f32.xlu0 %v30
  %v32 = vpop.xlane.xlu0 %31
  %v33 = vsel %vm16, %v29, 0.0
  %34 = vadd.xlane.f32.xlu0 %v33
  %v35 = vpop.xlane.xlu0 %34
  %v36 = vmul.f32 %v32, %v23
  %v37 = vmul.f32 %v35, %v23
  %v38 = vadd.f32 %v36, 1e-05
  %v39 = vadd.f32 %v37, 1e-05
  %v40 = vrsqrt.pop %v38
  %v41 = vrsqrt.pop %v39
  %v42 = vmul.f32 %v26, %v40
  %v43 = vmul.f32 %v27, %v41
  %v44 = vld [vmem:[%s1] sm:$0x1]
  %v46 = vlaneseq
  %v47 = vshrl.u32 %v46, 7
  %v48 = vsub.s32 0, %v47
  %v49 = vrot.slane %v44, %v48
  %v51 = vmul.f32 %v42, %v49
  %v52 = vmul.f32 %v43, %v49
  %v53 = vld [vmem:[%s2] sm:$0x1]
  %v55 = vlaneseq
  %v56 = vshrl.u32 %v55, 7
  %v57 = vsub.s32 0, %v56
  %v58 = vrot.slane %v53, %v57
  %v60 = vadd.f32 %v51, %v58
  %v61 = vadd.f32 %v52, %v58
  %62 = vst.msk [vmem:[%s3] sm:$0xff] %vm16, %v60
  %63 = vst.msk [vmem:[%s3 + $0x8] sm:$0xff] %vm16, %v61
  // Predicated region
  $region14: #{whisper_base_feats.19} parent=0 // pred_check
    _
  $region15: #{whisper_base_feats.19} parent=0 // pred_check_branch
    %65 = sbr.rel (0) target = $region17
  $region16: #{whisper_base_feats.19} parent=0 // pred_region
    _
  $region17: #{whisper_base_feats.19} parent=0 // pred_fallthru
    _
  // Predicated region
  $region18: #{whisper_base_feats.19} parent=0 // pred_check
    _
  $region19: #{whisper_base_feats.19} parent=0 // pred_check_branch
    %67 = sbr.rel (0) target = $region21
  $region20: #{whisper_base_feats.19} parent=0 // pred_region
    _
  $region21: #{whisper_base_feats.19} parent=0 // pred_fallthru
    _

// kernel: whisper_base_feats.20
$region0: #{whisper_base_feats.20}
  #allocation0 [shape = 'u32[]', space=smem, size = 0x4, offset = 0x4, fixed_abs, tag = 'smem constant byte address 0x4 - core index']
  #allocation1 [shape = 'u32[144,128]{1,0:T(1,128)}', space=vmem, size = 0x12000, scoped, tag = 'internal scratch']
  #allocation2 [shape = 'f32[16,192]{1,0:T(8,128)}', space=vmem, size = 0x4000, scoped, tag = 'scratch operand']
  %s0 = inlined_call_operand.vmem [shape: f32[16,64], index: 0, kind: input, shape index: {}]
  %s1 = inlined_call_operand.vmem [shape: bf16[64,192], index: 1, kind: input, shape index: {}]
  %s2 = inlined_call_operand.vmem [shape: f32[1,192], index: 2, kind: input, shape index: {}]
  %s3 = inlined_call_operand.vmem [shape: f32[16,192], index: 3, kind: output, shape index: {}]
  %s4 = sld [smem:[#allocation0]]
  $region30: #{whisper_base_feats.20} parent=0
    _
  %s6 = ssub.s32 1, %s4
  %s7 = scalar_select 0, %s6, %s4
  // Predicated region
  $region2: #{whisper_base_feats.20} parent=0 // pred_check
    _
  $region3: #{whisper_base_feats.20} parent=0 // pred_check_branch
    %9 = sbr.rel (0) target = $region5
  $region4: #{whisper_base_feats.20} parent=0 // pred_region
    _
  $region5: #{whisper_base_feats.20} parent=0 // pred_fallthru
    _
  // Predicated region
  $region6: #{whisper_base_feats.20} parent=0 // pred_check
    _
  $region7: #{whisper_base_feats.20} parent=0 // pred_check_branch
    %11 = sbr.rel (0) target = $region9
  $region8: #{whisper_base_feats.20} parent=0 // pred_region
    _
  $region9: #{whisper_base_feats.20} parent=0 // pred_fallthru
    _
  // Predicated region
  $region10: #{whisper_base_feats.20} parent=0 // pred_check
    _
  $region11: #{whisper_base_feats.20} parent=0 // pred_check_branch
    %13 = sbr.rel (0) target = $region13
  $region12: #{whisper_base_feats.20} parent=0 // pred_region
    _
  $region13: #{whisper_base_feats.20} parent=0 // pred_fallthru
    _
  %p15 = scmp.eq.s32.totalorder 0, 0
  // Predicated region
  $region14: #{whisper_base_feats.20} parent=0 // pred_check
    %p16 = pneg %p15
  $region15: #{whisper_base_feats.20} parent=0 // pred_check_branch
    %18 = sbr.rel (%p16) target = $region17
  $region16: #{whisper_base_feats.20} parent=0 // pred_region
    %19 = vst [vmem:[#allocation2] sm:$0xff] 0.0
    %vm20 = vcmask 523264
    %21 = vst.msk [vmem:[#allocation2 + $0x8] sm:$0xff] %vm20, 0.0
    %22 = vst [vmem:[#allocation2 + $0x10] sm:$0xff] 0.0
    %23 = vst.msk [vmem:[#allocation2 + $0x18] sm:$0xff] %vm20, 0.0
  $region17: #{whisper_base_feats.20} parent=0 // pred_fallthru
    _
  %v24 = vld [vmem:[#allocation2] sm:$0xff]
  %v25 = vld [vmem:[#allocation2 + $0x8] sm:$0xff]
  %v26 = vld [vmem:[#allocation2 + $0x10] sm:$0xff]
  %v27 = vld [vmem:[#allocation2 + $0x18] sm:$0xff]
  %v28 = vld [vmem:[%s0] sm:$0xff]
  %v29 = vld [vmem:[%s0 + $0x8] sm:$0xff]
  %v30 = vpack.c.bf16 %v29, %v28
  %v31 = vld [vmem:[%s1] sm:$0xff]
  %v32 = vld [vmem:[%s1 + $0x8] sm:$0xff]
  %v33 = vld [vmem:[%s1 + $0x10] sm:$0xff]
  %v34 = vld [vmem:[%s1 + $0x18] sm:$0xff]
  %v35 = vld [vmem:[%s1 + $0x20] sm:$0xff]
  %v36 = vld [vmem:[%s1 + $0x28] sm:$0xff]
  %v37 = vld [vmem:[%s1 + $0x30] sm:$0xff]
  %v38 = vld [vmem:[%s1 + $0x38] sm:$0xff]
  %v47 = vunpack.c.l.b16 %v31
  %v48 = vunpack.c.h.b16 %v31
  %v49 = vunpack.c.l.b16 %v32
  %v50 = vunpack.c.h.b16 %v32
  %v51 = vunpack.c.l.b16 %v33
  %v52 = vunpack.c.h.b16 %v33
  %v53 = vunpack.c.l.b16 %v34
  %v54 = vunpack.c.h.b16 %v34
  %v55 = vunpack.c.l.b16 %v35
  %v56 = vunpack.c.h.b16 %v35
  %v57 = vunpack.c.l.b16 %v36
  %v58 = vunpack.c.h.b16 %v36
  %v59 = vunpack.c.l.b16 %v37
  %v60 = vunpack.c.h.b16 %v37
  %v61 = vunpack.c.l.b16 %v38
  %v62 = vunpack.c.h.b16 %v38
  %v63 = vpack.c.b16 %v49, %v47
  %v64 = vpack.c.b16 %v50, %v48
  %v65 = vpack.c.b16 %v53, %v51
  %v66 = vpack.c.b16 %v54, %v52
  %v67 = vpack.c.b16 %v57, %v55
  %v68 = vpack.c.b16 %v58, %v56
  %v69 = vpack.c.b16 %v61, %v59
  %v70 = vpack.c.b16 %v62, %v60
  %vm79 = vcmask 523264
  %v81 = vsel %vm79, %v30, 0
  %83 = vmatprep.subr.bf16.mxu0 %v64
  %84 = vmatpush1.bf16.msra.mxu0 %v63
  %85 = vmatprep.subr.bf16.mxu0 %v66
  %86 = vmatpush1.bf16.msra.mxu0 %v65
  %87 = vmatprep.subr.bf16.mxu0 %v68
  %88 = vmatpush1.bf16.msra.mxu0 %v67
  %89 = vmatprep.subr.bf16.mxu0 %v70
  %90 = vmatpush1.bf16.msra.mxu0 %v69
  %91 = vmatprep.subr.bf16.mxu0 0
  %92 = vmatpush1.bf16.msra.mxu0 0
  %93 = vmatprep.subr.bf16.mxu0 0
  %94 = vmatpush1.bf16.msra.mxu0 0
  %95 = vmatprep.subr.bf16.mxu0 0
  %96 = vmatpush1.bf16.msra.mxu0 0
  %97 = vmatprep.subr.bf16.mxu0 0
  %98 = vmatpush1.bf16.msra.mxu0 0
  %99 = vmatprep.subr.bf16.mxu0 0
  %100 = vmatpush1.bf16.msra.mxu0 0
  %101 = vmatprep.subr.bf16.mxu0 0
  %102 = vmatpush1.bf16.msra.mxu0 0
  %103 = vmatprep.subr.bf16.mxu0 0
  %104 = vmatpush1.bf16.msra.mxu0 0
  %105 = vmatprep.subr.bf16.mxu0 0
  %106 = vmatpush1.bf16.msra.mxu0 0
  %107 = vmatprep.subr.bf16.mxu0 0
  %108 = vmatpush1.bf16.msra.mxu0 0
  %109 = vmatprep.subr.bf16.mxu0 0
  %110 = vmatpush1.bf16.msra.mxu0 0
  %111 = vmatprep.subr.bf16.mxu0 0
  %112 = vmatpush1.bf16.msra.mxu0 0
  %113 = vmatprep.subr.bf16.mxu0 0
  %114 = vmatpush1.bf16.msra.mxu0 0
  %115 = vmatprep.mubr.bf16.mxu0 0
  %116 = vmatmul.mubr.bf16.gmra.mrb[0].mxu0 %v81
  %v117 = vpop.f32.mrb[0].mxu0
  %v118 = vadd.f32 0.0, %v117
  %v119 = vpop.f32.mrb[0].mxu0
  %v120 = vadd.f32 0.0, %v119
  %v121 = vpop.f32.mrb[0].mxu0
  %v122 = vadd.f32 0.0, %v121
  %v123 = vpop.f32.mrb[0].mxu0
  %v124 = vadd.f32 0.0, %v123
  %125 = vdwg.mxu0
  %v126 = vadd.f32 %v24, %v118
  %v127 = vadd.f32 %v25, %v120
  %v128 = vadd.f32 %v26, %v122
  %v129 = vadd.f32 %v27, %v124
  %130 = vst [vmem:[#allocation2] sm:$0xff] %v126
  %131 = vst.msk [vmem:[#allocation2 + $0x8] sm:$0xff] %vm79, %v127
  %132 = vst [vmem:[#allocation2 + $0x10] sm:$0xff] %v128
  %133 = vst.msk [vmem:[#allocation2 + $0x18] sm:$0xff] %vm79, %v129
  // Predicated region
  $region18: #{whisper_base_feats.20} parent=0 // pred_check
    %p134 = pneg %p15
  $region19: #{whisper_base_feats.20} parent=0 // pred_check_branch
    %136 = sbr.rel (%p134) target = $region21
  $region20: #{whisper_base_feats.20} parent=0 // pred_region
    %v137 = vld [vmem:[#allocation2] sm:$0xff]
    %v138 = vld [vmem:[#allocation2 + $0x8] sm:$0xff]
    %v139 = vld [vmem:[#allocation2 + $0x10] sm:$0xff]
    %v140 = vld [vmem:[#allocation2 + $0x18] sm:$0xff]
    %v141 = vld [vmem:[%s2] sm:$0x3]
    %v143 = vlaneseq
    %v144 = vshrl.u32 %v143, 7
    %v145 = vsub.s32 0, %v144
    %v146 = vrot.slane %v141, %v145
    %v147 = vlaneseq
    %v148 = vshrl.u32 %v147, 7
    %v149 = vsub.s32 1, %v148
    %v150 = vrot.slane %v141, %v149
    %v153 = vadd.f32 %v137, %v146
    %v154 = vadd.f32 %v138, %v150
    %v155 = vadd.f32 %v139, %v146
    %v156 = vadd.f32 %v140, %v150
    %157 = vst [vmem:[%s3] sm:$0xff] %v153
    %158 = vst.msk [vmem:[%s3 + $0x8] sm:$0xff] %vm79, %v154
    %159 = vst [vmem:[%s3 + $0x10] sm:$0xff] %v155
    %160 = vst.msk [vmem:[%s3 + $0x18] sm:$0xff] %vm79, %v156
  $region21: #{whisper_base_feats.20} parent=0 // pred_fallthru
    _
  // Predicated region
  $region22: #{whisper_base_feats.20} parent=0 // pred_check
    _
  $region23: #{whisper_base_feats.20} parent=0 // pred_check_branch
    %162 = sbr.rel (0) target = $region25
  $region24: #{whisper_base_feats.20} parent=0 // pred_region
    _
  $region25: #{whisper_base_feats.20} parent=0 // pred_fallthru
    _
  // Predicated region
  $region26: #{whisper_base_feats.20} parent=0 // pred_check
    _
  $region27: #{whisper_base_feats.20} parent=0 // pred_check_branch
    %164 = sbr.rel (0) target = $region29
  $region28: #{whisper_base_feats.20} parent=0 // pred_region
    _
  $region29: #{whisper_base_feats.20} parent=0 // pred_fallthru
    _

// kernel: whisper_base_feats.22
$region0: #{whisper_base_feats.22}
  #allocation0 [shape = 'u32[]', space=smem, size = 0x4, offset = 0x4, fixed_abs, tag = 'smem constant byte address 0x4 - core index']
  #allocation1 [shape = 'u32[144,128]{1,0:T(1,128)}', space=vmem, size = 0x12000, scoped, tag = 'internal scratch']
  #allocation2 [shape = 'f32[16,64]{1,0:T(8,128)}', space=vmem, size = 0x2000, scoped, tag = 'scratch operand']
  %s0 = inlined_call_operand.vmem [shape: f32[16,64], index: 0, kind: input, shape index: {}]
  %s1 = inlined_call_operand.vmem [shape: bf16[64,64], index: 1, kind: input, shape index: {}]
  %s2 = inlined_call_operand.vmem [shape: f32[1,64], index: 2, kind: input, shape index: {}]
  %s3 = inlined_call_operand.vmem [shape: f32[16,64], index: 3, kind: input, shape index: {}]
  %s4 = inlined_call_operand.vmem [shape: f32[16,64], index: 4, kind: output, shape index: {}]
  %s5 = sld [smem:[#allocation0]]
  $region34: #{whisper_base_feats.22} parent=0
    _
  %s7 = ssub.s32 1, %s5
  %s8 = scalar_select 0, %s7, %s5
  // Predicated region
  $region2: #{whisper_base_feats.22} parent=0 // pred_check
    _
  $region3: #{whisper_base_feats.22} parent=0 // pred_check_branch
    %10 = sbr.rel (0) target = $region5
  $region4: #{whisper_base_feats.22} parent=0 // pred_region
    _
  $region5: #{whisper_base_feats.22} parent=0 // pred_fallthru
    _
  // Predicated region
  $region6: #{whisper_base_feats.22} parent=0 // pred_check
    _
  $region7: #{whisper_base_feats.22} parent=0 // pred_check_branch
    %12 = sbr.rel (0) target = $region9
  $region8: #{whisper_base_feats.22} parent=0 // pred_region
    _
  $region9: #{whisper_base_feats.22} parent=0 // pred_fallthru
    _
  // Predicated region
  $region10: #{whisper_base_feats.22} parent=0 // pred_check
    _
  $region11: #{whisper_base_feats.22} parent=0 // pred_check_branch
    %14 = sbr.rel (0) target = $region13
  $region12: #{whisper_base_feats.22} parent=0 // pred_region
    _
  $region13: #{whisper_base_feats.22} parent=0 // pred_fallthru
    _
  // Predicated region
  $region14: #{whisper_base_feats.22} parent=0 // pred_check
    _
  $region15: #{whisper_base_feats.22} parent=0 // pred_check_branch
    %16 = sbr.rel (0) target = $region17
  $region16: #{whisper_base_feats.22} parent=0 // pred_region
    _
  $region17: #{whisper_base_feats.22} parent=0 // pred_fallthru
    _
  %p18 = scmp.eq.s32.totalorder 0, 0
  // Predicated region
  $region18: #{whisper_base_feats.22} parent=0 // pred_check
    %p19 = pneg %p18
  $region19: #{whisper_base_feats.22} parent=0 // pred_check_branch
    %21 = sbr.rel (%p19) target = $region21
  $region20: #{whisper_base_feats.22} parent=0 // pred_region
    %vm22 = vcmask 523264
    %23 = vst.msk [vmem:[#allocation2] sm:$0xff] %vm22, 0.0
    %24 = vst.msk [vmem:[#allocation2 + $0x8] sm:$0xff] %vm22, 0.0
  $region21: #{whisper_base_feats.22} parent=0 // pred_fallthru
    _
  %v25 = vld [vmem:[#allocation2] sm:$0xff]
  %v26 = vld [vmem:[#allocation2 + $0x8] sm:$0xff]
  %v27 = vld [vmem:[%s0] sm:$0xff]
  %v28 = vld [vmem:[%s0 + $0x8] sm:$0xff]
  %v29 = vpack.c.bf16 %v28, %v27
  %v30 = vld [vmem:[%s1] sm:$0xf]
  %v31 = vld [vmem:[%s1 + $0x4] sm:$0xf]
  %v32 = vld [vmem:[%s1 + $0x8] sm:$0xf]
  %v33 = vld [vmem:[%s1 + $0xc] sm:$0xf]
  %v34 = vld [vmem:[%s1 + $0x10] sm:$0xf]
  %v35 = vld [vmem:[%s1 + $0x14] sm:$0xf]
  %v36 = vld [vmem:[%s1 + $0x18] sm:$0xf]
  %v37 = vld [vmem:[%s1 + $0x1c] sm:$0xf]
  %v46 = vunpack.c.l.b16 %v30
  %v47 = vunpack.c.l.b16 %v31
  %v48 = vunpack.c.l.b16 %v32
  %v49 = vunpack.c.l.b16 %v33
  %v50 = vunpack.c.l.b16 %v34
  %v51 = vunpack.c.l.b16 %v35
  %v52 = vunpack.c.l.b16 %v36
  %v53 = vunpack.c.l.b16 %v37
  %v54 = vpack.c.b16 %v47, %v46
  %v55 = vpack.c.b16 %v49, %v48
  %v56 = vpack.c.b16 %v51, %v50
  %v57 = vpack.c.b16 %v53, %v52
  %vm62 = vcmask 523264
  %v64 = vsel %vm62, %v29, 0
  %66 = vmatprep.subr.bf16.mxu0 0
  %67 = vmatpush1.bf16.msra.mxu0 %v54
  %68 = vmatprep.subr.bf16.mxu0 0
  %69 = vmatpush1.bf16.msra.mxu0 %v55
  %70 = vmatprep.subr.bf16.mxu0 0
  %71 = vmatpush1.bf16.msra.mxu0 %v56
  %72 = vmatprep.subr.bf16.mxu0 0
  %73 = vmatpush1.bf16.msra.mxu0 %v57
  %74 = vmatprep.subr.bf16.mxu0 0
  %75 = vmatpush1.bf16.msra.mxu0 0
  %76 = vmatprep.subr.bf16.mxu0 0
  %77 = vmatpush1.bf16.msra.mxu0 0
  %78 = vmatprep.subr.bf16.mxu0 0
  %79 = vmatpush1.bf16.msra.mxu0 0
  %80 = vmatprep.subr.bf16.mxu0 0
  %81 = vmatpush1.bf16.msra.mxu0 0
  %82 = vmatprep.subr.bf16.mxu0 0
  %83 = vmatpush1.bf16.msra.mxu0 0
  %84 = vmatprep.subr.bf16.mxu0 0
  %85 = vmatpush1.bf16.msra.mxu0 0
  %86 = vmatprep.subr.bf16.mxu0 0
  %87 = vmatpush1.bf16.msra.mxu0 0
  %88 = vmatprep.subr.bf16.mxu0 0
  %89 = vmatpush1.bf16.msra.mxu0 0
  %90 = vmatprep.subr.bf16.mxu0 0
  %91 = vmatpush1.bf16.msra.mxu0 0
  %92 = vmatprep.subr.bf16.mxu0 0
  %93 = vmatpush1.bf16.msra.mxu0 0
  %94 = vmatprep.subr.bf16.mxu0 0
  %95 = vmatpush1.bf16.msra.mxu0 0
  %96 = vmatprep.subr.bf16.mxu0 0
  %97 = vmatpush1.bf16.msra.mxu0 0
  %98 = vmatprep.mubr.bf16.mxu0 0
  %99 = vmatmul.mubr.bf16.gmra.mrb[0].mxu0 %v64
  %v100 = vpop.f32.mrb[0].mxu0
  %v101 = vadd.f32 0.0, %v100
  %v102 = vpop.f32.mrb[0].mxu0
  %v103 = vpop.f32.mrb[0].mxu0
  %v104 = vadd.f32 0.0, %v103
  %v105 = vpop.f32.mrb[0].mxu0
  %106 = vdwg.mxu0
  %v107 = vadd.f32 %v25, %v101
  %v108 = vadd.f32 %v26, %v104
  %109 = vst.msk [vmem:[#allocation2] sm:$0xff] %vm62, %v107
  %110 = vst.msk [vmem:[#allocation2 + $0x8] sm:$0xff] %vm62, %v108
  // Predicated region
  $region22: #{whisper_base_feats.22} parent=0 // pred_check
    %p111 = pneg %p18
  $region23: #{whisper_base_feats.22} parent=0 // pred_check_branch
    %113 = sbr.rel (%p111) target = $region25
  $region24: #{whisper_base_feats.22} parent=0 // pred_region
    %v114 = vld [vmem:[#allocation2] sm:$0xff]
    %v115 = vld [vmem:[#allocation2 + $0x8] sm:$0xff]
    %v116 = vld [vmem:[%s2] sm:$0x1]
    %v118 = vlaneseq
    %v119 = vshrl.u32 %v118, 7
    %v120 = vsub.s32 0, %v119
    %v121 = vrot.slane %v116, %v120
    %v123 = vadd.f32 %v114, %v121
    %v124 = vadd.f32 %v115, %v121
    %v125 = vld [vmem:[%s3] sm:$0xff]
    %v126 = vld [vmem:[%s3 + $0x8] sm:$0xff]
    %v127 = vadd.f32 %v123, %v125
    %v128 = vadd.f32 %v124, %v126
    %129 = vst.msk [vmem:[%s4] sm:$0xff] %vm62, %v127
    %130 = vst.msk [vmem:[%s4 + $0x8] sm:$0xff] %vm62, %v128
  $region25: #{whisper_base_feats.22} parent=0 // pred_fallthru
    _
  // Predicated region
  $region26: #{whisper_base_feats.22} parent=0 // pred_check
    _
  $region27: #{whisper_base_feats.22} parent=0 // pred_check_branch
    %132 = sbr.rel (0) target = $region29
  $region28: #{whisper_base_feats.22} parent=0 // pred_region
    _
  $region29: #{whisper_base_feats.22} parent=0 // pred_fallthru
    _
  // Predicated region
  $region30: #{whisper_base_feats.22} parent=0 // pred_check
    _
  $region31: #{whisper_base_feats.22} parent=0 // pred_check_branch
    %134 = sbr.rel (0) target = $region33
  $region32: #{whisper_base_feats.22} parent=0 // pred_region
    _
  $region33: #{whisper_base_feats.22} parent=0 // pred_fallthru
    _

// kernel: whisper_base_feats.24
$region0: #{whisper_base_feats.24}
  #allocation0 [shape = 'u32[]', space=smem, size = 0x4, offset = 0x4, fixed_abs, tag = 'smem constant byte address 0x4 - core index']
  #allocation1 [shape = 'u32[144,128]{1,0:T(1,128)}', space=vmem, size = 0x12000, scoped, tag = 'internal scratch']
  #allocation2 [shape = 'f32[16,128]{1,0:T(8,128)}', space=vmem, size = 0x2000, scoped, tag = 'scratch operand']
  %s0 = inlined_call_operand.vmem [shape: f32[16,64], index: 0, kind: input, shape index: {}]
  %s1 = inlined_call_operand.vmem [shape: bf16[64,128], index: 1, kind: input, shape index: {}]
  %s2 = inlined_call_operand.vmem [shape: f32[1,128], index: 2, kind: input, shape index: {}]
  %s3 = inlined_call_operand.vmem [shape: f32[16,128], index: 3, kind: output, shape index: {}]
  %s4 = sld [smem:[#allocation0]]
  $region30: #{whisper_base_feats.24} parent=0
    _
  %s6 = ssub.s32 1, %s4
  %s7 = scalar_select 0, %s6, %s4
  // Predicated region
  $region2: #{whisper_base_feats.24} parent=0 // pred_check
    _
  $region3: #{whisper_base_feats.24} parent=0 // pred_check_branch
    %9 = sbr.rel (0) target = $region5
  $region4: #{whisper_base_feats.24} parent=0 // pred_region
    _
  $region5: #{whisper_base_feats.24} parent=0 // pred_fallthru
    _
  // Predicated region
  $region6: #{whisper_base_feats.24} parent=0 // pred_check
    _
  $region7: #{whisper_base_feats.24} parent=0 // pred_check_branch
    %11 = sbr.rel (0) target = $region9
  $region8: #{whisper_base_feats.24} parent=0 // pred_region
    _
  $region9: #{whisper_base_feats.24} parent=0 // pred_fallthru
    _
  // Predicated region
  $region10: #{whisper_base_feats.24} parent=0 // pred_check
    _
  $region11: #{whisper_base_feats.24} parent=0 // pred_check_branch
    %13 = sbr.rel (0) target = $region13
  $region12: #{whisper_base_feats.24} parent=0 // pred_region
    _
  $region13: #{whisper_base_feats.24} parent=0 // pred_fallthru
    _
  %p15 = scmp.eq.s32.totalorder 0, 0
  // Predicated region
  $region14: #{whisper_base_feats.24} parent=0 // pred_check
    %p16 = pneg %p15
  $region15: #{whisper_base_feats.24} parent=0 // pred_check_branch
    %18 = sbr.rel (%p16) target = $region17
  $region16: #{whisper_base_feats.24} parent=0 // pred_region
    %19 = vst [vmem:[#allocation2] sm:$0xff] 0.0
    %20 = vst [vmem:[#allocation2 + $0x8] sm:$0xff] 0.0
  $region17: #{whisper_base_feats.24} parent=0 // pred_fallthru
    _
  %v21 = vld [vmem:[#allocation2] sm:$0xff]
  %v22 = vld [vmem:[#allocation2 + $0x8] sm:$0xff]
  %v23 = vld [vmem:[%s0] sm:$0xff]
  %v24 = vld [vmem:[%s0 + $0x8] sm:$0xff]
  %v25 = vpack.c.bf16 %v24, %v23
  %v26 = vld [vmem:[%s1] sm:$0xf]
  %v27 = vld [vmem:[%s1 + $0x4] sm:$0xf]
  %v28 = vld [vmem:[%s1 + $0x8] sm:$0xf]
  %v29 = vld [vmem:[%s1 + $0xc] sm:$0xf]
  %v30 = vld [vmem:[%s1 + $0x10] sm:$0xf]
  %v31 = vld [vmem:[%s1 + $0x14] sm:$0xf]
  %v32 = vld [vmem:[%s1 + $0x18] sm:$0xf]
  %v33 = vld [vmem:[%s1 + $0x1c] sm:$0xf]
  %v42 = vunpack.c.l.b16 %v26
  %v43 = vunpack.c.l.b16 %v27
  %v44 = vunpack.c.l.b16 %v28
  %v45 = vunpack.c.l.b16 %v29
  %v46 = vunpack.c.l.b16 %v30
  %v47 = vunpack.c.l.b16 %v31
  %v48 = vunpack.c.l.b16 %v32
  %v49 = vunpack.c.l.b16 %v33
  %v50 = vpack.c.b16 %v43, %v42
  %v51 = vpack.c.b16 %v45, %v44
  %v52 = vpack.c.b16 %v47, %v46
  %v53 = vpack.c.b16 %v49, %v48
  %vm58 = vcmask 523264
  %v60 = vsel %vm58, %v25, 0
  %62 = vmatprep.subr.bf16.mxu0 0
  %63 = vmatpush1.bf16.msra.mxu0 %v50
  %64 = vmatprep.subr.bf16.mxu0 0
  %65 = vmatpush1.bf16.msra.mxu0 %v51
  %66 = vmatprep.subr.bf16.mxu0 0
  %67 = vmatpush1.bf16.msra.mxu0 %v52
  %68 = vmatprep.subr.bf16.mxu0 0
  %69 = vmatpush1.bf16.msra.mxu0 %v53
  %70 = vmatprep.subr.bf16.mxu0 0
  %71 = vmatpush1.bf16.msra.mxu0 0
  %72 = vmatprep.subr.bf16.mxu0 0
  %73 = vmatpush1.bf16.msra.mxu0 0
  %74 = vmatprep.subr.bf16.mxu0 0
  %75 = vmatpush1.bf16.msra.mxu0 0
  %76 = vmatprep.subr.bf16.mxu0 0
  %77 = vmatpush1.bf16.msra.mxu0 0
  %78 = vmatprep.subr.bf16.mxu0 0
  %79 = vmatpush1.bf16.msra.mxu0 0
  %80 = vmatprep.subr.bf16.mxu0 0
  %81 = vmatpush1.bf16.msra.mxu0 0
  %82 = vmatprep.subr.bf16.mxu0 0
  %83 = vmatpush1.bf16.msra.mxu0 0
  %84 = vmatprep.subr.bf16.mxu0 0
  %85 = vmatpush1.bf16.msra.mxu0 0
  %86 = vmatprep.subr.bf16.mxu0 0
  %87 = vmatpush1.bf16.msra.mxu0 0
  %88 = vmatprep.subr.bf16.mxu0 0
  %89 = vmatpush1.bf16.msra.mxu0 0
  %90 = vmatprep.subr.bf16.mxu0 0
  %91 = vmatpush1.bf16.msra.mxu0 0
  %92 = vmatprep.subr.bf16.mxu0 0
  %93 = vmatpush1.bf16.msra.mxu0 0
  %94 = vmatprep.mubr.bf16.mxu0 0
  %95 = vmatmul.mubr.bf16.gmra.mrb[0].mxu0 %v60
  %v96 = vpop.f32.mrb[0].mxu0
  %v97 = vadd.f32 0.0, %v96
  %v98 = vpop.f32.mrb[0].mxu0
  %v99 = vpop.f32.mrb[0].mxu0
  %v100 = vadd.f32 0.0, %v99
  %v101 = vpop.f32.mrb[0].mxu0
  %102 = vdwg.mxu0
  %v103 = vadd.f32 %v21, %v97
  %v104 = vadd.f32 %v22, %v100
  %105 = vst [vmem:[#allocation2] sm:$0xff] %v103
  %106 = vst [vmem:[#allocation2 + $0x8] sm:$0xff] %v104
  // Predicated region
  $region18: #{whisper_base_feats.24} parent=0 // pred_check
    %p107 = pneg %p15
  $region19: #{whisper_base_feats.24} parent=0 // pred_check_branch
    %109 = sbr.rel (%p107) target = $region21
  $region20: #{whisper_base_feats.24} parent=0 // pred_region
    %v110 = vld [vmem:[#allocation2] sm:$0xff]
    %v111 = vld [vmem:[#allocation2 + $0x8] sm:$0xff]
    %v112 = vld [vmem:[%s2] sm:$0x1]
    %v114 = vlaneseq
    %v115 = vshrl.u32 %v114, 7
    %v116 = vsub.s32 0, %v115
    %v117 = vrot.slane %v112, %v116
    %v119 = vadd.f32 %v110, %v117
    %v120 = vadd.f32 %v111, %v117
    %v121 = vmul.f32 %v119, 0.5
    %v122 = vmul.f32 %v120, 0.5
    %v123 = vmul.f32 %v119, 0.044715
    %v124 = vmul.f32 %v120, 0.044715
    %v125 = vmul.f32 %v123, %v119
    %v126 = vmul.f32 %v124, %v120
    %v127 = vmul.f32 %v125, %v119
    %v128 = vmul.f32 %v126, %v120
    %v129 = vadd.f32 %v119, %v127
    %v130 = vadd.f32 %v120, %v128
    %v131 = vmul.f32 %v129, 0.7978846
    %v132 = vmul.f32 %v130, 0.7978846
    %v133 = vtanh.pop %v131
    %v134 = vtanh.pop %v132
    %v135 = vadd.f32 %v133, 1.0
    %v136 = vadd.f32 %v134, 1.0
    %v137 = vmul.f32 %v121, %v135
    %v138 = vmul.f32 %v122, %v136
    %139 = vst [vmem:[%s3] sm:$0xff] %v137
    %140 = vst [vmem:[%s3 + $0x8] sm:$0xff] %v138
  $region21: #{whisper_base_feats.24} parent=0 // pred_fallthru
    _
  // Predicated region
  $region22: #{whisper_base_feats.24} parent=0 // pred_check
    _
  $region23: #{whisper_base_feats.24} parent=0 // pred_check_branch
    %142 = sbr.rel (0) target = $region25
  $region24: #{whisper_base_feats.24} parent=0 // pred_region
    _
  $region25: #{whisper_base_feats.24} parent=0 // pred_fallthru
    _
  // Predicated region
  $region26: #{whisper_base_feats.24} parent=0 // pred_check
    _
  $region27: #{whisper_base_feats.24} parent=0 // pred_check_branch
    %144 = sbr.rel (0) target = $region29
  $region28: #{whisper_base_feats.24} parent=0 // pred_region
    _
  $region29: #{whisper_base_feats.24} parent=0 // pred_fallthru
    _

// kernel: whisper_base_feats.25
$region0: #{whisper_base_feats.25}
  #allocation0 [shape = 'u32[]', space=smem, size = 0x4, offset = 0x4, fixed_abs, tag = 'smem constant byte address 0x4 - core index']
  #allocation1 [shape = 'u32[144,128]{1,0:T(1,128)}', space=vmem, size = 0x12000, scoped, tag = 'internal scratch']
  #allocation2 [shape = 'f32[16,64]{1,0:T(8,128)}', space=vmem, size = 0x2000, scoped, tag = 'scratch operand']
  %s0 = inlined_call_operand.vmem [shape: f32[16,128], index: 0, kind: input, shape index: {}]
  %s1 = inlined_call_operand.vmem [shape: bf16[128,64], index: 1, kind: input, shape index: {}]
  %s2 = inlined_call_operand.vmem [shape: f32[1,64], index: 2, kind: input, shape index: {}]
  %s3 = inlined_call_operand.vmem [shape: f32[16,64], index: 3, kind: input, shape index: {}]
  %s4 = inlined_call_operand.vmem [shape: f32[16,64], index: 4, kind: output, shape index: {}]
  %s5 = sld [smem:[#allocation0]]
  $region34: #{whisper_base_feats.25} parent=0
    _
  %s7 = ssub.s32 1, %s5
  %s8 = scalar_select 0, %s7, %s5
  // Predicated region
  $region2: #{whisper_base_feats.25} parent=0 // pred_check
    _
  $region3: #{whisper_base_feats.25} parent=0 // pred_check_branch
    %10 = sbr.rel (0) target = $region5
  $region4: #{whisper_base_feats.25} parent=0 // pred_region
    _
  $region5: #{whisper_base_feats.25} parent=0 // pred_fallthru
    _
  // Predicated region
  $region6: #{whisper_base_feats.25} parent=0 // pred_check
    _
  $region7: #{whisper_base_feats.25} parent=0 // pred_check_branch
    %12 = sbr.rel (0) target = $region9
  $region8: #{whisper_base_feats.25} parent=0 // pred_region
    _
  $region9: #{whisper_base_feats.25} parent=0 // pred_fallthru
    _
  // Predicated region
  $region10: #{whisper_base_feats.25} parent=0 // pred_check
    _
  $region11: #{whisper_base_feats.25} parent=0 // pred_check_branch
    %14 = sbr.rel (0) target = $region13
  $region12: #{whisper_base_feats.25} parent=0 // pred_region
    _
  $region13: #{whisper_base_feats.25} parent=0 // pred_fallthru
    _
  // Predicated region
  $region14: #{whisper_base_feats.25} parent=0 // pred_check
    _
  $region15: #{whisper_base_feats.25} parent=0 // pred_check_branch
    %16 = sbr.rel (0) target = $region17
  $region16: #{whisper_base_feats.25} parent=0 // pred_region
    _
  $region17: #{whisper_base_feats.25} parent=0 // pred_fallthru
    _
  %p18 = scmp.eq.s32.totalorder 0, 0
  // Predicated region
  $region18: #{whisper_base_feats.25} parent=0 // pred_check
    %p19 = pneg %p18
  $region19: #{whisper_base_feats.25} parent=0 // pred_check_branch
    %21 = sbr.rel (%p19) target = $region21
  $region20: #{whisper_base_feats.25} parent=0 // pred_region
    %vm22 = vcmask 523264
    %23 = vst.msk [vmem:[#allocation2] sm:$0xff] %vm22, 0.0
    %24 = vst.msk [vmem:[#allocation2 + $0x8] sm:$0xff] %vm22, 0.0
  $region21: #{whisper_base_feats.25} parent=0 // pred_fallthru
    _
  %v25 = vld [vmem:[#allocation2] sm:$0xff]
  %v26 = vld [vmem:[#allocation2 + $0x8] sm:$0xff]
  %v27 = vld [vmem:[%s0] sm:$0xff]
  %v28 = vld [vmem:[%s0 + $0x8] sm:$0xff]
  %v29 = vpack.c.bf16 %v28, %v27
  %v30 = vld [vmem:[%s1] sm:$0xf]
  %v31 = vld [vmem:[%s1 + $0x4] sm:$0xf]
  %v32 = vld [vmem:[%s1 + $0x8] sm:$0xf]
  %v33 = vld [vmem:[%s1 + $0xc] sm:$0xf]
  %v34 = vld [vmem:[%s1 + $0x10] sm:$0xf]
  %v35 = vld [vmem:[%s1 + $0x14] sm:$0xf]
  %v36 = vld [vmem:[%s1 + $0x18] sm:$0xf]
  %v37 = vld [vmem:[%s1 + $0x1c] sm:$0xf]
  %v38 = vld [vmem:[%s1 + $0x20] sm:$0xf]
  %v39 = vld [vmem:[%s1 + $0x24] sm:$0xf]
  %v40 = vld [vmem:[%s1 + $0x28] sm:$0xf]
  %v41 = vld [vmem:[%s1 + $0x2c] sm:$0xf]
  %v42 = vld [vmem:[%s1 + $0x30] sm:$0xf]
  %v43 = vld [vmem:[%s1 + $0x34] sm:$0xf]
  %v44 = vld [vmem:[%s1 + $0x38] sm:$0xf]
  %v45 = vld [vmem:[%s1 + $0x3c] sm:$0xf]
  %v62 = vunpack.c.l.b16 %v30
  %v63 = vunpack.c.l.b16 %v31
  %v64 = vunpack.c.l.b16 %v32
  %v65 = vunpack.c.l.b16 %v33
  %v66 = vunpack.c.l.b16 %v34
  %v67 = vunpack.c.l.b16 %v35
  %v68 = vunpack.c.l.b16 %v36
  %v69 = vunpack.c.l.b16 %v37
  %v70 = vunpack.c.l.b16 %v38
  %v71 = vunpack.c.l.b16 %v39
  %v72 = vunpack.c.l.b16 %v40
  %v73 = vunpack.c.l.b16 %v41
  %v74 = vunpack.c.l.b16 %v42
  %v75 = vunpack.c.l.b16 %v43
  %v76 = vunpack.c.l.b16 %v44
  %v77 = vunpack.c.l.b16 %v45
  %v78 = vpack.c.b16 %v63, %v62
  %v79 = vpack.c.b16 %v65, %v64
  %v80 = vpack.c.b16 %v67, %v66
  %v81 = vpack.c.b16 %v69, %v68
  %v82 = vpack.c.b16 %v71, %v70
  %v83 = vpack.c.b16 %v73, %v72
  %v84 = vpack.c.b16 %v75, %v74
  %v85 = vpack.c.b16 %v77, %v76
  %94 = vmatprep.subr.bf16.mxu0 0
  %95 = vmatpush1.bf16.msra.mxu0 %v78
  %96 = vmatprep.subr.bf16.mxu0 0
  %97 = vmatpush1.bf16.msra.mxu0 %v79
  %98 = vmatprep.subr.bf16.mxu0 0
  %99 = vmatpush1.bf16.msra.mxu0 %v80
  %100 = vmatprep.subr.bf16.mxu0 0
  %101 = vmatpush1.bf16.msra.mxu0 %v81
  %102 = vmatprep.subr.bf16.mxu0 0
  %103 = vmatpush1.bf16.msra.mxu0 %v82
  %104 = vmatprep.subr.bf16.mxu0 0
  %105 = vmatpush1.bf16.msra.mxu0 %v83
  %106 = vmatprep.subr.bf16.mxu0 0
  %107 = vmatpush1.bf16.msra.mxu0 %v84
  %108 = vmatprep.subr.bf16.mxu0 0
  %109 = vmatpush1.bf16.msra.mxu0 %v85
  %110 = vmatprep.subr.bf16.mxu0 0
  %111 = vmatpush1.bf16.msra.mxu0 0
  %112 = vmatprep.subr.bf16.mxu0 0
  %113 = vmatpush1.bf16.msra.mxu0 0
  %114 = vmatprep.subr.bf16.mxu0 0
  %115 = vmatpush1.bf16.msra.mxu0 0
  %116 = vmatprep.subr.bf16.mxu0 0
  %117 = vmatpush1.bf16.msra.mxu0 0
  %118 = vmatprep.subr.bf16.mxu0 0
  %119 = vmatpush1.bf16.msra.mxu0 0
  %120 = vmatprep.subr.bf16.mxu0 0
  %121 = vmatpush1.bf16.msra.mxu0 0
  %122 = vmatprep.subr.bf16.mxu0 0
  %123 = vmatpush1.bf16.msra.mxu0 0
  %124 = vmatprep.subr.bf16.mxu0 0
  %125 = vmatpush1.bf16.msra.mxu0 0
  %126 = vmatprep.mubr.bf16.mxu0 0
  %127 = vmatmul.mubr.bf16.gmra.mrb[0].mxu0 %v29
  %v128 = vpop.f32.mrb[0].mxu0
  %v129 = vadd.f32 0.0, %v128
  %v130 = vpop.f32.mrb[0].mxu0
  %v131 = vpop.f32.mrb[0].mxu0
  %v132 = vadd.f32 0.0, %v131
  %v133 = vpop.f32.mrb[0].mxu0
  %134 = vdwg.mxu0
  %v135 = vadd.f32 %v25, %v129
  %v136 = vadd.f32 %v26, %v132
  %vm137 = vcmask 523264
  %138 = vst.msk [vmem:[#allocation2] sm:$0xff] %vm137, %v135
  %139 = vst.msk [vmem:[#allocation2 + $0x8] sm:$0xff] %vm137, %v136
  // Predicated region
  $region22: #{whisper_base_feats.25} parent=0 // pred_check
    %p140 = pneg %p18
  $region23: #{whisper_base_feats.25} parent=0 // pred_check_branch
    %142 = sbr.rel (%p140) target = $region25
  $region24: #{whisper_base_feats.25} parent=0 // pred_region
    %v143 = vld [vmem:[#allocation2] sm:$0xff]
    %v144 = vld [vmem:[#allocation2 + $0x8] sm:$0xff]
    %v145 = vld [vmem:[%s2] sm:$0x1]
    %v147 = vlaneseq
    %v148 = vshrl.u32 %v147, 7
    %v149 = vsub.s32 0, %v148
    %v150 = vrot.slane %v145, %v149
    %v152 = vadd.f32 %v143, %v150
    %v153 = vadd.f32 %v144, %v150
    %v154 = vld [vmem:[%s3] sm:$0xff]
    %v155 = vld [vmem:[%s3 + $0x8] sm:$0xff]
    %v156 = vadd.f32 %v152, %v154
    %v157 = vadd.f32 %v153, %v155
    %158 = vst.msk [vmem:[%s4] sm:$0xff] %vm137, %v156
    %159 = vst.msk [vmem:[%s4 + $0x8] sm:$0xff] %vm137, %v157
  $region25: #{whisper_base_feats.25} parent=0 // pred_fallthru
    _
  // Predicated region
  $region26: #{whisper_base_feats.25} parent=0 // pred_check
    _
  $region27: #{whisper_base_feats.25} parent=0 // pred_check_branch
    %161 = sbr.rel (0) target = $region29
  $region28: #{whisper_base_feats.25} parent=0 // pred_region
    _
  $region29: #{whisper_base_feats.25} parent=0 // pred_fallthru
    _
  // Predicated region
  $region30: #{whisper_base_feats.25} parent=0 // pred_check
    _
  $region31: #{whisper_base_feats.25} parent=0 // pred_check_branch
    %163 = sbr.rel (0) target = $region33
  $region32: #{whisper_base_feats.25} parent=0 // pred_region
    _
  $region33: #{whisper_base_feats.25} parent=0 // pred_fallthru
    _

// kernel: whisper_base_feats.33
$region0: #{whisper_base_feats.33}
  #allocation0 [shape = 'u32[]', space=smem, size = 0x4, offset = 0x4, fixed_abs, tag = 'smem constant byte address 0x4 - core index']
  #allocation1 [shape = 'u32[144,128]{1,0:T(1,128)}', space=vmem, size = 0x12000, scoped, tag = 'internal scratch']
  %s0 = inlined_call_operand.vmem [shape: f32[16,64], index: 0, kind: input, shape index: {}]
  %s1 = inlined_call_operand.vmem [shape: f32[1,64], index: 1, kind: input, shape index: {}]
  %s2 = inlined_call_operand.vmem [shape: f32[1,64], index: 2, kind: input, shape index: {}]
  %s3 = inlined_call_operand.hbm [shape: f32[16,64], index: 3, kind: output, shape index: {}]
  %s4 = sld [smem:[#allocation0]]
  $region22: #{whisper_base_feats.33} parent=0
    _
  %s6 = ssub.s32 1, %s4
  %s7 = scalar_select 0, %s6, %s4
  $region1: #{whisper_base_feats.33} parent=0
    #allocation2 [shape = 'u8[8192]{0}', space=vmem, size = 0x2000, scoped, tag = 'output window, operand 0, single buffered']
    #allocation3 [shape = 's32[1]{0}', space=sflag, size = 0x4, scoped, tag = 'scoped memory for whisper_base_feats.33']
    %8 = vsyncpa [#allocation3], 0
    // Predicated region
    $region2: #{whisper_base_feats.33} parent=1 // pred_check
      _
    $region3: #{whisper_base_feats.33} parent=1 // pred_check_branch
      %10 = sbr.rel (0) target = $region5
    $region4: #{whisper_base_feats.33} parent=1 // pred_region
      _
    $region5: #{whisper_base_feats.33} parent=1 // pred_fallthru
      _
    // Predicated region
    $region6: #{whisper_base_feats.33} parent=1 // pred_check
      _
    $region7: #{whisper_base_feats.33} parent=1 // pred_check_branch
      %12 = sbr.rel (0) target = $region9
    $region8: #{whisper_base_feats.33} parent=1 // pred_region
      _
    $region9: #{whisper_base_feats.33} parent=1 // pred_fallthru
      _
    // Predicated region
    $region10: #{whisper_base_feats.33} parent=1 // pred_check
      _
    $region11: #{whisper_base_feats.33} parent=1 // pred_check_branch
      %14 = sbr.rel (0) target = $region13
    $region12: #{whisper_base_feats.33} parent=1 // pred_region
      _
    $region13: #{whisper_base_feats.33} parent=1 // pred_fallthru
      _
    %v15 = vld [vmem:[%s0] sm:$0xff]
    %v16 = vld [vmem:[%s0 + $0x8] sm:$0xff]
    %vm17 = vcmask 523264
    %v18 = vsel %vm17, %v15, 0.0
    %19 = vadd.xlane.f32.xlu0 %v18
    %v20 = vpop.xlane.xlu0 %19
    %v21 = vsel %vm17, %v16, 0.0
    %22 = vadd.xlane.f32.xlu0 %v21
    %v23 = vpop.xlane.xlu0 %22
    %v24 = vrcp.pop 64.0
    %v25 = vmul.f32 %v20, %v24
    %v26 = vmul.f32 %v23, %v24
    %v27 = vsub.f32 %v15, %v25
    %v28 = vsub.f32 %v16, %v26
    %v29 = vmul.f32 %v27, %v27
    %v30 = vmul.f32 %v28, %v28
    %v31 = vsel %vm17, %v29, 0.0
    %32 = vadd.xlane.f32.xlu0 %v31
    %v33 = vpop.xlane.xlu0 %32
    %v34 = vsel %vm17, %v30, 0.0
    %35 = vadd.xlane.f32.xlu0 %v34
    %v36 = vpop.xlane.xlu0 %35
    %v37 = vmul.f32 %v33, %v24
    %v38 = vmul.f32 %v36, %v24
    %v39 = vadd.f32 %v37, 1e-05
    %v40 = vadd.f32 %v38, 1e-05
    %v41 = vrsqrt.pop %v39
    %v42 = vrsqrt.pop %v40
    %v43 = vmul.f32 %v27, %v41
    %v44 = vmul.f32 %v28, %v42
    %v45 = vld [vmem:[%s1] sm:$0x1]
    %v47 = vlaneseq
    %v48 = vshrl.u32 %v47, 7
    %v49 = vsub.s32 0, %v48
    %v50 = vrot.slane %v45, %v49
    %v52 = vmul.f32 %v43, %v50
    %v53 = vmul.f32 %v44, %v50
    %v54 = vld [vmem:[%s2] sm:$0x1]
    %v56 = vlaneseq
    %v57 = vshrl.u32 %v56, 7
    %v58 = vsub.s32 0, %v57
    %v59 = vrot.slane %v54, %v58
    %v61 = vadd.f32 %v52, %v59
    %v62 = vadd.f32 %v53, %v59
    %63 = vst.msk [vmem:[#allocation2] sm:$0xff] %vm17, %v61
    %64 = vst.msk [vmem:[#allocation2 + $0x8] sm:$0xff] %vm17, %v62
    // Predicated region
    $region14: #{whisper_base_feats.33} parent=1 // pred_check
      _
    $region15: #{whisper_base_feats.33} parent=1 // pred_check_branch
      %66 = sbr.rel (0) target = $region17
    $region16: #{whisper_base_feats.33} parent=1 // pred_region
      %s68 = ssub.s32 256, 256
      %69 = vsyncadd [#allocation3], %s68
      %s70 = sshll.u32 [#allocation2], 4
      %s71 = int_to_ptr.vmem [resolvable:$true] %s70
      %76 = dma.vmem_to_hbm [thread:$0]  %s71, 256, %s3, [#allocation3], 128, 128, 8
    $region17: #{whisper_base_feats.33} parent=1 // pred_fallthru
      _
    // Predicated region
    $region18: #{whisper_base_feats.33} parent=1 // pred_check
      _
    $region19: #{whisper_base_feats.33} parent=1 // pred_check_branch
      %78 = sbr.rel (0) target = $region21
    $region20: #{whisper_base_feats.33} parent=1 // pred_region
      %79 = dma.done [#allocation3], 256
    $region21: #{whisper_base_feats.33} parent=1 // pred_fallthru
      _
    %80 = vsyncpa [#allocation3], 1

// kernel: whisper_base_feats.21
$region0: #{whisper_base_feats.21}
  #allocation0 [shape = 'u32[]', space=smem, size = 0x4, offset = 0x4, fixed_abs, tag = 'smem constant byte address 0x4 - core index']
  #allocation1 [shape = 'u32[144,128]{1,0:T(1,128)}', space=vmem, size = 0x12000, scoped, tag = 'internal scratch']
  %s0 = inlined_call_operand.vmem [shape: f32[2,8,64], index: 0, kind: input, shape index: {}]
  %s1 = inlined_call_operand.vmem [shape: f32[2,8,64], index: 1, kind: input, shape index: {}]
  %s2 = inlined_call_operand.vmem [shape: f32[2,8,64], index: 2, kind: input, shape index: {}]
  %s3 = inlined_call_operand.vmem [shape: f32[2,8,64], index: 3, kind: output, shape index: {}]
  %s4 = sld [smem:[#allocation0]]
  $region45: #{whisper_base_feats.21} parent=0
    _
  %s6 = ssub.s32 1, %s4
  %s7 = scalar_select 0, %s6, %s4
  loop: start=0, step=1, limit=4
  $region2: #{whisper_base_feats.21} parent=0 // loop_pre_header
    _
  $region3: #{whisper_base_feats.21} parent=0 // loop_header
    %s9 = sphi 0, %s13
    %p10 = scmp.ge.s32.totalorder %s9, 4
    %s16 = sphi 0, %s28
    %s17 = sphi 0, %s24
    %s18 = sphi 0, %s16
    %s19 = sphi 0, %s17
    %s20 = sphi 0, %s18
    %s21 = sphi 0, %s19
    %s33 = sphi 0, %s35
    %s36 = sphi 0, %s33
    %s37 = sphi 0, %s36
    %s53 = sphi 0, %s37
    %s61 = sphi 0, %s63
    %s64 = sphi 0, %s61
    %s65 = sphi 0, %s64
    %s81 = sphi 0, %s65
    %s89 = sphi 0, %s91
    %s92 = sphi 0, %s89
    %s93 = sphi 0, %s92
    %s109 = sphi 0, %s93
    %s117 = sphi 0, %s119
    %s120 = sphi 0, %s117
    %s121 = sphi 0, %s120
    %s137 = sphi 0, %s121
  $region4: #{whisper_base_feats.21} parent=0 // loop_header_branch
    %12 = sbr.rel (%p10) target = $region8
  $region5: #{whisper_base_feats.21} parent=0 // loop_body
    %s14 = ssub.s32 %s9, 1
    %s15 = ssub.s32 %s9, 2
    %s22 = sadd.s32 1, %s17
    %p23 = scmp.ge.s32.totalorder %s22, 1
    %s24 = scalar_select %p23, 0, %s22
    %s25 = sadd.s32 1, %s16
    %s26 = scalar_select %p23, %s25, %s16
    %p27 = scmp.ge.s32.totalorder %s26, 2
    %s28 = scalar_select %p27, 0, %s26
    %s29 = ssub.s32 %s16, %s28
    %s30 = ssub.s32 %s17, %s24
    %s31 = sor.u32 %s29, %s30
    %p32 = scmp.eq.s32.totalorder %s31, 0
    %s34 = sadd.s32 %s33, 1
    %s35 = scalar_select %p32, %s33, %s34
    %p38 = pneg %p32
    %p39 = scmp.eq.s32.totalorder %s9, 1
    %p40 = por %p38, %p39
    %p41 = scmp.ne.s32.totalorder %s33, %s36
    %p42 = scmp.eq.s32.totalorder %s9, 0
    %p43 = por %p41, %p42
    %p44 = scmp.ne.s32.totalorder %s33, %s36
    %p45 = scmp.eq.s32.totalorder %s14, 1
    %p46 = por %p44, %p45
    %p47 = scmp.ne.s32.totalorder %s36, %s37
    %p48 = scmp.eq.s32.totalorder %s14, 0
    %p49 = por %p47, %p48
    %p50 = scmp.ne.s32.totalorder %s36, %s37
    %p51 = scmp.eq.s32.totalorder %s15, 1
    %p52 = por %p50, %p51
    %p54 = scmp.ne.s32.totalorder %s37, %s53
    %p55 = scmp.eq.s32.totalorder %s15, 0
    %p56 = por %p54, %p55
    %s57 = ssub.s32 %s16, %s28
    %s58 = ssub.s32 %s17, %s24
    %s59 = sor.u32 %s57, %s58
    %p60 = scmp.eq.s32.totalorder %s59, 0
    %s62 = sadd.s32 %s61, 1
    %s63 = scalar_select %p60, %s61, %s62
    %p66 = pneg %p60
    %p67 = scmp.eq.s32.totalorder %s9, 1
    %p68 = por %p66, %p67
    %p69 = scmp.ne.s32.totalorder %s61, %s64
    %p70 = scmp.eq.s32.totalorder %s9, 0
    %p71 = por %p69, %p70
    %p72 = scmp.ne.s32.totalorder %s61, %s64
    %p73 = scmp.eq.s32.totalorder %s14, 1
    %p74 = por %p72, %p73
    %p75 = scmp.ne.s32.totalorder %s64, %s65
    %p76 = scmp.eq.s32.totalorder %s14, 0
    %p77 = por %p75, %p76
    %p78 = scmp.ne.s32.totalorder %s64, %s65
    %p79 = scmp.eq.s32.totalorder %s15, 1
    %p80 = por %p78, %p79
    %p82 = scmp.ne.s32.totalorder %s65, %s81
    %p83 = scmp.eq.s32.totalorder %s15, 0
    %p84 = por %p82, %p83
    %s85 = ssub.s32 %s16, %s28
    %s86 = ssub.s32 %s17, %s24
    %s87 = sor.u32 %s85, %s86
    %p88 = scmp.eq.s32.totalorder %s87, 0
    %s90 = sadd.s32 %s89, 1
    %s91 = scalar_select %p88, %s89, %s90
    %p94 = pneg %p88
    %p95 = scmp.eq.s32.totalorder %s9, 1
    %p96 = por %p94, %p95
    %p97 = scmp.ne.s32.totalorder %s89, %s92
    %p98 = scmp.eq.s32.totalorder %s9, 0
    %p99 = por %p97, %p98
    %p100 = scmp.ne.s32.totalorder %s89, %s92
    %p101 = scmp.eq.s32.totalorder %s14, 1
    %p102 = por %p100, %p101
    %p103 = scmp.ne.s32.totalorder %s92, %s93
    %p104 = scmp.eq.s32.totalorder %s14, 0
    %p105 = por %p103, %p104
    %p106 = scmp.ne.s32.totalorder %s92, %s93
    %p107 = scmp.eq.s32.totalorder %s15, 1
    %p108 = por %p106, %p107
    %p110 = scmp.ne.s32.totalorder %s93, %s109
    %p111 = scmp.eq.s32.totalorder %s15, 0
    %p112 = por %p110, %p111
    %s113 = ssub.s32 %s16, %s28
    %s114 = ssub.s32 %s17, %s24
    %s115 = sor.u32 %s113, %s114
    %p116 = scmp.eq.s32.totalorder %s115, 0
    %s118 = sadd.s32 %s117, 1
    %s119 = scalar_select %p116, %s117, %s118
    %p122 = pneg %p116
    %p123 = scmp.eq.s32.totalorder %s9, 1
    %p124 = por %p122, %p123
    %p125 = scmp.ne.s32.totalorder %s117, %s120
    %p126 = scmp.eq.s32.totalorder %s9, 0
    %p127 = por %p125, %p126
    %p128 = scmp.ne.s32.totalorder %s117, %s120
    %p129 = scmp.eq.s32.totalorder %s14, 1
    %p130 = por %p128, %p129
    %p131 = scmp.ne.s32.totalorder %s120, %s121
    %p132 = scmp.eq.s32.totalorder %s14, 0
    %p133 = por %p131, %p132
    %p134 = scmp.ne.s32.totalorder %s120, %s121
    %p135 = scmp.eq.s32.totalorder %s15, 1
    %p136 = por %p134, %p135
    %p138 = scmp.ne.s32.totalorder %s121, %s137
    %p139 = scmp.eq.s32.totalorder %s15, 0
    %p140 = por %p138, %p139
    %p141 = scmp.le.s32.totalorder 1, %s9
    %p142 = scmp.lt.s32.totalorder %s9, 3
    %p143 = pnand %p141, %p142
    %p144 = pneg %p143
    // Predicated region
    $region9: #{whisper_base_feats.21} parent=5 // pred_check
      _
    $region10: #{whisper_base_feats.21} parent=5 // pred_check_branch
      %146 = sbr.rel (%p143) target = $region12
    $region11: #{whisper_base_feats.21} parent=5 // pred_region
      %s147 = ssub.s32 %s9, 1
    $region12: #{whisper_base_feats.21} parent=5 // pred_fallthru
      _
    %p148 = scmp.lt.s32.totalorder %s9, 2
    // Predicated region
    $region13: #{whisper_base_feats.21} parent=5 // pred_check
      %p149 = pneg %p148
    $region14: #{whisper_base_feats.21} parent=5 // pred_check_branch
      %151 = sbr.rel (%p149) target = $region16
    $region15: #{whisper_base_feats.21} parent=5 // pred_region
      // Predicated region
      $region17: #{whisper_base_feats.21} parent=15 // pred_check
        %p152 = pneg %p43
      $region18: #{whisper_base_feats.21} parent=15 // pred_check_branch
        %154 = sbr.rel (%p152) target = $region20
      $region19: #{whisper_base_feats.21} parent=15 // pred_region
        %p155 = scmp.lt.s32.totalorder %s16, 1
        %s156 = scalar_select %p155, %s16, 1
        %p157 = scmp.lt.s32.totalorder %s17, 0
        %s158 = scalar_select %p157, %s17, 0
        %s159 = sadd.s32 %s158, %s156
        %s160 = smul.addr %s159, 8
        %s161 = scalar_lea.vmem %s0, %s160
      $region20: #{whisper_base_feats.21} parent=15 // pred_fallthru
        _
      // Predicated region
      $region21: #{whisper_base_feats.21} parent=15 // pred_check
        %p162 = pneg %p71
      $region22: #{whisper_base_feats.21} parent=15 // pred_check_branch
        %164 = sbr.rel (%p162) target = $region24
      $region23: #{whisper_base_feats.21} parent=15 // pred_region
        %p165 = scmp.lt.s32.totalorder %s16, 1
        %s166 = scalar_select %p165, %s16, 1
        %p167 = scmp.lt.s32.totalorder %s17, 0
        %s168 = scalar_select %p167, %s17, 0
        %s169 = sadd.s32 %s168, %s166
        %s170 = smul.addr %s169, 8
        %s171 = scalar_lea.vmem %s1, %s170
      $region24: #{whisper_base_feats.21} parent=15 // pred_fallthru
        _
      // Predicated region
      $region25: #{whisper_base_feats.21} parent=15 // pred_check
        %p172 = pneg %p99
      $region26: #{whisper_base_feats.21} parent=15 // pred_check_branch
        %174 = sbr.rel (%p172) target = $region28
      $region27: #{whisper_base_feats.21} parent=15 // pred_region
        %p175 = scmp.lt.s32.totalorder %s16, 1
        %s176 = scalar_select %p175, %s16, 1
        %p177 = scmp.lt.s32.totalorder %s17, 0
        %s178 = scalar_select %p177, %s17, 0
        %s179 = sadd.s32 %s178, %s176
        %s180 = smul.addr %s179, 8
        %s181 = scalar_lea.vmem %s2, %s180
      $region28: #{whisper_base_feats.21} parent=15 // pred_fallthru
        _
    $region16: #{whisper_base_feats.21} parent=5 // pred_fallthru
      _
    %p182 = scmp.le.s32.totalorder 1, %s9
    %p183 = scmp.lt.s32.totalorder %s9, 3
    %p184 = pnand %p182, %p183
    %p185 = pneg %p184
    // Predicated region
    $region29: #{whisper_base_feats.21} parent=5 // pred_check
      _
    $region30: #{whisper_base_feats.21} parent=5 // pred_check_branch
      %187 = sbr.rel (%p184) target = $region32
    $region31: #{whisper_base_feats.21} parent=5 // pred_region
      %s188 = ssub.s32 %s9, 1
      %p189 = scmp.lt.s32.totalorder %s18, 1
      %s190 = scalar_select %p189, %s18, 1
      %p191 = scmp.lt.s32.totalorder %s19, 0
      %s192 = scalar_select %p191, %s19, 0
      %s193 = sadd.s32 %s192, %s190
      %s194 = smul.addr %s193, 8
      %s195 = scalar_lea.vmem %s0, %s194
      %p196 = pneg %p49
      %p197 = pneg %p46
      %p198 = scmp.lt.s32.totalorder %s18, 1
      %s199 = scalar_select %p198, %s18, 1
      %p200 = scmp.lt.s32.totalorder %s19, 0
      %s201 = scalar_select %p200, %s19, 0
      %s202 = sadd.s32 %s201, %s199
      %s203 = smul.addr %s202, 8
      %s204 = scalar_lea.vmem %s1, %s203
      %p205 = pneg %p77
      %p206 = pneg %p74
      %p207 = scmp.lt.s32.totalorder %s18, 1
      %s208 = scalar_select %p207, %s18, 1
      %p209 = scmp.lt.s32.totalorder %s19, 0
      %s210 = scalar_select %p209, %s19, 0
      %s211 = sadd.s32 %s210, %s208
      %s212 = smul.addr %s211, 8
      %s213 = scalar_lea.vmem %s2, %s212
      %p214 = pneg %p105
      %p215 = pneg %p102
      %p216 = pneg %p133
      %p217 = pneg %p130
      %p218 = scmp.lt.s32.totalorder %s18, 1
      %s219 = scalar_select %p218, %s18, 1
      %p220 = scmp.lt.s32.totalorder %s19, 0
      %s221 = scalar_select %p220, %s19, 0
      %s222 = sadd.s32 %s221, %s219
      %s223 = smul.addr %s222, 8
      %s224 = scalar_lea.vmem %s3, %s223
      %p225 = scmp.lt.s32.totalorder %s18, 1
      %s226 = scalar_select %p225, %s18, 1
      %p227 = scmp.lt.s32.totalorder %s19, 0
      %s228 = scalar_select %p227, %s19, 0
      %s229 = sadd.s32 %s228, %s226
      %s230 = smul.addr %s229, 8
      %s231 = scalar_lea.vmem %s0, %s230
      %p232 = scmp.lt.s32.totalorder %s18, 1
      %s233 = scalar_select %p232, %s18, 1
      %p234 = scmp.lt.s32.totalorder %s19, 0
      %s235 = scalar_select %p234, %s19, 0
      %s236 = sadd.s32 %s235, %s233
      %s237 = smul.addr %s236, 8
      %s238 = scalar_lea.vmem %s1, %s237
      %p239 = scmp.lt.s32.totalorder %s18, 1
      %s240 = scalar_select %p239, %s18, 1
      %p241 = scmp.lt.s32.totalorder %s19, 0
      %s242 = scalar_select %p241, %s19, 0
      %s243 = sadd.s32 %s242, %s240
      %s244 = smul.addr %s243, 8
      %s245 = scalar_lea.vmem %s2, %s244
      %p246 = scmp.lt.s32.totalorder %s18, 1
      %s247 = scalar_select %p246, %s18, 1
      %p248 = scmp.lt.s32.totalorder %s19, 0
      %s249 = scalar_select %p248, %s19, 0
      %s250 = sadd.s32 %s249, %s247
      %s251 = smul.addr %s250, 8
      %s252 = scalar_lea.vmem %s3, %s251
      %v254 = vld [vmem:[%s231] sm:$0xff]
      %256 = vrot.lane.b32.xlu0 %v254, 112
      %v257 = vpop.permute.xlu0 %256
      %259 = vrot.lane.b32.xlu0 %v254, 96
      %v260 = vpop.permute.xlu0 %259
      %262 = vrot.lane.b32.xlu0 %v254, 80
      %v263 = vpop.permute.xlu0 %262
      %v265 = vcombine.low %v254, %v260
      %v266 = vcombine.high %v254, %v260
      %v268 = vunpack.c.l.s4 1983009808
      %v269 = vunpack.c.0.s8 %v268
      %v270 = vlaneseq
      %v271 = vshrl.u32 %v270, 7
      %v272 = vsub.s32 %v269, %v271
      %v273 = vrot.slane %v265, %v272
      %v275 = vunpack.c.l.s4 1983009808
      %v276 = vunpack.c.0.s8 %v275
      %v277 = vlaneseq
      %v278 = vshrl.u32 %v277, 7
      %v279 = vsub.s32 %v276, %v278
      %v280 = vrot.slane %v266, %v279
      %v281 = vcombine.low %v257, %v263
      %v282 = vcombine.high %v257, %v263
      %v284 = vunpack.c.l.s4 1983009808
      %v285 = vunpack.c.0.s8 %v284
      %v286 = vlaneseq
      %v287 = vshrl.u32 %v286, 7
      %v288 = vsub.s32 %v285, %v287
      %v289 = vrot.slane %v281, %v288
      %v291 = vunpack.c.l.s4 1983009808
      %v292 = vunpack.c.0.s8 %v291
      %v293 = vlaneseq
      %v294 = vshrl.u32 %v293, 7
      %v295 = vsub.s32 %v292, %v294
      %v296 = vrot.slane %v282, %v295
      %v297 = vcombine.low %v273, %v289
      %v298 = vcombine.high %v273, %v289
      %v300 = vunpack.c.l.s4 1934713408
      %v301 = vunpack.c.0.s8 %v300
      %v302 = vlaneseq
      %v303 = vshrl.u32 %v302, 7
      %v304 = vsub.s32 %v301, %v303
      %v305 = vrot.slane %v297, %v304
      %v307 = vunpack.c.l.s4 1934713408
      %v308 = vunpack.c.0.s8 %v307
      %v309 = vlaneseq
      %v310 = vshrl.u32 %v309, 7
      %v311 = vsub.s32 %v308, %v310
      %v312 = vrot.slane %v298, %v311
      %v313 = vcombine.low %v280, %v296
      %v314 = vcombine.high %v280, %v296
      %v316 = vunpack.c.l.s4 1934713408
      %v317 = vunpack.c.0.s8 %v316
      %v318 = vlaneseq
      %v319 = vshrl.u32 %v318, 7
      %v320 = vsub.s32 %v317, %v319
      %v321 = vrot.slane %v313, %v320
      %v323 = vunpack.c.l.s4 1934713408
      %v324 = vunpack.c.0.s8 %v323
      %v325 = vlaneseq
      %v326 = vshrl.u32 %v325, 7
      %v327 = vsub.s32 %v324, %v326
      %v328 = vrot.slane %v314, %v327
      %v329 = vcombine.high %v305, 0.0
      %v330 = vcombine.high %v312, 0.0
      %v331 = vcombine.high %v321, 0.0
      %v332 = vcombine.high %v328, 0.0
      %v333 = vpack.c.bf16 %v305, %v305
      %v334 = vpack.c.bf16 %v329, %v329
      %v335 = vpack.c.bf16 %v312, %v312
      %v336 = vpack.c.bf16 %v330, %v330
      %v337 = vpack.c.bf16 %v321, %v321
      %v338 = vpack.c.bf16 %v331, %v331
      %v339 = vpack.c.bf16 %v328, %v328
      %v340 = vpack.c.bf16 %v332, %v332
      %v341 = vld [vmem:[%s238] sm:$0xff]
      %343 = vrot.lane.b32.xlu0 %v341, 112
      %v344 = vpop.permute.xlu0 %343
      %346 = vrot.lane.b32.xlu0 %v341, 96
      %v347 = vpop.permute.xlu0 %346
      %349 = vrot.lane.b32.xlu0 %v341, 80
      %v350 = vpop.permute.xlu0 %349
      %v352 = vcombine.low %v341, %v347
      %v353 = vcombine.high %v341, %v347
      %v355 = vunpack.c.l.s4 1983009808
      %v356 = vunpack.c.0.s8 %v355
      %v357 = vlaneseq
      %v358 = vshrl.u32 %v357, 7
      %v359 = vsub.s32 %v356, %v358
      %v360 = vrot.slane %v352, %v359
      %v362 = vunpack.c.l.s4 1983009808
      %v363 = vunpack.c.0.s8 %v362
      %v364 = vlaneseq
      %v365 = vshrl.u32 %v364, 7
      %v366 = vsub.s32 %v363, %v365
      %v367 = vrot.slane %v353, %v366
      %v368 = vcombine.low %v344, %v350
      %v369 = vcombine.high %v344, %v350
      %v371 = vunpack.c.l.s4 1983009808
      %v372 = vunpack.c.0.s8 %v371
      %v373 = vlaneseq
      %v374 = vshrl.u32 %v373, 7
      %v375 = vsub.s32 %v372, %v374
      %v376 = vrot.slane %v368, %v375
      %v378 = vunpack.c.l.s4 1983009808
      %v379 = vunpack.c.0.s8 %v378
      %v380 = vlaneseq
      %v381 = vshrl.u32 %v380, 7
      %v382 = vsub.s32 %v379, %v381
      %v383 = vrot.slane %v369, %v382
      %v384 = vcombine.low %v360, %v376
      %v385 = vcombine.high %v360, %v376
      %v387 = vunpack.c.l.s4 1934713408
      %v388 = vunpack.c.0.s8 %v387
      %v389 = vlaneseq
      %v390 = vshrl.u32 %v389, 7
      %v391 = vsub.s32 %v388, %v390
      %v392 = vrot.slane %v384, %v391
      %v394 = vunpack.c.l.s4 1934713408
      %v395 = vunpack.c.0.s8 %v394
      %v396 = vlaneseq
      %v397 = vshrl.u32 %v396, 7
      %v398 = vsub.s32 %v395, %v397
      %v399 = vrot.slane %v385, %v398
      %v400 = vcombine.low %v367, %v383
      %v401 = vcombine.high %v367, %v383
      %v403 = vunpack.c.l.s4 1934713408
      %v404 = vunpack.c.0.s8 %v403
      %v405 = vlaneseq
      %v406 = vshrl.u32 %v405, 7
      %v407 = vsub.s32 %v404, %v406
      %v408 = vrot.slane %v400, %v407
      %v410 = vunpack.c.l.s4 1934713408
      %v411 = vunpack.c.0.s8 %v410
      %v412 = vlaneseq
      %v413 = vshrl.u32 %v412, 7
      %v414 = vsub.s32 %v411, %v413
      %v415 = vrot.slane %v401, %v414
      %v416 = vcombine.high %v392, 0.0
      %v417 = vcombine.high %v399, 0.0
      %v418 = vcombine.high %v408, 0.0
      %v419 = vcombine.high %v415, 0.0
      %v420 = vpack.c.bf16 %v392, %v392
      %v421 = vpack.c.bf16 %v416, %v416
      %v422 = vpack.c.bf16 %v399, %v399
      %v423 = vpack.c.bf16 %v417, %v417
      %v424 = vpack.c.bf16 %v408, %v408
      %v425 = vpack.c.bf16 %v418, %v418
      %v426 = vpack.c.bf16 %v415, %v415
      %v427 = vpack.c.bf16 %v419, %v419
      %v428 = vld [vmem:[%s245] sm:$0xff]
      %430 = vrot.lane.b32.xlu0 %v428, 112
      %v431 = vpop.permute.xlu0 %430
      %433 = vrot.lane.b32.xlu0 %v428, 96
      %v434 = vpop.permute.xlu0 %433
      %436 = vrot.lane.b32.xlu0 %v428, 80
      %v437 = vpop.permute.xlu0 %436
      %v439 = vcombine.low %v428, %v434
      %v440 = vcombine.high %v428, %v434
      %v442 = vunpack.c.l.s4 1983009808
      %v443 = vunpack.c.0.s8 %v442
      %v444 = vlaneseq
      %v445 = vshrl.u32 %v444, 7
      %v446 = vsub.s32 %v443, %v445
      %v447 = vrot.slane %v439, %v446
      %v449 = vunpack.c.l.s4 1983009808
      %v450 = vunpack.c.0.s8 %v449
      %v451 = vlaneseq
      %v452 = vshrl.u32 %v451, 7
      %v453 = vsub.s32 %v450, %v452
      %v454 = vrot.slane %v440, %v453
      %v455 = vcombine.low %v431, %v437
      %v456 = vcombine.high %v431, %v437
      %v458 = vunpack.c.l.s4 1983009808
      %v459 = vunpack.c.0.s8 %v458
      %v460 = vlaneseq
      %v461 = vshrl.u32 %v460, 7
      %v462 = vsub.s32 %v459, %v461
      %v463 = vrot.slane %v455, %v462
      %v465 = vunpack.c.l.s4 1983009808
      %v466 = vunpack.c.0.s8 %v465
      %v467 = vlaneseq
      %v468 = vshrl.u32 %v467, 7
      %v469 = vsub.s32 %v466, %v468
      %v470 = vrot.slane %v456, %v469
      %v471 = vcombine.low %v447, %v463
      %v472 = vcombine.high %v447, %v463
      %v474 = vunpack.c.l.s4 1934713408
      %v475 = vunpack.c.0.s8 %v474
      %v476 = vlaneseq
      %v477 = vshrl.u32 %v476, 7
      %v478 = vsub.s32 %v475, %v477
      %v479 = vrot.slane %v471, %v478
      %v481 = vunpack.c.l.s4 1934713408
      %v482 = vunpack.c.0.s8 %v481
      %v483 = vlaneseq
      %v484 = vshrl.u32 %v483, 7
      %v485 = vsub.s32 %v482, %v484
      %v486 = vrot.slane %v472, %v485
      %v487 = vcombine.low %v454, %v470
      %v488 = vcombine.high %v454, %v470
      %v490 = vunpack.c.l.s4 1934713408
      %v491 = vunpack.c.0.s8 %v490
      %v492 = vlaneseq
      %v493 = vshrl.u32 %v492, 7
      %v494 = vsub.s32 %v491, %v493
      %v495 = vrot.slane %v487, %v494
      %v497 = vunpack.c.l.s4 1934713408
      %v498 = vunpack.c.0.s8 %v497
      %v499 = vlaneseq
      %v500 = vshrl.u32 %v499, 7
      %v501 = vsub.s32 %v498, %v500
      %v502 = vrot.slane %v488, %v501
      %v503 = vcombine.high %v479, 0.0
      %v504 = vcombine.high %v486, 0.0
      %v505 = vcombine.high %v495, 0.0
      %v506 = vcombine.high %v502, 0.0
      %v507 = vpack.c.bf16 %v479, %v479
      %v508 = vpack.c.bf16 %v503, %v503
      %v509 = vpack.c.bf16 %v486, %v486
      %v510 = vpack.c.bf16 %v504, %v504
      %v511 = vpack.c.bf16 %v495, %v495
      %v512 = vpack.c.bf16 %v505, %v505
      %v513 = vpack.c.bf16 %v502, %v502
      %v514 = vpack.c.bf16 %v506, %v506
      %v515 = vcombine.low %v333, %v337
      %v517 = vunpack.c.l.s4 1983009808
      %v518 = vunpack.c.0.s8 %v517
      %v519 = vlaneseq
      %v520 = vshrl.u32 %v519, 7
      %v521 = vsub.s32 %v518, %v520
      %v522 = vrot.slane %v515, %v521
      %v523 = vcombine.low %v335, %v339
      %v525 = vunpack.c.l.s4 1983009808
      %v526 = vunpack.c.0.s8 %v525
      %v527 = vlaneseq
      %v528 = vshrl.u32 %v527, 7
      %v529 = vsub.s32 %v526, %v528
      %v530 = vrot.slane %v523, %v529
      %v531 = vcombine.low %v522, %v530
      %v533 = vunpack.c.l.s4 1934713408
      %v534 = vunpack.c.0.s8 %v533
      %v535 = vlaneseq
      %v536 = vshrl.u32 %v535, 7
      %v537 = vsub.s32 %v534, %v536
      %v538 = vrot.slane %v531, %v537
      %v539 = vcombine.high %v538, 0
      %v540 = vcombine.low %v334, %v338
      %v542 = vunpack.c.l.s4 1983009808
      %v543 = vunpack.c.0.s8 %v542
      %v544 = vlaneseq
      %v545 = vshrl.u32 %v544, 7
      %v546 = vsub.s32 %v543, %v545
      %v547 = vrot.slane %v540, %v546
      %v548 = vcombine.low %v336, %v340
      %v550 = vunpack.c.l.s4 1983009808
      %v551 = vunpack.c.0.s8 %v550
      %v552 = vlaneseq
      %v553 = vshrl.u32 %v552, 7
      %v554 = vsub.s32 %v551, %v553
      %v555 = vrot.slane %v548, %v554
      %v556 = vcombine.low %v547, %v555
      %v558 = vunpack.c.l.s4 1934713408
      %v559 = vunpack.c.0.s8 %v558
      %v560 = vlaneseq
      %v561 = vshrl.u32 %v560, 7
      %v562 = vsub.s32 %v559, %v561
      %v563 = vrot.slane %v556, %v562
      %v564 = vcombine.high %v563, 0
      %v567 = vpack.i.b16 %v563, %v538
      %v568 = vshrl.u32 %v538, 16
      %v569 = vshrl.u32 %v563, 16
      %v570 = vpack.i.b16 %v569, %v568
      %v573 = vpack.i.b16 %v564, %v539
      %v574 = vshrl.u32 %v539, 16
      %v575 = vshrl.u32 %v564, 16
      %v576 = vpack.i.b16 %v575, %v574
      %577 = vxpose.xlu0.c.b16.start [1/8] %v420, 128
      %578 = vxpose.xlu0.c.b16.cont [2/8] 0, 128
      %579 = vxpose.xlu0.c.b16.cont [3/8] 0, 128
      %580 = vxpose.xlu0.c.b16.cont [4/8] 0, 128
      %581 = vxpose.xlu0.c.b16.cont [5/8] 0, 128
      %582 = vxpose.xlu0.c.b16.cont [6/8] 0, 128
      %583 = vxpose.xlu0.c.b16.cont [7/8] 0, 128
      %584 = vxpose.xlu0.c.b16.end [8/8] 0, 128
      %v585 = vpop.trf.xlu0
      %v586 = vpop.trf.xlu0
      %v587 = vpop.trf.xlu0
      %v588 = vpop.trf.xlu0
      %v589 = vpop.trf.xlu0
      %v590 = vpop.trf.xlu0
      %v591 = vpop.trf.xlu0
      %v592 = vpop.trf.xlu0
      %593 = vxpose.xlu0.c.b16.start [1/8] %v421, 128
      %594 = vxpose.xlu0.c.b16.cont [2/8] 0, 128
      %595 = vxpose.xlu0.c.b16.cont [3/8] 0, 128
      %596 = vxpose.xlu0.c.b16.cont [4/8] 0, 128
      %597 = vxpose.xlu0.c.b16.cont [5/8] 0, 128
      %598 = vxpose.xlu0.c.b16.cont [6/8] 0, 128
      %599 = vxpose.xlu0.c.b16.cont [7/8] 0, 128
      %600 = vxpose.xlu0.c.b16.end [8/8] 0, 128
      %v601 = vpop.trf.xlu0
      %v602 = vpop.trf.xlu0
      %v603 = vpop.trf.xlu0
      %v604 = vpop.trf.xlu0
      %v605 = vpop.trf.xlu0
      %v606 = vpop.trf.xlu0
      %v607 = vpop.trf.xlu0
      %v608 = vpop.trf.xlu0
      %609 = vxpose.xlu0.c.b16.start [1/8] %v422, 128
      %610 = vxpose.xlu0.c.b16.cont [2/8] 0, 128
      %611 = vxpose.xlu0.c.b16.cont [3/8] 0, 128
      %612 = vxpose.xlu0.c.b16.cont [4/8] 0, 128
      %613 = vxpose.xlu0.c.b16.cont [5/8] 0, 128
      %614 = vxpose.xlu0.c.b16.cont [6/8] 0, 128
      %615 = vxpose.xlu0.c.b16.cont [7/8] 0, 128
      %616 = vxpose.xlu0.c.b16.end [8/8] 0, 128
      %v617 = vpop.trf.xlu0
      %v618 = vpop.trf.xlu0
      %v619 = vpop.trf.xlu0
      %v620 = vpop.trf.xlu0
      %v621 = vpop.trf.xlu0
      %v622 = vpop.trf.xlu0
      %v623 = vpop.trf.xlu0
      %v624 = vpop.trf.xlu0
      %625 = vxpose.xlu0.c.b16.start [1/8] %v423, 128
      %626 = vxpose.xlu0.c.b16.cont [2/8] 0, 128
      %627 = vxpose.xlu0.c.b16.cont [3/8] 0, 128
      %628 = vxpose.xlu0.c.b16.cont [4/8] 0, 128
      %629 = vxpose.xlu0.c.b16.cont [5/8] 0, 128
      %630 = vxpose.xlu0.c.b16.cont [6/8] 0, 128
      %631 = vxpose.xlu0.c.b16.cont [7/8] 0, 128
      %632 = vxpose.xlu0.c.b16.end [8/8] 0, 128
      %v633 = vpop.trf.xlu0
      %v634 = vpop.trf.xlu0
      %v635 = vpop.trf.xlu0
      %v636 = vpop.trf.xlu0
      %v637 = vpop.trf.xlu0
      %v638 = vpop.trf.xlu0
      %v639 = vpop.trf.xlu0
      %v640 = vpop.trf.xlu0
      %641 = vxpose.xlu0.c.b16.start [1/8] %v424, 128
      %642 = vxpose.xlu0.c.b16.cont [2/8] 0, 128
      %643 = vxpose.xlu0.c.b16.cont [3/8] 0, 128
      %644 = vxpose.xlu0.c.b16.cont [4/8] 0, 128
      %645 = vxpose.xlu0.c.b16.cont [5/8] 0, 128
      %646 = vxpose.xlu0.c.b16.cont [6/8] 0, 128
      %647 = vxpose.xlu0.c.b16.cont [7/8] 0, 128
      %648 = vxpose.xlu0.c.b16.end [8/8] 0, 128
      %v649 = vpop.trf.xlu0
      %v650 = vpop.trf.xlu0
      %v651 = vpop.trf.xlu0
      %v652 = vpop.trf.xlu0
      %v653 = vpop.trf.xlu0
      %v654 = vpop.trf.xlu0
      %v655 = vpop.trf.xlu0
      %v656 = vpop.trf.xlu0
      %657 = vxpose.xlu0.c.b16.start [1/8] %v425, 128
      %658 = vxpose.xlu0.c.b16.cont [2/8] 0, 128
      %659 = vxpose.xlu0.c.b16.cont [3/8] 0, 128
      %660 = vxpose.xlu0.c.b16.cont [4/8] 0, 128
      %661 = vxpose.xlu0.c.b16.cont [5/8] 0, 128
      %662 = vxpose.xlu0.c.b16.cont [6/8] 0, 128
      %663 = vxpose.xlu0.c.b16.cont [7/8] 0, 128
      %664 = vxpose.xlu0.c.b16.end [8/8] 0, 128
      %v665 = vpop.trf.xlu0
      %v666 = vpop.trf.xlu0
      %v667 = vpop.trf.xlu0
      %v668 = vpop.trf.xlu0
      %v669 = vpop.trf.xlu0
      %v670 = vpop.trf.xlu0
      %v671 = vpop.trf.xlu0
      %v672 = vpop.trf.xlu0
      %673 = vxpose.xlu0.c.b16.start [1/8] %v426, 128
      %674 = vxpose.xlu0.c.b16.cont [2/8] 0, 128
      %675 = vxpose.xlu0.c.b16.cont [3/8] 0, 128
      %676 = vxpose.xlu0.c.b16.cont [4/8] 0, 128
      %677 = vxpose.xlu0.c.b16.cont [5/8] 0, 128
      %678 = vxpose.xlu0.c.b16.cont [6/8] 0, 128
      %679 = vxpose.xlu0.c.b16.cont [7/8] 0, 128
      %680 = vxpose.xlu0.c.b16.end [8/8] 0, 128
      %v681 = vpop.trf.xlu0
      %v682 = vpop.trf.xlu0
      %v683 = vpop.trf.xlu0
      %v684 = vpop.trf.xlu0
      %v685 = vpop.trf.xlu0
      %v686 = vpop.trf.xlu0
      %v687 = vpop.trf.xlu0
      %v688 = vpop.trf.xlu0
      %689 = vxpose.xlu0.c.b16.start [1/8] %v427, 128
      %690 = vxpose.xlu0.c.b16.cont [2/8] 0, 128
      %691 = vxpose.xlu0.c.b16.cont [3/8] 0, 128
      %692 = vxpose.xlu0.c.b16.cont [4/8] 0, 128
      %693 = vxpose.xlu0.c.b16.cont [5/8] 0, 128
      %694 = vxpose.xlu0.c.b16.cont [6/8] 0, 128
      %695 = vxpose.xlu0.c.b16.cont [7/8] 0, 128
      %696 = vxpose.xlu0.c.b16.end [8/8] 0, 128
      %v697 = vpop.trf.xlu0
      %v698 = vpop.trf.xlu0
      %v699 = vpop.trf.xlu0
      %v700 = vpop.trf.xlu0
      %v701 = vpop.trf.xlu0
      %v702 = vpop.trf.xlu0
      %v703 = vpop.trf.xlu0
      %v704 = vpop.trf.xlu0
      %v707 = vpack.i.b16 %v601, %v585
      %v709 = vshrl.u32 %v585, 16
      %v710 = vshrl.u32 %v601, 16
      %v711 = vpack.i.b16 %v710, %v709
      %v715 = vpack.i.b16 %v633, %v617
      %v717 = vshrl.u32 %v617, 16
      %v718 = vshrl.u32 %v633, 16
      %v719 = vpack.i.b16 %v718, %v717
      %v723 = vpack.i.b16 %v665, %v649
      %v725 = vshrl.u32 %v649, 16
      %v726 = vshrl.u32 %v665, 16
      %v727 = vpack.i.b16 %v726, %v725
      %v731 = vpack.i.b16 %v697, %v681
      %v733 = vshrl.u32 %v681, 16
      %v734 = vshrl.u32 %v697, 16
      %v735 = vpack.i.b16 %v734, %v733
      %v737 = vcombine.low %v707, %v723
      %v738 = vcombine.high %v707, %v723
      %v740 = vunpack.c.l.s4 1983009808
      %v741 = vunpack.c.0.s8 %v740
      %v742 = vlaneseq
      %v743 = vshrl.u32 %v742, 7
      %v744 = vsub.s32 %v741, %v743
      %v745 = vrot.slane %v737, %v744
      %v747 = vunpack.c.l.s4 1983009808
      %v748 = vunpack.c.0.s8 %v747
      %v749 = vlaneseq
      %v750 = vshrl.u32 %v749, 7
      %v751 = vsub.s32 %v748, %v750
      %v752 = vrot.slane %v738, %v751
      %v753 = vcombine.low %v715, %v731
      %v754 = vcombine.high %v715, %v731
      %v756 = vunpack.c.l.s4 1983009808
      %v757 = vunpack.c.0.s8 %v756
      %v758 = vlaneseq
      %v759 = vshrl.u32 %v758, 7
      %v760 = vsub.s32 %v757, %v759
      %v761 = vrot.slane %v753, %v760
      %v763 = vunpack.c.l.s4 1983009808
      %v764 = vunpack.c.0.s8 %v763
      %v765 = vlaneseq
      %v766 = vshrl.u32 %v765, 7
      %v767 = vsub.s32 %v764, %v766
      %v768 = vrot.slane %v754, %v767
      %v769 = vcombine.low %v745, %v761
      %v770 = vcombine.high %v745, %v761
      %v772 = vunpack.c.l.s4 1934713408
      %v773 = vunpack.c.0.s8 %v772
      %v774 = vlaneseq
      %v775 = vshrl.u32 %v774, 7
      %v776 = vsub.s32 %v773, %v775
      %v777 = vrot.slane %v769, %v776
      %v779 = vunpack.c.l.s4 1934713408
      %v780 = vunpack.c.0.s8 %v779
      %v781 = vlaneseq
      %v782 = vshrl.u32 %v781, 7
      %v783 = vsub.s32 %v780, %v782
      %v784 = vrot.slane %v770, %v783
      %v785 = vcombine.low %v752, %v768
      %v786 = vcombine.high %v752, %v768
      %v788 = vunpack.c.l.s4 1934713408
      %v789 = vunpack.c.0.s8 %v788
      %v790 = vlaneseq
      %v791 = vshrl.u32 %v790, 7
      %v792 = vsub.s32 %v789, %v791
      %v793 = vrot.slane %v785, %v792
      %v795 = vunpack.c.l.s4 1934713408
      %v796 = vunpack.c.0.s8 %v795
      %v797 = vlaneseq
      %v798 = vshrl.u32 %v797, 7
      %v799 = vsub.s32 %v796, %v798
      %v800 = vrot.slane %v786, %v799
      %v801 = vcombine.high %v777, 0
      %v802 = vcombine.high %v784, 0
      %v803 = vcombine.high %v793, 0
      %v804 = vcombine.high %v800, 0
      %v805 = vcombine.low %v711, %v727
      %v806 = vcombine.high %v711, %v727
      %v808 = vunpack.c.l.s4 1983009808
      %v809 = vunpack.c.0.s8 %v808
      %v810 = vlaneseq
      %v811 = vshrl.u32 %v810, 7
      %v812 = vsub.s32 %v809, %v811
      %v813 = vrot.slane %v805, %v812
      %v815 = vunpack.c.l.s4 1983009808
      %v816 = vunpack.c.0.s8 %v815
      %v817 = vlaneseq
      %v818 = vshrl.u32 %v817, 7
      %v819 = vsub.s32 %v816, %v818
      %v820 = vrot.slane %v806, %v819
      %v821 = vcombine.low %v719, %v735
      %v822 = vcombine.high %v719, %v735
      %v824 = vunpack.c.l.s4 1983009808
      %v825 = vunpack.c.0.s8 %v824
      %v826 = vlaneseq
      %v827 = vshrl.u32 %v826, 7
      %v828 = vsub.s32 %v825, %v827
      %v829 = vrot.slane %v821, %v828
      %v831 = vunpack.c.l.s4 1983009808
      %v832 = vunpack.c.0.s8 %v831
      %v833 = vlaneseq
      %v834 = vshrl.u32 %v833, 7
      %v835 = vsub.s32 %v832, %v834
      %v836 = vrot.slane %v822, %v835
      %v837 = vcombine.low %v813, %v829
      %v838 = vcombine.high %v813, %v829
      %v840 = vunpack.c.l.s4 1934713408
      %v841 = vunpack.c.0.s8 %v840
      %v842 = vlaneseq
      %v843 = vshrl.u32 %v842, 7
      %v844 = vsub.s32 %v841, %v843
      %v845 = vrot.slane %v837, %v844
      %v847 = vunpack.c.l.s4 1934713408
      %v848 = vunpack.c.0.s8 %v847
      %v849 = vlaneseq
      %v850 = vshrl.u32 %v849, 7
      %v851 = vsub.s32 %v848, %v850
      %v852 = vrot.slane %v838, %v851
      %v853 = vcombine.low %v820, %v836
      %v854 = vcombine.high %v820, %v836
      %v856 = vunpack.c.l.s4 1934713408
      %v857 = vunpack.c.0.s8 %v856
      %v858 = vlaneseq
      %v859 = vshrl.u32 %v858, 7
      %v860 = vsub.s32 %v857, %v859
      %v861 = vrot.slane %v853, %v860
      %v863 = vunpack.c.l.s4 1934713408
      %v864 = vunpack.c.0.s8 %v863
      %v865 = vlaneseq
      %v866 = vshrl.u32 %v865, 7
      %v867 = vsub.s32 %v864, %v866
      %v868 = vrot.slane %v854, %v867
      %v869 = vcombine.high %v845, 0
      %v870 = vcombine.high %v852, 0
      %v871 = vcombine.high %v861, 0
      %v872 = vcombine.high %v868, 0
      %873 = vxpose.xlu0.c.b16.start [1/8] %v777, 128
      %874 = vxpose.xlu0.c.b16.cont [2/8] 0, 128
      %875 = vxpose.xlu0.c.b16.cont [3/8] 0, 128
      %876 = vxpose.xlu0.c.b16.cont [4/8] 0, 128
      %877 = vxpose.xlu0.c.b16.cont [5/8] 0, 128
      %878 = vxpose.xlu0.c.b16.cont [6/8] 0, 128
      %879 = vxpose.xlu0.c.b16.cont [7/8] 0, 128
      %880 = vxpose.xlu0.c.b16.end [8/8] 0, 128
      %v881 = vpop.trf.xlu0
      %v882 = vpop.trf.xlu0
      %v883 = vpop.trf.xlu0
      %v884 = vpop.trf.xlu0
      %v885 = vpop.trf.xlu0
      %v886 = vpop.trf.xlu0
      %v887 = vpop.trf.xlu0
      %v888 = vpop.trf.xlu0
      %889 = vxpose.xlu0.c.b16.start [1/8] %v845, 128
      %890 = vxpose.xlu0.c.b16.cont [2/8] 0, 128
      %891 = vxpose.xlu0.c.b16.cont [3/8] 0, 128
      %892 = vxpose.xlu0.c.b16.cont [4/8] 0, 128
      %893 = vxpose.xlu0.c.b16.cont [5/8] 0, 128
      %894 = vxpose.xlu0.c.b16.cont [6/8] 0, 128
      %895 = vxpose.xlu0.c.b16.cont [7/8] 0, 128
      %896 = vxpose.xlu0.c.b16.end [8/8] 0, 128
      %v897 = vpop.trf.xlu0
      %v898 = vpop.trf.xlu0
      %v899 = vpop.trf.xlu0
      %v900 = vpop.trf.xlu0
      %v901 = vpop.trf.xlu0
      %v902 = vpop.trf.xlu0
      %v903 = vpop.trf.xlu0
      %v904 = vpop.trf.xlu0
      %905 = vxpose.xlu0.c.b16.start [1/8] %v801, 128
      %906 = vxpose.xlu0.c.b16.cont [2/8] 0, 128
      %907 = vxpose.xlu0.c.b16.cont [3/8] 0, 128
      %908 = vxpose.xlu0.c.b16.cont [4/8] 0, 128
      %909 = vxpose.xlu0.c.b16.cont [5/8] 0, 128
      %910 = vxpose.xlu0.c.b16.cont [6/8] 0, 128
      %911 = vxpose.xlu0.c.b16.cont [7/8] 0, 128
      %912 = vxpose.xlu0.c.b16.end [8/8] 0, 128
      %v913 = vpop.trf.xlu0
      %v914 = vpop.trf.xlu0
      %v915 = vpop.trf.xlu0
      %v916 = vpop.trf.xlu0
      %v917 = vpop.trf.xlu0
      %v918 = vpop.trf.xlu0
      %v919 = vpop.trf.xlu0
      %v920 = vpop.trf.xlu0
      %921 = vxpose.xlu0.c.b16.start [1/8] %v869, 128
      %922 = vxpose.xlu0.c.b16.cont [2/8] 0, 128
      %923 = vxpose.xlu0.c.b16.cont [3/8] 0, 128
      %924 = vxpose.xlu0.c.b16.cont [4/8] 0, 128
      %925 = vxpose.xlu0.c.b16.cont [5/8] 0, 128
      %926 = vxpose.xlu0.c.b16.cont [6/8] 0, 128
      %927 = vxpose.xlu0.c.b16.cont [7/8] 0, 128
      %928 = vxpose.xlu0.c.b16.end [8/8] 0, 128
      %v929 = vpop.trf.xlu0
      %v930 = vpop.trf.xlu0
      %v931 = vpop.trf.xlu0
      %v932 = vpop.trf.xlu0
      %v933 = vpop.trf.xlu0
      %v934 = vpop.trf.xlu0
      %v935 = vpop.trf.xlu0
      %v936 = vpop.trf.xlu0
      %937 = vxpose.xlu0.c.b16.start [1/8] %v784, 128
      %938 = vxpose.xlu0.c.b16.cont [2/8] 0, 128
      %939 = vxpose.xlu0.c.b16.cont [3/8] 0, 128
      %940 = vxpose.xlu0.c.b16.cont [4/8] 0, 128
      %941 = vxpose.xlu0.c.b16.cont [5/8] 0, 128
      %942 = vxpose.xlu0.c.b16.cont [6/8] 0, 128
      %943 = vxpose.xlu0.c.b16.cont [7/8] 0, 128
      %944 = vxpose.xlu0.c.b16.end [8/8] 0, 128
      %v945 = vpop.trf.xlu0
      %v946 = vpop.trf.xlu0
      %v947 = vpop.trf.xlu0
      %v948 = vpop.trf.xlu0
      %v949 = vpop.trf.xlu0
      %v950 = vpop.trf.xlu0
      %v951 = vpop.trf.xlu0
      %v952 = vpop.trf.xlu0
      %953 = vxpose.xlu0.c.b16.start [1/8] %v852, 128
      %954 = vxpose.xlu0.c.b16.cont [2/8] 0, 128
      %955 = vxpose.xlu0.c.b16.cont [3/8] 0, 128
      %956 = vxpose.xlu0.c.b16.cont [4/8] 0, 128
      %957 = vxpose.xlu0.c.b16.cont [5/8] 0, 128
      %958 = vxpose.xlu0.c.b16.cont [6/8] 0, 128
      %959 = vxpose.xlu0.c.b16.cont [7/8] 0, 128
      %960 = vxpose.xlu0.c.b16.end [8/8] 0, 128
      %v961 = vpop.trf.xlu0
      %v962 = vpop.trf.xlu0
      %v963 = vpop.trf.xlu0
      %v964 = vpop.trf.xlu0
      %v965 = vpop.trf.xlu0
      %v966 = vpop.trf.xlu0
      %v967 = vpop.trf.xlu0
      %v968 = vpop.trf.xlu0
      %969 = vxpose.xlu0.c.b16.start [1/8] %v802, 128
      %970 = vxpose.xlu0.c.b16.cont [2/8] 0, 128
      %971 = vxpose.xlu0.c.b16.cont [3/8] 0, 128
      %972 = vxpose.xlu0.c.b16.cont [4/8] 0, 128
      %973 = vxpose.xlu0.c.b16.cont [5/8] 0, 128
      %974 = vxpose.xlu0.c.b16.cont [6/8] 0, 128
      %975 = vxpose.xlu0.c.b16.cont [7/8] 0, 128
      %976 = vxpose.xlu0.c.b16.end [8/8] 0, 128
      %v977 = vpop.trf.xlu0
      %v978 = vpop.trf.xlu0
      %v979 = vpop.trf.xlu0
      %v980 = vpop.trf.xlu0
      %v981 = vpop.trf.xlu0
      %v982 = vpop.trf.xlu0
      %v983 = vpop.trf.xlu0
      %v984 = vpop.trf.xlu0
      %985 = vxpose.xlu0.c.b16.start [1/8] %v870, 128
      %986 = vxpose.xlu0.c.b16.cont [2/8] 0, 128
      %987 = vxpose.xlu0.c.b16.cont [3/8] 0, 128
      %988 = vxpose.xlu0.c.b16.cont [4/8] 0, 128
      %989 = vxpose.xlu0.c.b16.cont [5/8] 0, 128
      %990 = vxpose.xlu0.c.b16.cont [6/8] 0, 128
      %991 = vxpose.xlu0.c.b16.cont [7/8] 0, 128
      %992 = vxpose.xlu0.c.b16.end [8/8] 0, 128
      %v993 = vpop.trf.xlu0
      %v994 = vpop.trf.xlu0
      %v995 = vpop.trf.xlu0
      %v996 = vpop.trf.xlu0
      %v997 = vpop.trf.xlu0
      %v998 = vpop.trf.xlu0
      %v999 = vpop.trf.xlu0
      %v1000 = vpop.trf.xlu0
      %1001 = vxpose.xlu0.c.b16.start [1/8] %v793, 128
      %1002 = vxpose.xlu0.c.b16.cont [2/8] 0, 128
      %1003 = vxpose.xlu0.c.b16.cont [3/8] 0, 128
      %1004 = vxpose.xlu0.c.b16.cont [4/8] 0, 128
      %1005 = vxpose.xlu0.c.b16.cont [5/8] 0, 128
      %1006 = vxpose.xlu0.c.b16.cont [6/8] 0, 128
      %1007 = vxpose.xlu0.c.b16.cont [7/8] 0, 128
      %1008 = vxpose.xlu0.c.b16.end [8/8] 0, 128
      %v1009 = vpop.trf.xlu0
      %v1010 = vpop.trf.xlu0
      %v1011 = vpop.trf.xlu0
      %v1012 = vpop.trf.xlu0
      %v1013 = vpop.trf.xlu0
      %v1014 = vpop.trf.xlu0
      %v1015 = vpop.trf.xlu0
      %v1016 = vpop.trf.xlu0
      %1017 = vxpose.xlu0.c.b16.start [1/8] %v861, 128
      %1018 = vxpose.xlu0.c.b16.cont [2/8] 0, 128
      %1019 = vxpose.xlu0.c.b16.cont [3/8] 0, 128
      %1020 = vxpose.xlu0.c.b16.cont [4/8] 0, 128
      %1021 = vxpose.xlu0.c.b16.cont [5/8] 0, 128
      %1022 = vxpose.xlu0.c.b16.cont [6/8] 0, 128
      %1023 = vxpose.xlu0.c.b16.cont [7/8] 0, 128
      %1024 = vxpose.xlu0.c.b16.end [8/8] 0, 128
      %v1025 = vpop.trf.xlu0
      %v1026 = vpop.trf.xlu0
      %v1027 = vpop.trf.xlu0
      %v1028 = vpop.trf.xlu0
      %v1029 = vpop.trf.xlu0
      %v1030 = vpop.trf.xlu0
      %v1031 = vpop.trf.xlu0
      %v1032 = vpop.trf.xlu0
      %1033 = vxpose.xlu0.c.b16.start [1/8] %v803, 128
      %1034 = vxpose.xlu0.c.b16.cont [2/8] 0, 128
      %1035 = vxpose.xlu0.c.b16.cont [3/8] 0, 128
      %1036 = vxpose.xlu0.c.b16.cont [4/8] 0, 128
      %1037 = vxpose.xlu0.c.b16.cont [5/8] 0, 128
      %1038 = vxpose.xlu0.c.b16.cont [6/8] 0, 128
      %1039 = vxpose.xlu0.c.b16.cont [7/8] 0, 128
      %1040 = vxpose.xlu0.c.b16.end [8/8] 0, 128
      %v1041 = vpop.trf.xlu0
      %v1042 = vpop.trf.xlu0
      %v1043 = vpop.trf.xlu0
      %v1044 = vpop.trf.xlu0
      %v1045 = vpop.trf.xlu0
      %v1046 = vpop.trf.xlu0
      %v1047 = vpop.trf.xlu0
      %v1048 = vpop.trf.xlu0
      %1049 = vxpose.xlu0.c.b16.start [1/8] %v871, 128
      %1050 = vxpose.xlu0.c.b16.cont [2/8] 0, 128
      %1051 = vxpose.xlu0.c.b16.cont [3/8] 0, 128
      %1052 = vxpose.xlu0.c.b16.cont [4/8] 0, 128
      %1053 = vxpose.xlu0.c.b16.cont [5/8] 0, 128
      %1054 = vxpose.xlu0.c.b16.cont [6/8] 0, 128
      %1055 = vxpose.xlu0.c.b16.cont [7/8] 0, 128
      %1056 = vxpose.xlu0.c.b16.end [8/8] 0, 128
      %v1057 = vpop.trf.xlu0
      %v1058 = vpop.trf.xlu0
      %v1059 = vpop.trf.xlu0
      %v1060 = vpop.trf.xlu0
      %v1061 = vpop.trf.xlu0
      %v1062 = vpop.trf.xlu0
      %v1063 = vpop.trf.xlu0
      %v1064 = vpop.trf.xlu0
      %1065 = vxpose.xlu0.c.b16.start [1/8] %v800, 128
      %1066 = vxpose.xlu0.c.b16.cont [2/8] 0, 128
      %1067 = vxpose.xlu0.c.b16.cont [3/8] 0, 128
      %1068 = vxpose.xlu0.c.b16.cont [4/8] 0, 128
      %1069 = vxpose.xlu0.c.b16.cont [5/8] 0, 128
      %1070 = vxpose.xlu0.c.b16.cont [6/8] 0, 128
      %1071 = vxpose.xlu0.c.b16.cont [7/8] 0, 128
      %1072 = vxpose.xlu0.c.b16.end [8/8] 0, 128
      %v1073 = vpop.trf.xlu0
      %v1074 = vpop.trf.xlu0
      %v1075 = vpop.trf.xlu0
      %v1076 = vpop.trf.xlu0
      %v1077 = vpop.trf.xlu0
      %v1078 = vpop.trf.xlu0
      %v1079 = vpop.trf.xlu0
      %v1080 = vpop.trf.xlu0
      %1081 = vxpose.xlu0.c.b16.start [1/8] %v868, 128
      %1082 = vxpose.xlu0.c.b16.cont [2/8] 0, 128
      %1083 = vxpose.xlu0.c.b16.cont [3/8] 0, 128
      %1084 = vxpose.xlu0.c.b16.cont [4/8] 0, 128
      %1085 = vxpose.xlu0.c.b16.cont [5/8] 0, 128
      %1086 = vxpose.xlu0.c.b16.cont [6/8] 0, 128
      %1087 = vxpose.xlu0.c.b16.cont [7/8] 0, 128
      %1088 = vxpose.xlu0.c.b16.end [8/8] 0, 128
      %v1089 = vpop.trf.xlu0
      %v1090 = vpop.trf.xlu0
      %v1091 = vpop.trf.xlu0
      %v1092 = vpop.trf.xlu0
      %v1093 = vpop.trf.xlu0
      %v1094 = vpop.trf.xlu0
      %v1095 = vpop.trf.xlu0
      %v1096 = vpop.trf.xlu0
      %1097 = vxpose.xlu0.c.b16.start [1/8] %v804, 128
      %1098 = vxpose.xlu0.c.b16.cont [2/8] 0, 128
      %1099 = vxpose.xlu0.c.b16.cont [3/8] 0, 128
      %1100 = vxpose.xlu0.c.b16.cont [4/8] 0, 128
      %1101 = vxpose.xlu0.c.b16.cont [5/8] 0, 128
      %1102 = vxpose.xlu0.c.b16.cont [6/8] 0, 128
      %1103 = vxpose.xlu0.c.b16.cont [7/8] 0, 128
      %1104 = vxpose.xlu0.c.b16.end [8/8] 0, 128
      %v1105 = vpop.trf.xlu0
      %v1106 = vpop.trf.xlu0
      %v1107 = vpop.trf.xlu0
      %v1108 = vpop.trf.xlu0
      %v1109 = vpop.trf.xlu0
      %v1110 = vpop.trf.xlu0
      %v1111 = vpop.trf.xlu0
      %v1112 = vpop.trf.xlu0
      %1113 = vxpose.xlu0.c.b16.start [1/8] %v872, 128
      %1114 = vxpose.xlu0.c.b16.cont [2/8] 0, 128
      %1115 = vxpose.xlu0.c.b16.cont [3/8] 0, 128
      %1116 = vxpose.xlu0.c.b16.cont [4/8] 0, 128
      %1117 = vxpose.xlu0.c.b16.cont [5/8] 0, 128
      %1118 = vxpose.xlu0.c.b16.cont [6/8] 0, 128
      %1119 = vxpose.xlu0.c.b16.cont [7/8] 0, 128
      %1120 = vxpose.xlu0.c.b16.end [8/8] 0, 128
      %v1121 = vpop.trf.xlu0
      %v1122 = vpop.trf.xlu0
      %v1123 = vpop.trf.xlu0
      %v1124 = vpop.trf.xlu0
      %v1125 = vpop.trf.xlu0
      %v1126 = vpop.trf.xlu0
      %v1127 = vpop.trf.xlu0
      %v1128 = vpop.trf.xlu0
      %v1129 = vcombine.low %v881, %v945
      %v1131 = vunpack.c.l.s4 1983009808
      %v1132 = vunpack.c.0.s8 %v1131
      %v1133 = vlaneseq
      %v1134 = vshrl.u32 %v1133, 7
      %v1135 = vsub.s32 %v1132, %v1134
      %v1136 = vrot.slane %v1129, %v1135
      %v1137 = vcombine.low %v913, %v977
      %v1139 = vunpack.c.l.s4 1983009808
      %v1140 = vunpack.c.0.s8 %v1139
      %v1141 = vlaneseq
      %v1142 = vshrl.u32 %v1141, 7
      %v1143 = vsub.s32 %v1140, %v1142
      %v1144 = vrot.slane %v1137, %v1143
      %v1145 = vcombine.low %v1009, %v1073
      %v1147 = vunpack.c.l.s4 1983009808
      %v1148 = vunpack.c.0.s8 %v1147
      %v1149 = vlaneseq
      %v1150 = vshrl.u32 %v1149, 7
      %v1151 = vsub.s32 %v1148, %v1150
      %v1152 = vrot.slane %v1145, %v1151
      %v1153 = vcombine.low %v1041, %v1105
      %v1155 = vunpack.c.l.s4 1983009808
      %v1156 = vunpack.c.0.s8 %v1155
      %v1157 = vlaneseq
      %v1158 = vshrl.u32 %v1157, 7
      %v1159 = vsub.s32 %v1156, %v1158
      %v1160 = vrot.slane %v1153, %v1159
      %v1161 = vcombine.low %v1136, %v1144
      %v1163 = vunpack.c.l.s4 1934713408
      %v1164 = vunpack.c.0.s8 %v1163
      %v1165 = vlaneseq
      %v1166 = vshrl.u32 %v1165, 7
      %v1167 = vsub.s32 %v1164, %v1166
      %v1168 = vrot.slane %v1161, %v1167
      %v1169 = vcombine.low %v1152, %v1160
      %v1171 = vunpack.c.l.s4 1934713408
      %v1172 = vunpack.c.0.s8 %v1171
      %v1173 = vlaneseq
      %v1174 = vshrl.u32 %v1173, 7
      %v1175 = vsub.s32 %v1172, %v1174
      %v1176 = vrot.slane %v1169, %v1175
      %v1177 = vcombine.low %v1168, %v1176
      %v1178 = vcombine.high %v1168, %v1176
      %v1179 = vcombine.low %v897, %v961
      %v1181 = vunpack.c.l.s4 1983009808
      %v1182 = vunpack.c.0.s8 %v1181
      %v1183 = vlaneseq
      %v1184 = vshrl.u32 %v1183, 7
      %v1185 = vsub.s32 %v1182, %v1184
      %v1186 = vrot.slane %v1179, %v1185
      %v1187 = vcombine.low %v929, %v993
      %v1189 = vunpack.c.l.s4 1983009808
      %v1190 = vunpack.c.0.s8 %v1189
      %v1191 = vlaneseq
      %v1192 = vshrl.u32 %v1191, 7
      %v1193 = vsub.s32 %v1190, %v1192
      %v1194 = vrot.slane %v1187, %v1193
      %v1195 = vcombine.low %v1025, %v1089
      %v1197 = vunpack.c.l.s4 1983009808
      %v1198 = vunpack.c.0.s8 %v1197
      %v1199 = vlaneseq
      %v1200 = vshrl.u32 %v1199, 7
      %v1201 = vsub.s32 %v1198, %v1200
      %v1202 = vrot.slane %v1195, %v1201
      %v1203 = vcombine.low %v1057, %v1121
      %v1205 = vunpack.c.l.s4 1983009808
      %v1206 = vunpack.c.0.s8 %v1205
      %v1207 = vlaneseq
      %v1208 = vshrl.u32 %v1207, 7
      %v1209 = vsub.s32 %v1206, %v1208
      %v1210 = vrot.slane %v1203, %v1209
      %v1211 = vcombine.low %v1186, %v1194
      %v1213 = vunpack.c.l.s4 1934713408
      %v1214 = vunpack.c.0.s8 %v1213
      %v1215 = vlaneseq
      %v1216 = vshrl.u32 %v1215, 7
      %v1217 = vsub.s32 %v1214, %v1216
      %v1218 = vrot.slane %v1211, %v1217
      %v1219 = vcombine.low %v1202, %v1210
      %v1221 = vunpack.c.l.s4 1934713408
      %v1222 = vunpack.c.0.s8 %v1221
      %v1223 = vlaneseq
      %v1224 = vshrl.u32 %v1223, 7
      %v1225 = vsub.s32 %v1222, %v1224
      %v1226 = vrot.slane %v1219, %v1225
      %v1227 = vcombine.low %v1218, %v1226
      %v1228 = vcombine.high %v1218, %v1226
      %v1231 = vpack.i.b16 %v1227, %v1177
      %v1233 = vshrl.u32 %v1177, 16
      %v1234 = vshrl.u32 %v1227, 16
      %v1235 = vpack.i.b16 %v1234, %v1233
      %v1239 = vpack.i.b16 %v1228, %v1178
      %v1241 = vshrl.u32 %v1178, 16
      %v1242 = vshrl.u32 %v1228, 16
      %v1243 = vpack.i.b16 %v1242, %v1241
      %vm1245 = vcmask 130048
      %v1247 = vsel %vm1245, %v567, 0
      %1249 = vmatprep.subr.bf16.mxu0 0
      %1250 = vmatpush1.bf16.msra.mxu0 %v1231
      %1251 = vmatprep.subr.bf16.mxu0 0
      %1252 = vmatpush1.bf16.msra.mxu0 0
      %1253 = vmatprep.subr.bf16.mxu0 0
      %1254 = vmatpush1.bf16.msra.mxu0 0
      %1255 = vmatprep.subr.bf16.mxu0 0
      %1256 = vmatpush1.bf16.msra.mxu0 0
      %1257 = vmatprep.subr.bf16.mxu0 0
      %1258 = vmatpush1.bf16.msra.mxu0 0
      %1259 = vmatprep.subr.bf16.mxu0 0
      %1260 = vmatpush1.bf16.msra.mxu0 0
      %1261 = vmatprep.subr.bf16.mxu0 0
      %1262 = vmatpush1.bf16.msra.mxu0 0
      %1263 = vmatprep.subr.bf16.mxu0 0
      %1264 = vmatpush1.bf16.msra.mxu0 0
      %1265 = vmatprep.subr.bf16.mxu0 0
      %1266 = vmatpush1.bf16.msra.mxu0 0
      %1267 = vmatprep.subr.bf16.mxu0 0
      %1268 = vmatpush1.bf16.msra.mxu0 0
      %1269 = vmatprep.subr.bf16.mxu0 0
      %1270 = vmatpush1.bf16.msra.mxu0 0
      %1271 = vmatprep.subr.bf16.mxu0 0
      %1272 = vmatpush1.bf16.msra.mxu0 0
      %1273 = vmatprep.subr.bf16.mxu0 0
      %1274 = vmatpush1.bf16.msra.mxu0 0
      %1275 = vmatprep.subr.bf16.mxu0 0
      %1276 = vmatpush1.bf16.msra.mxu0 0
      %1277 = vmatprep.subr.bf16.mxu0 0
      %1278 = vmatpush1.bf16.msra.mxu0 0
      %1279 = vmatprep.subr.bf16.mxu0 0
      %1280 = vmatpush1.bf16.msra.mxu0 0
      %1281 = vmatprep.mubr.bf16.mxu0 0
      %1282 = vmatmul.mubr.bf16.gmra.mrb[0].mxu0 %v1247
      %v1283 = vpop.f32.mrb[0].mxu0
      %v1284 = vadd.f32 0.0, %v1283
      %v1285 = vpop.f32.mrb[0].mxu0
      %v1286 = vpop.f32.mrb[0].mxu0
      %v1287 = vpop.f32.mrb[0].mxu0
      %1288 = vdwg.mxu0
      %v1290 = vsel %vm1245, %v570, 0
      %1292 = vmatprep.subr.bf16.mxu0 0
      %1293 = vmatpush1.bf16.msra.mxu0 %v1235
      %1294 = vmatprep.subr.bf16.mxu0 0
      %1295 = vmatpush1.bf16.msra.mxu0 0
      %1296 = vmatprep.subr.bf16.mxu0 0
      %1297 = vmatpush1.bf16.msra.mxu0 0
      %1298 = vmatprep.subr.bf16.mxu0 0
      %1299 = vmatpush1.bf16.msra.mxu0 0
      %1300 = vmatprep.subr.bf16.mxu0 0
      %1301 = vmatpush1.bf16.msra.mxu0 0
      %1302 = vmatprep.subr.bf16.mxu0 0
      %1303 = vmatpush1.bf16.msra.mxu0 0
      %1304 = vmatprep.subr.bf16.mxu0 0
      %1305 = vmatpush1.bf16.msra.mxu0 0
      %1306 = vmatprep.subr.bf16.mxu0 0
      %1307 = vmatpush1.bf16.msra.mxu0 0
      %1308 = vmatprep.subr.bf16.mxu0 0
      %1309 = vmatpush1.bf16.msra.mxu0 0
      %1310 = vmatprep.subr.bf16.mxu0 0
      %1311 = vmatpush1.bf16.msra.mxu0 0
      %1312 = vmatprep.subr.bf16.mxu0 0
      %1313 = vmatpush1.bf16.msra.mxu0 0
      %1314 = vmatprep.subr.bf16.mxu0 0
      %1315 = vmatpush1.bf16.msra.mxu0 0
      %1316 = vmatprep.subr.bf16.mxu0 0
      %1317 = vmatpush1.bf16.msra.mxu0 0
      %1318 = vmatprep.subr.bf16.mxu0 0
      %1319 = vmatpush1.bf16.msra.mxu0 0
      %1320 = vmatprep.subr.bf16.mxu0 0
      %1321 = vmatpush1.bf16.msra.mxu0 0
      %1322 = vmatprep.subr.bf16.mxu0 0
      %1323 = vmatpush1.bf16.msra.mxu0 0
      %1324 = vmatprep.mubr.bf16.mxu0 0
      %1325 = vmatmul.mubr.bf16.gmra.mrb[0].mxu0 %v1290
      %v1326 = vpop.f32.mrb[0].mxu0
      %v1327 = vadd.f32 0.0, %v1326
      %v1328 = vpop.f32.mrb[0].mxu0
      %v1329 = vpop.f32.mrb[0].mxu0
      %v1330 = vpop.f32.mrb[0].mxu0
      %1331 = vdwg.mxu0
      %v1333 = vsel %vm1245, %v573, 0
      %1335 = vmatprep.subr.bf16.mxu0 0
      %1336 = vmatpush1.bf16.msra.mxu0 %v1239
      %1337 = vmatprep.subr.bf16.mxu0 0
      %1338 = vmatpush1.bf16.msra.mxu0 0
      %1339 = vmatprep.subr.bf16.mxu0 0
      %1340 = vmatpush1.bf16.msra.mxu0 0
      %1341 = vmatprep.subr.bf16.mxu0 0
      %1342 = vmatpush1.bf16.msra.mxu0 0
      %1343 = vmatprep.subr.bf16.mxu0 0
      %1344 = vmatpush1.bf16.msra.mxu0 0
      %1345 = vmatprep.subr.bf16.mxu0 0
      %1346 = vmatpush1.bf16.msra.mxu0 0
      %1347 = vmatprep.subr.bf16.mxu0 0
      %1348 = vmatpush1.bf16.msra.mxu0 0
      %1349 = vmatprep.subr.bf16.mxu0 0
      %1350 = vmatpush1.bf16.msra.mxu0 0
      %1351 = vmatprep.subr.bf16.mxu0 0
      %1352 = vmatpush1.bf16.msra.mxu0 0
      %1353 = vmatprep.subr.bf16.mxu0 0
      %1354 = vmatpush1.bf16.msra.mxu0 0
      %1355 = vmatprep.subr.bf16.mxu0 0
      %1356 = vmatpush1.bf16.msra.mxu0 0
      %1357 = vmatprep.subr.bf16.mxu0 0
      %1358 = vmatpush1.bf16.msra.mxu0 0
      %1359 = vmatprep.subr.bf16.mxu0 0
      %1360 = vmatpush1.bf16.msra.mxu0 0
      %1361 = vmatprep.subr.bf16.mxu0 0
      %1362 = vmatpush1.bf16.msra.mxu0 0
      %1363 = vmatprep.subr.bf16.mxu0 0
      %1364 = vmatpush1.bf16.msra.mxu0 0
      %1365 = vmatprep.subr.bf16.mxu0 0
      %1366 = vmatpush1.bf16.msra.mxu0 0
      %1367 = vmatprep.mubr.bf16.mxu0 0
      %1368 = vmatmul.mubr.bf16.gmra.mrb[0].mxu0 %v1333
      %v1369 = vpop.f32.mrb[0].mxu0
      %v1370 = vadd.f32 0.0, %v1369
      %v1371 = vpop.f32.mrb[0].mxu0
      %v1372 = vpop.f32.mrb[0].mxu0
      %v1373 = vpop.f32.mrb[0].mxu0
      %1374 = vdwg.mxu0
      %v1376 = vsel %vm1245, %v576, 0
      %1378 = vmatprep.subr.bf16.mxu0 0
      %1379 = vmatpush1.bf16.msra.mxu0 %v1243
      %1380 = vmatprep.subr.bf16.mxu0 0
      %1381 = vmatpush1.bf16.msra.mxu0 0
      %1382 = vmatprep.subr.bf16.mxu0 0
      %1383 = vmatpush1.bf16.msra.mxu0 0
      %1384 = vmatprep.subr.bf16.mxu0 0
      %1385 = vmatpush1.bf16.msra.mxu0 0
      %1386 = vmatprep.subr.bf16.mxu0 0
      %1387 = vmatpush1.bf16.msra.mxu0 0
      %1388 = vmatprep.subr.bf16.mxu0 0
      %1389 = vmatpush1.bf16.msra.mxu0 0
      %1390 = vmatprep.subr.bf16.mxu0 0
      %1391 = vmatpush1.bf16.msra.mxu0 0
      %1392 = vmatprep.subr.bf16.mxu0 0
      %1393 = vmatpush1.bf16.msra.mxu0 0
      %1394 = vmatprep.subr.bf16.mxu0 0
      %1395 = vmatpush1.bf16.msra.mxu0 0
      %1396 = vmatprep.subr.bf16.mxu0 0
      %1397 = vmatpush1.bf16.msra.mxu0 0
      %1398 = vmatprep.subr.bf16.mxu0 0
      %1399 = vmatpush1.bf16.msra.mxu0 0
      %1400 = vmatprep.subr.bf16.mxu0 0
      %1401 = vmatpush1.bf16.msra.mxu0 0
      %1402 = vmatprep.subr.bf16.mxu0 0
      %1403 = vmatpush1.bf16.msra.mxu0 0
      %1404 = vmatprep.subr.bf16.mxu0 0
      %1405 = vmatpush1.bf16.msra.mxu0 0
      %1406 = vmatprep.subr.bf16.mxu0 0
      %1407 = vmatpush1.bf16.msra.mxu0 0
      %1408 = vmatprep.subr.bf16.mxu0 0
      %1409 = vmatpush1.bf16.msra.mxu0 0
      %1410 = vmatprep.mubr.bf16.mxu0 0
      %1411 = vmatmul.mubr.bf16.gmra.mrb[0].mxu0 %v1376
      %v1412 = vpop.f32.mrb[0].mxu0
      %v1413 = vadd.f32 0.0, %v1412
      %v1414 = vpop.f32.mrb[0].mxu0
      %v1415 = vpop.f32.mrb[0].mxu0
      %v1416 = vpop.f32.mrb[0].mxu0
      %1417 = vdwg.mxu0
      %v1418 = vmul.f32 %v1284, 0.25
      %v1419 = vmul.f32 %v1327, 0.25
      %v1420 = vmul.f32 %v1370, 0.25
      %v1421 = vmul.f32 %v1413, 0.25
      %vm1422 = vcmask 64512
      %v1423 = vsel %vm1422, %v1418, -inf
      %1424 = vmax.xlane.f32.xlu0 %v1423
      %v1425 = vpop.xlane.xlu0 %1424
      %v1426 = vsel %vm1422, %v1419, -inf
      %1427 = vmax.xlane.f32.xlu0 %v1426
      %v1428 = vpop.xlane.xlu0 %1427
      %v1429 = vsel %vm1422, %v1420, -inf
      %1430 = vmax.xlane.f32.xlu0 %v1429
      %v1431 = vpop.xlane.xlu0 %1430
      %v1432 = vsel %vm1422, %v1421, -inf
      %1433 = vmax.xlane.f32.xlu0 %v1432
      %v1434 = vpop.xlane.xlu0 %1433
      %v1435 = vsub.f32 %v1418, %v1425
      %v1436 = vsub.f32 %v1419, %v1428
      %v1437 = vsub.f32 %v1420, %v1431
      %v1438 = vsub.f32 %v1421, %v1434
      %v1439 = vmul.f32 %v1435, 1.442695
      %v1440 = vpow.pop %v1439
      %v1441 = vmul.f32 %v1436, 1.442695
      %v1442 = vpow.pop %v1441
      %v1443 = vmul.f32 %v1437, 1.442695
      %v1444 = vpow.pop %v1443
      %v1445 = vmul.f32 %v1438, 1.442695
      %v1446 = vpow.pop %v1445
      %v1447 = vsel %vm1422, %v1440, 0.0
      %1448 = vadd.xlane.f32.xlu0 %v1447
      %v1449 = vpop.xlane.xlu0 %1448
      %v1450 = vsel %vm1422, %v1442, 0.0
      %1451 = vadd.xlane.f32.xlu0 %v1450
      %v1452 = vpop.xlane.xlu0 %1451
      %v1453 = vsel %vm1422, %v1444, 0.0
      %1454 = vadd.xlane.f32.xlu0 %v1453
      %v1455 = vpop.xlane.xlu0 %1454
      %v1456 = vsel %vm1422, %v1446, 0.0
      %1457 = vadd.xlane.f32.xlu0 %v1456
      %v1458 = vpop.xlane.xlu0 %1457
      %v1459 = vrcp.pop %v1449
      %v1460 = vrcp.pop %v1452
      %v1461 = vrcp.pop %v1455
      %v1462 = vrcp.pop %v1458
      %v1463 = vmul.f32 %v1440, %v1459
      %v1464 = vmul.f32 %v1442, %v1460
      %v1465 = vmul.f32 %v1444, %v1461
      %v1466 = vmul.f32 %v1446, %v1462
      %v1467 = vpack.c.bf16 %v1463, %v1463
      %v1468 = vpack.c.bf16 %v1464, %v1464
      %v1469 = vpack.c.bf16 %v1465, %v1465
      %v1470 = vpack.c.bf16 %v1466, %v1466
      %1471 = vxpose.xlu0.c.b16.start [1/8] %v507, 128
      %1472 = vxpose.xlu0.c.b16.cont [2/8] 0, 128
      %1473 = vxpose.xlu0.c.b16.cont [3/8] 0, 128
      %1474 = vxpose.xlu0.c.b16.cont [4/8] 0, 128
      %1475 = vxpose.xlu0.c.b16.cont [5/8] 0, 128
      %1476 = vxpose.xlu0.c.b16.cont [6/8] 0, 128
      %1477 = vxpose.xlu0.c.b16.cont [7/8] 0, 128
      %1478 = vxpose.xlu0.c.b16.end [8/8] 0, 128
      %v1479 = vpop.trf.xlu0
      %v1480 = vpop.trf.xlu0
      %v1481 = vpop.trf.xlu0
      %v1482 = vpop.trf.xlu0
      %v1483 = vpop.trf.xlu0
      %v1484 = vpop.trf.xlu0
      %v1485 = vpop.trf.xlu0
      %v1486 = vpop.trf.xlu0
      %1487 = vxpose.xlu0.c.b16.start [1/8] %v508, 128
      %1488 = vxpose.xlu0.c.b16.cont [2/8] 0, 128
      %1489 = vxpose.xlu0.c.b16.cont [3/8] 0, 128
      %1490 = vxpose.xlu0.c.b16.cont [4/8] 0, 128
      %1491 = vxpose.xlu0.c.b16.cont [5/8] 0, 128
      %1492 = vxpose.xlu0.c.b16.cont [6/8] 0, 128
      %1493 = vxpose.xlu0.c.b16.cont [7/8] 0, 128
      %1494 = vxpose.xlu0.c.b16.end [8/8] 0, 128
      %v1495 = vpop.trf.xlu0
      %v1496 = vpop.trf.xlu0
      %v1497 = vpop.trf.xlu0
      %v1498 = vpop.trf.xlu0
      %v1499 = vpop.trf.xlu0
      %v1500 = vpop.trf.xlu0
      %v1501 = vpop.trf.xlu0
      %v1502 = vpop.trf.xlu0
      %1503 = vxpose.xlu0.c.b16.start [1/8] %v509, 128
      %1504 = vxpose.xlu0.c.b16.cont [2/8] 0, 128
      %1505 = vxpose.xlu0.c.b16.cont [3/8] 0, 128
      %1506 = vxpose.xlu0.c.b16.cont [4/8] 0, 128
      %1507 = vxpose.xlu0.c.b16.cont [5/8] 0, 128
      %1508 = vxpose.xlu0.c.b16.cont [6/8] 0, 128
      %1509 = vxpose.xlu0.c.b16.cont [7/8] 0, 128
      %1510 = vxpose.xlu0.c.b16.end [8/8] 0, 128
      %v1511 = vpop.trf.xlu0
      %v1512 = vpop.trf.xlu0
      %v1513 = vpop.trf.xlu0
      %v1514 = vpop.trf.xlu0
      %v1515 = vpop.trf.xlu0
      %v1516 = vpop.trf.xlu0
      %v1517 = vpop.trf.xlu0
      %v1518 = vpop.trf.xlu0
      %1519 = vxpose.xlu0.c.b16.start [1/8] %v510, 128
      %1520 = vxpose.xlu0.c.b16.cont [2/8] 0, 128
      %1521 = vxpose.xlu0.c.b16.cont [3/8] 0, 128
      %1522 = vxpose.xlu0.c.b16.cont [4/8] 0, 128
      %1523 = vxpose.xlu0.c.b16.cont [5/8] 0, 128
      %1524 = vxpose.xlu0.c.b16.cont [6/8] 0, 128
      %1525 = vxpose.xlu0.c.b16.cont [7/8] 0, 128
      %1526 = vxpose.xlu0.c.b16.end [8/8] 0, 128
      %v1527 = vpop.trf.xlu0
      %v1528 = vpop.trf.xlu0
      %v1529 = vpop.trf.xlu0
      %v1530 = vpop.trf.xlu0
      %v1531 = vpop.trf.xlu0
      %v1532 = vpop.trf.xlu0
      %v1533 = vpop.trf.xlu0
      %v1534 = vpop.trf.xlu0
      %1535 = vxpose.xlu0.c.b16.start [1/8] %v511, 128
      %1536 = vxpose.xlu0.c.b16.cont [2/8] 0, 128
      %1537 = vxpose.xlu0.c.b16.cont [3/8] 0, 128
      %1538 = vxpose.xlu0.c.b16.cont [4/8] 0, 128
      %1539 = vxpose.xlu0.c.b16.cont [5/8] 0, 128
      %1540 = vxpose.xlu0.c.b16.cont [6/8] 0, 128
      %1541 = vxpose.xlu0.c.b16.cont [7/8] 0, 128
      %1542 = vxpose.xlu0.c.b16.end [8/8] 0, 128
      %v1543 = vpop.trf.xlu0
      %v1544 = vpop.trf.xlu0
      %v1545 = vpop.trf.xlu0
      %v1546 = vpop.trf.xlu0
      %v1547 = vpop.trf.xlu0
      %v1548 = vpop.trf.xlu0
      %v1549 = vpop.trf.xlu0
      %v1550 = vpop.trf.xlu0
      %1551 = vxpose.xlu0.c.b16.start [1/8] %v512, 128
      %1552 = vxpose.xlu0.c.b16.cont [2/8] 0, 128
      %1553 = vxpose.xlu0.c.b16.cont [3/8] 0, 128
      %1554 = vxpose.xlu0.c.b16.cont [4/8] 0, 128
      %1555 = vxpose.xlu0.c.b16.cont [5/8] 0, 128
      %1556 = vxpose.xlu0.c.b16.cont [6/8] 0, 128
      %1557 = vxpose.xlu0.c.b16.cont [7/8] 0, 128
      %1558 = vxpose.xlu0.c.b16.end [8/8] 0, 128
      %v1559 = vpop.trf.xlu0
      %v1560 = vpop.trf.xlu0
      %v1561 = vpop.trf.xlu0
      %v1562 = vpop.trf.xlu0
      %v1563 = vpop.trf.xlu0
      %v1564 = vpop.trf.xlu0
      %v1565 = vpop.trf.xlu0
      %v1566 = vpop.trf.xlu0
      %1567 = vxpose.xlu0.c.b16.start [1/8] %v513, 128
      %1568 = vxpose.xlu0.c.b16.cont [2/8] 0, 128
      %1569 = vxpose.xlu0.c.b16.cont [3/8] 0, 128
      %1570 = vxpose.xlu0.c.b16.cont [4/8] 0, 128
      %1571 = vxpose.xlu0.c.b16.cont [5/8] 0, 128
      %1572 = vxpose.xlu0.c.b16.cont [6/8] 0, 128
      %1573 = vxpose.xlu0.c.b16.cont [7/8] 0, 128
      %1574 = vxpose.xlu0.c.b16.end [8/8] 0, 128
      %v1575 = vpop.trf.xlu0
      %v1576 = vpop.trf.xlu0
      %v1577 = vpop.trf.xlu0
      %v1578 = vpop.trf.xlu0
      %v1579 = vpop.trf.xlu0
      %v1580 = vpop.trf.xlu0
      %v1581 = vpop.trf.xlu0
      %v1582 = vpop.trf.xlu0
      %1583 = vxpose.xlu0.c.b16.start [1/8] %v514, 128
      %1584 = vxpose.xlu0.c.b16.cont [2/8] 0, 128
      %1585 = vxpose.xlu0.c.b16.cont [3/8] 0, 128
      %1586 = vxpose.xlu0.c.b16.cont [4/8] 0, 128
      %1587 = vxpose.xlu0.c.b16.cont [5/8] 0, 128
      %1588 = vxpose.xlu0.c.b16.cont [6/8] 0, 128
      %1589 = vxpose.xlu0.c.b16.cont [7/8] 0, 128
      %1590 = vxpose.xlu0.c.b16.end [8/8] 0, 128
      %v1591 = vpop.trf.xlu0
      %v1592 = vpop.trf.xlu0
      %v1593 = vpop.trf.xlu0
      %v1594 = vpop.trf.xlu0
      %v1595 = vpop.trf.xlu0
      %v1596 = vpop.trf.xlu0
      %v1597 = vpop.trf.xlu0
      %v1598 = vpop.trf.xlu0
      %v1601 = vpack.i.b16 %v1495, %v1479
      %v1603 = vshrl.u32 %v1479, 16
      %v1604 = vshrl.u32 %v1495, 16
      %v1605 = vpack.i.b16 %v1604, %v1603
      %v1609 = vpack.i.b16 %v1527, %v1511
      %v1611 = vshrl.u32 %v1511, 16
      %v1612 = vshrl.u32 %v1527, 16
      %v1613 = vpack.i.b16 %v1612, %v1611
      %v1617 = vpack.i.b16 %v1559, %v1543
      %v1619 = vshrl.u32 %v1543, 16
      %v1620 = vshrl.u32 %v1559, 16
      %v1621 = vpack.i.b16 %v1620, %v1619
      %v1625 = vpack.i.b16 %v1591, %v1575
      %v1627 = vshrl.u32 %v1575, 16
      %v1628 = vshrl.u32 %v1591, 16
      %v1629 = vpack.i.b16 %v1628, %v1627
      %v1631 = vcombine.low %v1601, %v1617
      %v1632 = vcombine.high %v1601, %v1617
      %v1634 = vunpack.c.l.s4 1983009808
      %v1635 = vunpack.c.0.s8 %v1634
      %v1636 = vlaneseq
      %v1637 = vshrl.u32 %v1636, 7
      %v1638 = vsub.s32 %v1635, %v1637
      %v1639 = vrot.slane %v1631, %v1638
      %v1641 = vunpack.c.l.s4 1983009808
      %v1642 = vunpack.c.0.s8 %v1641
      %v1643 = vlaneseq
      %v1644 = vshrl.u32 %v1643, 7
      %v1645 = vsub.s32 %v1642, %v1644
      %v1646 = vrot.slane %v1632, %v1645
      %v1647 = vcombine.low %v1609, %v1625
      %v1648 = vcombine.high %v1609, %v1625
      %v1650 = vunpack.c.l.s4 1983009808
      %v1651 = vunpack.c.0.s8 %v1650
      %v1652 = vlaneseq
      %v1653 = vshrl.u32 %v1652, 7
      %v1654 = vsub.s32 %v1651, %v1653
      %v1655 = vrot.slane %v1647, %v1654
      %v1657 = vunpack.c.l.s4 1983009808
      %v1658 = vunpack.c.0.s8 %v1657
      %v1659 = vlaneseq
      %v1660 = vshrl.u32 %v1659, 7
      %v1661 = vsub.s32 %v1658, %v1660
      %v1662 = vrot.slane %v1648, %v1661
      %v1663 = vcombine.low %v1639, %v1655
      %v1664 = vcombine.high %v1639, %v1655
      %v1666 = vunpack.c.l.s4 1934713408
      %v1667 = vunpack.c.0.s8 %v1666
      %v1668 = vlaneseq
      %v1669 = vshrl.u32 %v1668, 7
      %v1670 = vsub.s32 %v1667, %v1669
      %v1671 = vrot.slane %v1663, %v1670
      %v1673 = vunpack.c.l.s4 1934713408
      %v1674 = vunpack.c.0.s8 %v1673
      %v1675 = vlaneseq
      %v1676 = vshrl.u32 %v1675, 7
      %v1677 = vsub.s32 %v1674, %v1676
      %v1678 = vrot.slane %v1664, %v1677
      %v1679 = vcombine.low %v1646, %v1662
      %v1680 = vcombine.high %v1646, %v1662
      %v1682 = vunpack.c.l.s4 1934713408
      %v1683 = vunpack.c.0.s8 %v1682
      %v1684 = vlaneseq
      %v1685 = vshrl.u32 %v1684, 7
      %v1686 = vsub.s32 %v1683, %v1685
      %v1687 = vrot.slane %v1679, %v1686
      %v1689 = vunpack.c.l.s4 1934713408
      %v1690 = vunpack.c.0.s8 %v1689
      %v1691 = vlaneseq
      %v1692 = vshrl.u32 %v1691, 7
      %v1693 = vsub.s32 %v1690, %v1692
      %v1694 = vrot.slane %v1680, %v1693
      %v1695 = vcombine.high %v1671, 0
      %v1696 = vcombine.high %v1678, 0
      %v1697 = vcombine.high %v1687, 0
      %v1698 = vcombine.high %v1694, 0
      %v1699 = vcombine.low %v1605, %v1621
      %v1700 = vcombine.high %v1605, %v1621
      %v1702 = vunpack.c.l.s4 1983009808
      %v1703 = vunpack.c.0.s8 %v1702
      %v1704 = vlaneseq
      %v1705 = vshrl.u32 %v1704, 7
      %v1706 = vsub.s32 %v1703, %v1705
      %v1707 = vrot.slane %v1699, %v1706
      %v1709 = vunpack.c.l.s4 1983009808
      %v1710 = vunpack.c.0.s8 %v1709
      %v1711 = vlaneseq
      %v1712 = vshrl.u32 %v1711, 7
      %v1713 = vsub.s32 %v1710, %v1712
      %v1714 = vrot.slane %v1700, %v1713
      %v1715 = vcombine.low %v1613, %v1629
      %v1716 = vcombine.high %v1613, %v1629
      %v1718 = vunpack.c.l.s4 1983009808
      %v1719 = vunpack.c.0.s8 %v1718
      %v1720 = vlaneseq
      %v1721 = vshrl.u32 %v1720, 7
      %v1722 = vsub.s32 %v1719, %v1721
      %v1723 = vrot.slane %v1715, %v1722
      %v1725 = vunpack.c.l.s4 1983009808
      %v1726 = vunpack.c.0.s8 %v1725
      %v1727 = vlaneseq
      %v1728 = vshrl.u32 %v1727, 7
      %v1729 = vsub.s32 %v1726, %v1728
      %v1730 = vrot.slane %v1716, %v1729
      %v1731 = vcombine.low %v1707, %v1723
      %v1732 = vcombine.high %v1707, %v1723
      %v1734 = vunpack.c.l.s4 1934713408
      %v1735 = vunpack.c.0.s8 %v1734
      %v1736 = vlaneseq
      %v1737 = vshrl.u32 %v1736, 7
      %v1738 = vsub.s32 %v1735, %v1737
      %v1739 = vrot.slane %v1731, %v1738
      %v1741 = vunpack.c.l.s4 1934713408
      %v1742 = vunpack.c.0.s8 %v1741
      %v1743 = vlaneseq
      %v1744 = vshrl.u32 %v1743, 7
      %v1745 = vsub.s32 %v1742, %v1744
      %v1746 = vrot.slane %v1732, %v1745
      %v1747 = vcombine.low %v1714, %v1730
      %v1748 = vcombine.high %v1714, %v1730
      %v1750 = vunpack.c.l.s4 1934713408
      %v1751 = vunpack.c.0.s8 %v1750
      %v1752 = vlaneseq
      %v1753 = vshrl.u32 %v1752, 7
      %v1754 = vsub.s32 %v1751, %v1753
      %v1755 = vrot.slane %v1747, %v1754
      %v1757 = vunpack.c.l.s4 1934713408
      %v1758 = vunpack.c.0.s8 %v1757
      %v1759 = vlaneseq
      %v1760 = vshrl.u32 %v1759, 7
      %v1761 = vsub.s32 %v1758, %v1760
      %v1762 = vrot.slane %v1748, %v1761
      %v1763 = vcombine.high %v1739, 0
      %v1764 = vcombine.high %v1746, 0
      %v1765 = vcombine.high %v1755, 0
      %v1766 = vcombine.high %v1762, 0
      %1767 = vxpose.xlu0.c.b16.start [1/8] %v1671, 128
      %1768 = vxpose.xlu0.c.b16.cont [2/8] 0, 128
      %1769 = vxpose.xlu0.c.b16.cont [3/8] 0, 128
      %1770 = vxpose.xlu0.c.b16.cont [4/8] 0, 128
      %1771 = vxpose.xlu0.c.b16.cont [5/8] 0, 128
      %1772 = vxpose.xlu0.c.b16.cont [6/8] 0, 128
      %1773 = vxpose.xlu0.c.b16.cont [7/8] 0, 128
      %1774 = vxpose.xlu0.c.b16.end [8/8] 0, 128
      %v1775 = vpop.trf.xlu0
      %v1776 = vpop.trf.xlu0
      %v1777 = vpop.trf.xlu0
      %v1778 = vpop.trf.xlu0
      %v1779 = vpop.trf.xlu0
      %v1780 = vpop.trf.xlu0
      %v1781 = vpop.trf.xlu0
      %v1782 = vpop.trf.xlu0
      %1783 = vxpose.xlu0.c.b16.start [1/8] %v1739, 128
      %1784 = vxpose.xlu0.c.b16.cont [2/8] 0, 128
      %1785 = vxpose.xlu0.c.b16.cont [3/8] 0, 128
      %1786 = vxpose.xlu0.c.b16.cont [4/8] 0, 128
      %1787 = vxpose.xlu0.c.b16.cont [5/8] 0, 128
      %1788 = vxpose.xlu0.c.b16.cont [6/8] 0, 128
      %1789 = vxpose.xlu0.c.b16.cont [7/8] 0, 128
      %1790 = vxpose.xlu0.c.b16.end [8/8] 0, 128
      %v1791 = vpop.trf.xlu0
      %v1792 = vpop.trf.xlu0
      %v1793 = vpop.trf.xlu0
      %v1794 = vpop.trf.xlu0
      %v1795 = vpop.trf.xlu0
      %v1796 = vpop.trf.xlu0
      %v1797 = vpop.trf.xlu0
      %v1798 = vpop.trf.xlu0
      %1799 = vxpose.xlu0.c.b16.start [1/8] %v1695, 128
      %1800 = vxpose.xlu0.c.b16.cont [2/8] 0, 128
      %1801 = vxpose.xlu0.c.b16.cont [3/8] 0, 128
      %1802 = vxpose.xlu0.c.b16.cont [4/8] 0, 128
      %1803 = vxpose.xlu0.c.b16.cont [5/8] 0, 128
      %1804 = vxpose.xlu0.c.b16.cont [6/8] 0, 128
      %1805 = vxpose.xlu0.c.b16.cont [7/8] 0, 128
      %1806 = vxpose.xlu0.c.b16.end [8/8] 0, 128
      %v1807 = vpop.trf.xlu0
      %v1808 = vpop.trf.xlu0
      %v1809 = vpop.trf.xlu0
      %v1810 = vpop.trf.xlu0
      %v1811 = vpop.trf.xlu0
      %v1812 = vpop.trf.xlu0
      %v1813 = vpop.trf.xlu0
      %v1814 = vpop.trf.xlu0
      %1815 = vxpose.xlu0.c.b16.start [1/8] %v1763, 128
      %1816 = vxpose.xlu0.c.b16.cont [2/8] 0, 128
      %1817 = vxpose.xlu0.c.b16.cont [3/8] 0, 128
      %1818 = vxpose.xlu0.c.b16.cont [4/8] 0, 128
      %1819 = vxpose.xlu0.c.b16.cont [5/8] 0, 128
      %1820 = vxpose.xlu0.c.b16.cont [6/8] 0, 128
      %1821 = vxpose.xlu0.c.b16.cont [7/8] 0, 128
      %1822 = vxpose.xlu0.c.b16.end [8/8] 0, 128
      %v1823 = vpop.trf.xlu0
      %v1824 = vpop.trf.xlu0
      %v1825 = vpop.trf.xlu0
      %v1826 = vpop.trf.xlu0
      %v1827 = vpop.trf.xlu0
      %v1828 = vpop.trf.xlu0
      %v1829 = vpop.trf.xlu0
      %v1830 = vpop.trf.xlu0
      %1831 = vxpose.xlu0.c.b16.start [1/8] %v1678, 128
      %1832 = vxpose.xlu0.c.b16.cont [2/8] 0, 128
      %1833 = vxpose.xlu0.c.b16.cont [3/8] 0, 128
      %1834 = vxpose.xlu0.c.b16.cont [4/8] 0, 128
      %1835 = vxpose.xlu0.c.b16.cont [5/8] 0, 128
      %1836 = vxpose.xlu0.c.b16.cont [6/8] 0, 128
      %1837 = vxpose.xlu0.c.b16.cont [7/8] 0, 128
      %1838 = vxpose.xlu0.c.b16.end [8/8] 0, 128
      %v1839 = vpop.trf.xlu0
      %v1840 = vpop.trf.xlu0
      %v1841 = vpop.trf.xlu0
      %v1842 = vpop.trf.xlu0
      %v1843 = vpop.trf.xlu0
      %v1844 = vpop.trf.xlu0
      %v1845 = vpop.trf.xlu0
      %v1846 = vpop.trf.xlu0
      %1847 = vxpose.xlu0.c.b16.start [1/8] %v1746, 128
      %1848 = vxpose.xlu0.c.b16.cont [2/8] 0, 128
      %1849 = vxpose.xlu0.c.b16.cont [3/8] 0, 128
      %1850 = vxpose.xlu0.c.b16.cont [4/8] 0, 128
      %1851 = vxpose.xlu0.c.b16.cont [5/8] 0, 128
      %1852 = vxpose.xlu0.c.b16.cont [6/8] 0, 128
      %1853 = vxpose.xlu0.c.b16.cont [7/8] 0, 128
      %1854 = vxpose.xlu0.c.b16.end [8/8] 0, 128
      %v1855 = vpop.trf.xlu0
      %v1856 = vpop.trf.xlu0
      %v1857 = vpop.trf.xlu0
      %v1858 = vpop.trf.xlu0
      %v1859 = vpop.trf.xlu0
      %v1860 = vpop.trf.xlu0
      %v1861 = vpop.trf.xlu0
      %v1862 = vpop.trf.xlu0
      %1863 = vxpose.xlu0.c.b16.start [1/8] %v1696, 128
      %1864 = vxpose.xlu0.c.b16.cont [2/8] 0, 128
      %1865 = vxpose.xlu0.c.b16.cont [3/8] 0, 128
      %1866 = vxpose.xlu0.c.b16.cont [4/8] 0, 128
      %1867 = vxpose.xlu0.c.b16.cont [5/8] 0, 128
      %1868 = vxpose.xlu0.c.b16.cont [6/8] 0, 128
      %1869 = vxpose.xlu0.c.b16.cont [7/8] 0, 128
      %1870 = vxpose.xlu0.c.b16.end [8/8] 0, 128
      %v1871 = vpop.trf.xlu0
      %v1872 = vpop.trf.xlu0
      %v1873 = vpop.trf.xlu0
      %v1874 = vpop.trf.xlu0
      %v1875 = vpop.trf.xlu0
      %v1876 = vpop.trf.xlu0
      %v1877 = vpop.trf.xlu0
      %v1878 = vpop.trf.xlu0
      %1879 = vxpose.xlu0.c.b16.start [1/8] %v1764, 128
      %1880 = vxpose.xlu0.c.b16.cont [2/8] 0, 128
      %1881 = vxpose.xlu0.c.b16.cont [3/8] 0, 128
      %1882 = vxpose.xlu0.c.b16.cont [4/8] 0, 128
      %1883 = vxpose.xlu0.c.b16.cont [5/8] 0, 128
      %1884 = vxpose.xlu0.c.b16.cont [6/8] 0, 128
      %1885 = vxpose.xlu0.c.b16.cont [7/8] 0, 128
      %1886 = vxpose.xlu0.c.b16.end [8/8] 0, 128
      %v1887 = vpop.trf.xlu0
      %v1888 = vpop.trf.xlu0
      %v1889 = vpop.trf.xlu0
      %v1890 = vpop.trf.xlu0
      %v1891 = vpop.trf.xlu0
      %v1892 = vpop.trf.xlu0
      %v1893 = vpop.trf.xlu0
      %v1894 = vpop.trf.xlu0
      %1895 = vxpose.xlu0.c.b16.start [1/8] %v1687, 128
      %1896 = vxpose.xlu0.c.b16.cont [2/8] 0, 128
      %1897 = vxpose.xlu0.c.b16.cont [3/8] 0, 128
      %1898 = vxpose.xlu0.c.b16.cont [4/8] 0, 128
      %1899 = vxpose.xlu0.c.b16.cont [5/8] 0, 128
      %1900 = vxpose.xlu0.c.b16.cont [6/8] 0, 128
      %1901 = vxpose.xlu0.c.b16.cont [7/8] 0, 128
      %1902 = vxpose.xlu0.c.b16.end [8/8] 0, 128
      %v1903 = vpop.trf.xlu0
      %v1904 = vpop.trf.xlu0
      %v1905 = vpop.trf.xlu0
      %v1906 = vpop.trf.xlu0
      %v1907 = vpop.trf.xlu0
      %v1908 = vpop.trf.xlu0
      %v1909 = vpop.trf.xlu0
      %v1910 = vpop.trf.xlu0
      %1911 = vxpose.xlu0.c.b16.start [1/8] %v1755, 128
      %1912 = vxpose.xlu0.c.b16.cont [2/8] 0, 128
      %1913 = vxpose.xlu0.c.b16.cont [3/8] 0, 128
      %1914 = vxpose.xlu0.c.b16.cont [4/8] 0, 128
      %1915 = vxpose.xlu0.c.b16.cont [5/8] 0, 128
      %1916 = vxpose.xlu0.c.b16.cont [6/8] 0, 128
      %1917 = vxpose.xlu0.c.b16.cont [7/8] 0, 128
      %1918 = vxpose.xlu0.c.b16.end [8/8] 0, 128
      %v1919 = vpop.trf.xlu0
      %v1920 = vpop.trf.xlu0
      %v1921 = vpop.trf.xlu0
      %v1922 = vpop.trf.xlu0
      %v1923 = vpop.trf.xlu0
      %v1924 = vpop.trf.xlu0
      %v1925 = vpop.trf.xlu0
      %v1926 = vpop.trf.xlu0
      %1927 = vxpose.xlu0.c.b16.start [1/8] %v1697, 128
      %1928 = vxpose.xlu0.c.b16.cont [2/8] 0, 128
      %1929 = vxpose.xlu0.c.b16.cont [3/8] 0, 128
      %1930 = vxpose.xlu0.c.b16.cont [4/8] 0, 128
      %1931 = vxpose.xlu0.c.b16.cont [5/8] 0, 128
      %1932 = vxpose.xlu0.c.b16.cont [6/8] 0, 128
      %1933 = vxpose.xlu0.c.b16.cont [7/8] 0, 128
      %1934 = vxpose.xlu0.c.b16.end [8/8] 0, 128
      %v1935 = vpop.trf.xlu0
      %v1936 = vpop.trf.xlu0
      %v1937 = vpop.trf.xlu0
      %v1938 = vpop.trf.xlu0
      %v1939 = vpop.trf.xlu0
      %v1940 = vpop.trf.xlu0
      %v1941 = vpop.trf.xlu0
      %v1942 = vpop.trf.xlu0
      %1943 = vxpose.xlu0.c.b16.start [1/8] %v1765, 128
      %1944 = vxpose.xlu0.c.b16.cont [2/8] 0, 128
      %1945 = vxpose.xlu0.c.b16.cont [3/8] 0, 128
      %1946 = vxpose.xlu0.c.b16.cont [4/8] 0, 128
      %1947 = vxpose.xlu0.c.b16.cont [5/8] 0, 128
      %1948 = vxpose.xlu0.c.b16.cont [6/8] 0, 128
      %1949 = vxpose.xlu0.c.b16.cont [7/8] 0, 128
      %1950 = vxpose.xlu0.c.b16.end [8/8] 0, 128
      %v1951 = vpop.trf.xlu0
      %v1952 = vpop.trf.xlu0
      %v1953 = vpop.trf.xlu0
      %v1954 = vpop.trf.xlu0
      %v1955 = vpop.trf.xlu0
      %v1956 = vpop.trf.xlu0
      %v1957 = vpop.trf.xlu0
      %v1958 = vpop.trf.xlu0
      %1959 = vxpose.xlu0.c.b16.start [1/8] %v1694, 128
      %1960 = vxpose.xlu0.c.b16.cont [2/8] 0, 128
      %1961 = vxpose.xlu0.c.b16.cont [3/8] 0, 128
      %1962 = vxpose.xlu0.c.b16.cont [4/8] 0, 128
      %1963 = vxpose.xlu0.c.b16.cont [5/8] 0, 128
      %1964 = vxpose.xlu0.c.b16.cont [6/8] 0, 128
      %1965 = vxpose.xlu0.c.b16.cont [7/8] 0, 128
      %1966 = vxpose.xlu0.c.b16.end [8/8] 0, 128
      %v1967 = vpop.trf.xlu0
      %v1968 = vpop.trf.xlu0
      %v1969 = vpop.trf.xlu0
      %v1970 = vpop.trf.xlu0
      %v1971 = vpop.trf.xlu0
      %v1972 = vpop.trf.xlu0
      %v1973 = vpop.trf.xlu0
      %v1974 = vpop.trf.xlu0
      %1975 = vxpose.xlu0.c.b16.start [1/8] %v1762, 128
      %1976 = vxpose.xlu0.c.b16.cont [2/8] 0, 128
      %1977 = vxpose.xlu0.c.b16.cont [3/8] 0, 128
      %1978 = vxpose.xlu0.c.b16.cont [4/8] 0, 128
      %1979 = vxpose.xlu0.c.b16.cont [5/8] 0, 128
      %1980 = vxpose.xlu0.c.b16.cont [6/8] 0, 128
      %1981 = vxpose.xlu0.c.b16.cont [7/8] 0, 128
      %1982 = vxpose.xlu0.c.b16.end [8/8] 0, 128
      %v1983 = vpop.trf.xlu0
      %v1984 = vpop.trf.xlu0
      %v1985 = vpop.trf.xlu0
      %v1986 = vpop.trf.xlu0
      %v1987 = vpop.trf.xlu0
      %v1988 = vpop.trf.xlu0
      %v1989 = vpop.trf.xlu0
      %v1990 = vpop.trf.xlu0
      %1991 = vxpose.xlu0.c.b16.start [1/8] %v1698, 128
      %1992 = vxpose.xlu0.c.b16.cont [2/8] 0, 128
      %1993 = vxpose.xlu0.c.b16.cont [3/8] 0, 128
      %1994 = vxpose.xlu0.c.b16.cont [4/8] 0, 128
      %1995 = vxpose.xlu0.c.b16.cont [5/8] 0, 128
      %1996 = vxpose.xlu0.c.b16.cont [6/8] 0, 128
      %1997 = vxpose.xlu0.c.b16.cont [7/8] 0, 128
      %1998 = vxpose.xlu0.c.b16.end [8/8] 0, 128
      %v1999 = vpop.trf.xlu0
      %v2000 = vpop.trf.xlu0
      %v2001 = vpop.trf.xlu0
      %v2002 = vpop.trf.xlu0
      %v2003 = vpop.trf.xlu0
      %v2004 = vpop.trf.xlu0
      %v2005 = vpop.trf.xlu0
      %v2006 = vpop.trf.xlu0
      %2007 = vxpose.xlu0.c.b16.start [1/8] %v1766, 128
      %2008 = vxpose.xlu0.c.b16.cont [2/8] 0, 128
      %2009 = vxpose.xlu0.c.b16.cont [3/8] 0, 128
      %2010 = vxpose.xlu0.c.b16.cont [4/8] 0, 128
      %2011 = vxpose.xlu0.c.b16.cont [5/8] 0, 128
      %2012 = vxpose.xlu0.c.b16.cont [6/8] 0, 128
      %2013 = vxpose.xlu0.c.b16.cont [7/8] 0, 128
      %2014 = vxpose.xlu0.c.b16.end [8/8] 0, 128
      %v2015 = vpop.trf.xlu0
      %v2016 = vpop.trf.xlu0
      %v2017 = vpop.trf.xlu0
      %v2018 = vpop.trf.xlu0
      %v2019 = vpop.trf.xlu0
      %v2020 = vpop.trf.xlu0
      %v2021 = vpop.trf.xlu0
      %v2022 = vpop.trf.xlu0
      %v2023 = vcombine.low %v1775, %v1839
      %v2025 = vunpack.c.l.s4 1983009808
      %v2026 = vunpack.c.0.s8 %v2025
      %v2027 = vlaneseq
      %v2028 = vshrl.u32 %v2027, 7
      %v2029 = vsub.s32 %v2026, %v2028
      %v2030 = vrot.slane %v2023, %v2029
      %v2031 = vcombine.low %v1807, %v1871
      %v2033 = vunpack.c.l.s4 1983009808
      %v2034 = vunpack.c.0.s8 %v2033
      %v2035 = vlaneseq
      %v2036 = vshrl.u32 %v2035, 7
      %v2037 = vsub.s32 %v2034, %v2036
      %v2038 = vrot.slane %v2031, %v2037
      %v2039 = vcombine.low %v1903, %v1967
      %v2041 = vunpack.c.l.s4 1983009808
      %v2042 = vunpack.c.0.s8 %v2041
      %v2043 = vlaneseq
      %v2044 = vshrl.u32 %v2043, 7
      %v2045 = vsub.s32 %v2042, %v2044
      %v2046 = vrot.slane %v2039, %v2045
      %v2047 = vcombine.low %v1935, %v1999
      %v2049 = vunpack.c.l.s4 1983009808
      %v2050 = vunpack.c.0.s8 %v2049
      %v2051 = vlaneseq
      %v2052 = vshrl.u32 %v2051, 7
      %v2053 = vsub.s32 %v2050, %v2052
      %v2054 = vrot.slane %v2047, %v2053
      %v2055 = vcombine.low %v2030, %v2038
      %v2057 = vunpack.c.l.s4 1934713408
      %v2058 = vunpack.c.0.s8 %v2057
      %v2059 = vlaneseq
      %v2060 = vshrl.u32 %v2059, 7
      %v2061 = vsub.s32 %v2058, %v2060
      %v2062 = vrot.slane %v2055, %v2061
      %v2063 = vcombine.low %v2046, %v2054
      %v2065 = vunpack.c.l.s4 1934713408
      %v2066 = vunpack.c.0.s8 %v2065
      %v2067 = vlaneseq
      %v2068 = vshrl.u32 %v2067, 7
      %v2069 = vsub.s32 %v2066, %v2068
      %v2070 = vrot.slane %v2063, %v2069
      %v2071 = vcombine.low %v2062, %v2070
      %v2072 = vcombine.high %v2062, %v2070
      %v2073 = vcombine.low %v1791, %v1855
      %v2075 = vunpack.c.l.s4 1983009808
      %v2076 = vunpack.c.0.s8 %v2075
      %v2077 = vlaneseq
      %v2078 = vshrl.u32 %v2077, 7
      %v2079 = vsub.s32 %v2076, %v2078
      %v2080 = vrot.slane %v2073, %v2079
      %v2081 = vcombine.low %v1823, %v1887
      %v2083 = vunpack.c.l.s4 1983009808
      %v2084 = vunpack.c.0.s8 %v2083
      %v2085 = vlaneseq
      %v2086 = vshrl.u32 %v2085, 7
      %v2087 = vsub.s32 %v2084, %v2086
      %v2088 = vrot.slane %v2081, %v2087
      %v2089 = vcombine.low %v1919, %v1983
      %v2091 = vunpack.c.l.s4 1983009808
      %v2092 = vunpack.c.0.s8 %v2091
      %v2093 = vlaneseq
      %v2094 = vshrl.u32 %v2093, 7
      %v2095 = vsub.s32 %v2092, %v2094
      %v2096 = vrot.slane %v2089, %v2095
      %v2097 = vcombine.low %v1951, %v2015
      %v2099 = vunpack.c.l.s4 1983009808
      %v2100 = vunpack.c.0.s8 %v2099
      %v2101 = vlaneseq
      %v2102 = vshrl.u32 %v2101, 7
      %v2103 = vsub.s32 %v2100, %v2102
      %v2104 = vrot.slane %v2097, %v2103
      %v2105 = vcombine.low %v2080, %v2088
      %v2107 = vunpack.c.l.s4 1934713408
      %v2108 = vunpack.c.0.s8 %v2107
      %v2109 = vlaneseq
      %v2110 = vshrl.u32 %v2109, 7
      %v2111 = vsub.s32 %v2108, %v2110
      %v2112 = vrot.slane %v2105, %v2111
      %v2113 = vcombine.low %v2096, %v2104
      %v2115 = vunpack.c.l.s4 1934713408
      %v2116 = vunpack.c.0.s8 %v2115
      %v2117 = vlaneseq
      %v2118 = vshrl.u32 %v2117, 7
      %v2119 = vsub.s32 %v2116, %v2118
      %v2120 = vrot.slane %v2113, %v2119
      %v2121 = vcombine.low %v2112, %v2120
      %v2122 = vcombine.high %v2112, %v2120
      %v2125 = vpack.i.b16 %v2121, %v2071
      %v2126 = vshrl.u32 %v2071, 16
      %v2127 = vshrl.u32 %v2121, 16
      %v2128 = vpack.i.b16 %v2127, %v2126
      %v2131 = vpack.i.b16 %v2122, %v2072
      %v2132 = vshrl.u32 %v2072, 16
      %v2133 = vshrl.u32 %v2122, 16
      %v2134 = vpack.i.b16 %v2133, %v2132
      %v2136 = vsel %vm1422, %v2125, 0
      %v2139 = vsel %vm1422, %v1467, 0
      %2141 = vmatprep.subr.bf16.mxu0 0
      %2142 = vmatpush1.bf16.xpose.msra.mxu0 %v2139
      %2143 = vmatprep.subr.bf16.mxu0 0
      %2144 = vmatpush1.bf16.xpose.msra.mxu0 0
      %2145 = vmatprep.subr.bf16.mxu0 0
      %2146 = vmatpush1.bf16.xpose.msra.mxu0 0
      %2147 = vmatprep.subr.bf16.mxu0 0
      %2148 = vmatpush1.bf16.xpose.msra.mxu0 0
      %2149 = vmatprep.subr.bf16.mxu0 0
      %2150 = vmatpush1.bf16.xpose.msra.mxu0 0
      %2151 = vmatprep.subr.bf16.mxu0 0
      %2152 = vmatpush1.bf16.xpose.msra.mxu0 0
      %2153 = vmatprep.subr.bf16.mxu0 0
      %2154 = vmatpush1.bf16.xpose.msra.mxu0 0
      %2155 = vmatprep.subr.bf16.mxu0 0
      %2156 = vmatpush1.bf16.xpose.msra.mxu0 0
      %2157 = vmatprep.subr.bf16.mxu0 0
      %2158 = vmatpush1.bf16.xpose.msra.mxu0 0
      %2159 = vmatprep.subr.bf16.mxu0 0
      %2160 = vmatpush1.bf16.xpose.msra.mxu0 0
      %2161 = vmatprep.subr.bf16.mxu0 0
      %2162 = vmatpush1.bf16.xpose.msra.mxu0 0
      %2163 = vmatprep.subr.bf16.mxu0 0
      %2164 = vmatpush1.bf16.xpose.msra.mxu0 0
      %2165 = vmatprep.subr.bf16.mxu0 0
      %2166 = vmatpush1.bf16.xpose.msra.mxu0 0
      %2167 = vmatprep.subr.bf16.mxu0 0
      %2168 = vmatpush1.bf16.xpose.msra.mxu0 0
      %2169 = vmatprep.subr.bf16.mxu0 0
      %2170 = vmatpush1.bf16.xpose.msra.mxu0 0
      %2171 = vmatprep.subr.bf16.mxu0 0
      %2172 = vmatpush1.bf16.xpose.msra.mxu0 0
      %2173 = vmatprep.mubr.bf16.mxu0 0
      %2174 = vmatmul.mubr.bf16.gmra.mrb[0].mxu0 %v2136
      %v2175 = vpop.f32.mrb[0].mxu0
      %v2176 = vadd.f32 0.0, %v2175
      %v2177 = vpop.f32.mrb[0].mxu0
      %v2178 = vpop.f32.mrb[0].mxu0
      %v2179 = vadd.f32 0.0, %v2178
      %v2180 = vpop.f32.mrb[0].mxu0
      %2181 = vdwg.mxu0
      %v2183 = vsel %vm1422, %v2128, 0
      %v2186 = vsel %vm1422, %v1468, 0
      %2188 = vmatprep.subr.bf16.mxu0 0
      %2189 = vmatpush1.bf16.xpose.msra.mxu0 %v2186
      %2190 = vmatprep.subr.bf16.mxu0 0
      %2191 = vmatpush1.bf16.xpose.msra.mxu0 0
      %2192 = vmatprep.subr.bf16.mxu0 0
      %2193 = vmatpush1.bf16.xpose.msra.mxu0 0
      %2194 = vmatprep.subr.bf16.mxu0 0
      %2195 = vmatpush1.bf16.xpose.msra.mxu0 0
      %2196 = vmatprep.subr.bf16.mxu0 0
      %2197 = vmatpush1.bf16.xpose.msra.mxu0 0
      %2198 = vmatprep.subr.bf16.mxu0 0
      %2199 = vmatpush1.bf16.xpose.msra.mxu0 0
      %2200 = vmatprep.subr.bf16.mxu0 0
      %2201 = vmatpush1.bf16.xpose.msra.mxu0 0
      %2202 = vmatprep.subr.bf16.mxu0 0
      %2203 = vmatpush1.bf16.xpose.msra.mxu0 0
      %2204 = vmatprep.subr.bf16.mxu0 0
      %2205 = vmatpush1.bf16.xpose.msra.mxu0 0
      %2206 = vmatprep.subr.bf16.mxu0 0
      %2207 = vmatpush1.bf16.xpose.msra.mxu0 0
      %2208 = vmatprep.subr.bf16.mxu0 0
      %2209 = vmatpush1.bf16.xpose.msra.mxu0 0
      %2210 = vmatprep.subr.bf16.mxu0 0
      %2211 = vmatpush1.bf16.xpose.msra.mxu0 0
      %2212 = vmatprep.subr.bf16.mxu0 0
      %2213 = vmatpush1.bf16.xpose.msra.mxu0 0
      %2214 = vmatprep.subr.bf16.mxu0 0
      %2215 = vmatpush1.bf16.xpose.msra.mxu0 0
      %2216 = vmatprep.subr.bf16.mxu0 0
      %2217 = vmatpush1.bf16.xpose.msra.mxu0 0
      %2218 = vmatprep.subr.bf16.mxu0 0
      %2219 = vmatpush1.bf16.xpose.msra.mxu0 0
      %2220 = vmatprep.mubr.bf16.mxu0 0
      %2221 = vmatmul.mubr.bf16.gmra.mrb[0].mxu0 %v2183
      %v2222 = vpop.f32.mrb[0].mxu0
      %v2223 = vadd.f32 0.0, %v2222
      %v2224 = vpop.f32.mrb[0].mxu0
      %v2225 = vpop.f32.mrb[0].mxu0
      %v2226 = vadd.f32 0.0, %v2225
      %v2227 = vpop.f32.mrb[0].mxu0
      %2228 = vdwg.mxu0
      %v2230 = vsel %vm1422, %v2131, 0
      %v2233 = vsel %vm1422, %v1469, 0
      %2235 = vmatprep.subr.bf16.mxu0 0
      %2236 = vmatpush1.bf16.xpose.msra.mxu0 %v2233
      %2237 = vmatprep.subr.bf16.mxu0 0
      %2238 = vmatpush1.bf16.xpose.msra.mxu0 0
      %2239 = vmatprep.subr.bf16.mxu0 0
      %2240 = vmatpush1.bf16.xpose.msra.mxu0 0
      %2241 = vmatprep.subr.bf16.mxu0 0
      %2242 = vmatpush1.bf16.xpose.msra.mxu0 0
      %2243 = vmatprep.subr.bf16.mxu0 0
      %2244 = vmatpush1.bf16.xpose.msra.mxu0 0
      %2245 = vmatprep.subr.bf16.mxu0 0
      %2246 = vmatpush1.bf16.xpose.msra.mxu0 0
      %2247 = vmatprep.subr.bf16.mxu0 0
      %2248 = vmatpush1.bf16.xpose.msra.mxu0 0
      %2249 = vmatprep.subr.bf16.mxu0 0
      %2250 = vmatpush1.bf16.xpose.msra.mxu0 0
      %2251 = vmatprep.subr.bf16.mxu0 0
      %2252 = vmatpush1.bf16.xpose.msra.mxu0 0
      %2253 = vmatprep.subr.bf16.mxu0 0
      %2254 = vmatpush1.bf16.xpose.msra.mxu0 0
      %2255 = vmatprep.subr.bf16.mxu0 0
      %2256 = vmatpush1.bf16.xpose.msra.mxu0 0
      %2257 = vmatprep.subr.bf16.mxu0 0
      %2258 = vmatpush1.bf16.xpose.msra.mxu0 0
      %2259 = vmatprep.subr.bf16.mxu0 0
      %2260 = vmatpush1.bf16.xpose.msra.mxu0 0
      %2261 = vmatprep.subr.bf16.mxu0 0
      %2262 = vmatpush1.bf16.xpose.msra.mxu0 0
      %2263 = vmatprep.subr.bf16.mxu0 0
      %2264 = vmatpush1.bf16.xpose.msra.mxu0 0
      %2265 = vmatprep.subr.bf16.mxu0 0
      %2266 = vmatpush1.bf16.xpose.msra.mxu0 0
      %2267 = vmatprep.mubr.bf16.mxu0 0
      %2268 = vmatmul.mubr.bf16.gmra.mrb[0].mxu0 %v2230
      %v2269 = vpop.f32.mrb[0].mxu0
      %v2270 = vadd.f32 0.0, %v2269
      %v2271 = vpop.f32.mrb[0].mxu0
      %v2272 = vpop.f32.mrb[0].mxu0
      %v2273 = vadd.f32 0.0, %v2272
      %v2274 = vpop.f32.mrb[0].mxu0
      %2275 = vdwg.mxu0
      %v2277 = vsel %vm1422, %v2134, 0
      %v2280 = vsel %vm1422, %v1470, 0
      %2282 = vmatprep.subr.bf16.mxu0 0
      %2283 = vmatpush1.bf16.xpose.msra.mxu0 %v2280
      %2284 = vmatprep.subr.bf16.mxu0 0
      %2285 = vmatpush1.bf16.xpose.msra.mxu0 0
      %2286 = vmatprep.subr.bf16.mxu0 0
      %2287 = vmatpush1.bf16.xpose.msra.mxu0 0
      %2288 = vmatprep.subr.bf16.mxu0 0
      %2289 = vmatpush1.bf16.xpose.msra.mxu0 0
      %2290 = vmatprep.subr.bf16.mxu0 0
      %2291 = vmatpush1.bf16.xpose.msra.mxu0 0
      %2292 = vmatprep.subr.bf16.mxu0 0
      %2293 = vmatpush1.bf16.xpose.msra.mxu0 0
      %2294 = vmatprep.subr.bf16.mxu0 0
      %2295 = vmatpush1.bf16.xpose.msra.mxu0 0
      %2296 = vmatprep.subr.bf16.mxu0 0
      %2297 = vmatpush1.bf16.xpose.msra.mxu0 0
      %2298 = vmatprep.subr.bf16.mxu0 0
      %2299 = vmatpush1.bf16.xpose.msra.mxu0 0
      %2300 = vmatprep.subr.bf16.mxu0 0
      %2301 = vmatpush1.bf16.xpose.msra.mxu0 0
      %2302 = vmatprep.subr.bf16.mxu0 0
      %2303 = vmatpush1.bf16.xpose.msra.mxu0 0
      %2304 = vmatprep.subr.bf16.mxu0 0
      %2305 = vmatpush1.bf16.xpose.msra.mxu0 0
      %2306 = vmatprep.subr.bf16.mxu0 0
      %2307 = vmatpush1.bf16.xpose.msra.mxu0 0
      %2308 = vmatprep.subr.bf16.mxu0 0
      %2309 = vmatpush1.bf16.xpose.msra.mxu0 0
      %2310 = vmatprep.subr.bf16.mxu0 0
      %2311 = vmatpush1.bf16.xpose.msra.mxu0 0
      %2312 = vmatprep.subr.bf16.mxu0 0
      %2313 = vmatpush1.bf16.xpose.msra.mxu0 0
      %2314 = vmatprep.mubr.bf16.mxu0 0
      %2315 = vmatmul.mubr.bf16.gmra.mrb[0].mxu0 %v2277
      %v2316 = vpop.f32.mrb[0].mxu0
      %v2317 = vadd.f32 0.0, %v2316
      %v2318 = vpop.f32.mrb[0].mxu0
      %v2319 = vpop.f32.mrb[0].mxu0
      %v2320 = vadd.f32 0.0, %v2319
      %v2321 = vpop.f32.mrb[0].mxu0
      %2322 = vdwg.mxu0
      %2323 = vxpose.xlu0.b32.start [1/16] %v2176, 128
      %2324 = vxpose.xlu0.b32.cont [2/16] %v2179, 128
      %2325 = vxpose.xlu0.b32.cont [3/16] 0.0, 128
      %2326 = vxpose.xlu0.b32.cont [4/16] 0.0, 128
      %2327 = vxpose.xlu0.b32.cont [5/16] 0.0, 128
      %2328 = vxpose.xlu0.b32.cont [6/16] 0.0, 128
      %2329 = vxpose.xlu0.b32.cont [7/16] 0.0, 128
      %2330 = vxpose.xlu0.b32.cont [8/16] 0.0, 128
      %2331 = vxpose.xlu0.b32.cont [9/16] 0.0, 128
      %2332 = vxpose.xlu0.b32.cont [10/16] 0.0, 128
      %2333 = vxpose.xlu0.b32.cont [11/16] 0.0, 128
      %2334 = vxpose.xlu0.b32.cont [12/16] 0.0, 128
      %2335 = vxpose.xlu0.b32.cont [13/16] 0.0, 128
      %2336 = vxpose.xlu0.b32.cont [14/16] 0.0, 128
      %2337 = vxpose.xlu0.b32.cont [15/16] 0.0, 128
      %2338 = vxpose.xlu0.b32.end [16/16] 0.0, 128
      %v2339 = vpop.trf.xlu0
      %v2340 = vpop.trf.xlu0
      %v2341 = vpop.trf.xlu0
      %v2342 = vpop.trf.xlu0
      %v2343 = vpop.trf.xlu0
      %v2344 = vpop.trf.xlu0
      %v2345 = vpop.trf.xlu0
      %v2346 = vpop.trf.xlu0
      %v2347 = vpop.trf.xlu0
      %v2348 = vpop.trf.xlu0
      %v2349 = vpop.trf.xlu0
      %v2350 = vpop.trf.xlu0
      %v2351 = vpop.trf.xlu0
      %v2352 = vpop.trf.xlu0
      %v2353 = vpop.trf.xlu0
      %v2354 = vpop.trf.xlu0
      %2355 = vxpose.xlu0.b32.start [1/16] %v2223, 128
      %2356 = vxpose.xlu0.b32.cont [2/16] %v2226, 128
      %2357 = vxpose.xlu0.b32.cont [3/16] 0.0, 128
      %2358 = vxpose.xlu0.b32.cont [4/16] 0.0, 128
      %2359 = vxpose.xlu0.b32.cont [5/16] 0.0, 128
      %2360 = vxpose.xlu0.b32.cont [6/16] 0.0, 128
      %2361 = vxpose.xlu0.b32.cont [7/16] 0.0, 128
      %2362 = vxpose.xlu0.b32.cont [8/16] 0.0, 128
      %2363 = vxpose.xlu0.b32.cont [9/16] 0.0, 128
      %2364 = vxpose.xlu0.b32.cont [10/16] 0.0, 128
      %2365 = vxpose.xlu0.b32.cont [11/16] 0.0, 128
      %2366 = vxpose.xlu0.b32.cont [12/16] 0.0, 128
      %2367 = vxpose.xlu0.b32.cont [13/16] 0.0, 128
      %2368 = vxpose.xlu0.b32.cont [14/16] 0.0, 128
      %2369 = vxpose.xlu0.b32.cont [15/16] 0.0, 128
      %2370 = vxpose.xlu0.b32.end [16/16] 0.0, 128
      %v2371 = vpop.trf.xlu0
      %v2372 = vpop.trf.xlu0
      %v2373 = vpop.trf.xlu0
      %v2374 = vpop.trf.xlu0
      %v2375 = vpop.trf.xlu0
      %v2376 = vpop.trf.xlu0
      %v2377 = vpop.trf.xlu0
      %v2378 = vpop.trf.xlu0
      %v2379 = vpop.trf.xlu0
      %v2380 = vpop.trf.xlu0
      %v2381 = vpop.trf.xlu0
      %v2382 = vpop.trf.xlu0
      %v2383 = vpop.trf.xlu0
      %v2384 = vpop.trf.xlu0
      %v2385 = vpop.trf.xlu0
      %v2386 = vpop.trf.xlu0
      %2387 = vxpose.xlu0.b32.start [1/16] %v2270, 128
      %2388 = vxpose.xlu0.b32.cont [2/16] %v2273, 128
      %2389 = vxpose.xlu0.b32.cont [3/16] 0.0, 128
      %2390 = vxpose.xlu0.b32.cont [4/16] 0.0, 128
      %2391 = vxpose.xlu0.b32.cont [5/16] 0.0, 128
      %2392 = vxpose.xlu0.b32.cont [6/16] 0.0, 128
      %2393 = vxpose.xlu0.b32.cont [7/16] 0.0, 128
      %2394 = vxpose.xlu0.b32.cont [8/16] 0.0, 128
      %2395 = vxpose.xlu0.b32.cont [9/16] 0.0, 128
      %2396 = vxpose.xlu0.b32.cont [10/16] 0.0, 128
      %2397 = vxpose.xlu0.b32.cont [11/16] 0.0, 128
      %2398 = vxpose.xlu0.b32.cont [12/16] 0.0, 128
      %2399 = vxpose.xlu0.b32.cont [13/16] 0.0, 128
      %2400 = vxpose.xlu0.b32.cont [14/16] 0.0, 128
      %2401 = vxpose.xlu0.b32.cont [15/16] 0.0, 128
      %2402 = vxpose.xlu0.b32.end [16/16] 0.0, 128
      %v2403 = vpop.trf.xlu0
      %v2404 = vpop.trf.xlu0
      %v2405 = vpop.trf.xlu0
      %v2406 = vpop.trf.xlu0
      %v2407 = vpop.trf.xlu0
      %v2408 = vpop.trf.xlu0
      %v2409 = vpop.trf.xlu0
      %v2410 = vpop.trf.xlu0
      %v2411 = vpop.trf.xlu0
      %v2412 = vpop.trf.xlu0
      %v2413 = vpop.trf.xlu0
      %v2414 = vpop.trf.xlu0
      %v2415 = vpop.trf.xlu0
      %v2416 = vpop.trf.xlu0
      %v2417 = vpop.trf.xlu0
      %v2418 = vpop.trf.xlu0
      %2419 = vxpose.xlu0.b32.start [1/16] %v2317, 128
      %2420 = vxpose.xlu0.b32.cont [2/16] %v2320, 128
      %2421 = vxpose.xlu0.b32.cont [3/16] 0.0, 128
      %2422 = vxpose.xlu0.b32.cont [4/16] 0.0, 128
      %2423 = vxpose.xlu0.b32.cont [5/16] 0.0, 128
      %2424 = vxpose.xlu0.b32.cont [6/16] 0.0, 128
      %2425 = vxpose.xlu0.b32.cont [7/16] 0.0, 128
      %2426 = vxpose.xlu0.b32.cont [8/16] 0.0, 128
      %2427 = vxpose.xlu0.b32.cont [9/16] 0.0, 128
      %2428 = vxpose.xlu0.b32.cont [10/16] 0.0, 128
      %2429 = vxpose.xlu0.b32.cont [11/16] 0.0, 128
      %2430 = vxpose.xlu0.b32.cont [12/16] 0.0, 128
      %2431 = vxpose.xlu0.b32.cont [13/16] 0.0, 128
      %2432 = vxpose.xlu0.b32.cont [14/16] 0.0, 128
      %2433 = vxpose.xlu0.b32.cont [15/16] 0.0, 128
      %2434 = vxpose.xlu0.b32.end [16/16] 0.0, 128
      %v2435 = vpop.trf.xlu0
      %v2436 = vpop.trf.xlu0
      %v2437 = vpop.trf.xlu0
      %v2438 = vpop.trf.xlu0
      %v2439 = vpop.trf.xlu0
      %v2440 = vpop.trf.xlu0
      %v2441 = vpop.trf.xlu0
      %v2442 = vpop.trf.xlu0
      %v2443 = vpop.trf.xlu0
      %v2444 = vpop.trf.xlu0
      %v2445 = vpop.trf.xlu0
      %v2446 = vpop.trf.xlu0
      %v2447 = vpop.trf.xlu0
      %v2448 = vpop.trf.xlu0
      %v2449 = vpop.trf.xlu0
      %v2450 = vpop.trf.xlu0
      %v2451 = vcombine.low %v2339, %v2403
      %v2452 = vcombine.high %v2339, %v2403
      %v2454 = vunpack.c.l.s4 1983009808
      %v2455 = vunpack.c.0.s8 %v2454
      %v2456 = vlaneseq
      %v2457 = vshrl.u32 %v2456, 7
      %v2458 = vsub.s32 %v2455, %v2457
      %v2459 = vrot.slane %v2451, %v2458
      %v2461 = vunpack.c.l.s4 1983009808
      %v2462 = vunpack.c.0.s8 %v2461
      %v2463 = vlaneseq
      %v2464 = vshrl.u32 %v2463, 7
      %v2465 = vsub.s32 %v2462, %v2464
      %v2466 = vrot.slane %v2452, %v2465
      %v2467 = vcombine.low %v2371, %v2435
      %v2468 = vcombine.high %v2371, %v2435
      %v2470 = vunpack.c.l.s4 1983009808
      %v2471 = vunpack.c.0.s8 %v2470
      %v2472 = vlaneseq
      %v2473 = vshrl.u32 %v2472, 7
      %v2474 = vsub.s32 %v2471, %v2473
      %v2475 = vrot.slane %v2467, %v2474
      %v2477 = vunpack.c.l.s4 1983009808
      %v2478 = vunpack.c.0.s8 %v2477
      %v2479 = vlaneseq
      %v2480 = vshrl.u32 %v2479, 7
      %v2481 = vsub.s32 %v2478, %v2480
      %v2482 = vrot.slane %v2468, %v2481
      %v2483 = vcombine.low %v2459, %v2475
      %v2484 = vcombine.high %v2459, %v2475
      %v2486 = vunpack.c.l.s4 1934713408
      %v2487 = vunpack.c.0.s8 %v2486
      %v2488 = vlaneseq
      %v2489 = vshrl.u32 %v2488, 7
      %v2490 = vsub.s32 %v2487, %v2489
      %v2491 = vrot.slane %v2483, %v2490
      %v2493 = vunpack.c.l.s4 1934713408
      %v2494 = vunpack.c.0.s8 %v2493
      %v2495 = vlaneseq
      %v2496 = vshrl.u32 %v2495, 7
      %v2497 = vsub.s32 %v2494, %v2496
      %v2498 = vrot.slane %v2484, %v2497
      %v2499 = vcombine.low %v2466, %v2482
      %v2500 = vcombine.high %v2466, %v2482
      %v2502 = vunpack.c.l.s4 1934713408
      %v2503 = vunpack.c.0.s8 %v2502
      %v2504 = vlaneseq
      %v2505 = vshrl.u32 %v2504, 7
      %v2506 = vsub.s32 %v2503, %v2505
      %v2507 = vrot.slane %v2499, %v2506
      %v2509 = vunpack.c.l.s4 1934713408
      %v2510 = vunpack.c.0.s8 %v2509
      %v2511 = vlaneseq
      %v2512 = vshrl.u32 %v2511, 7
      %v2513 = vsub.s32 %v2510, %v2512
      %v2514 = vrot.slane %v2500, %v2513
      %v2515 = vcombine.high %v2491, 0.0
      %v2516 = vcombine.high %v2498, 0.0
      %v2517 = vcombine.high %v2507, 0.0
      %v2518 = vcombine.high %v2514, 0.0
      %v2519 = vcombine.low %v2491, %v2498
      %v2521 = vunpack.c.l.s4 1983009808
      %v2522 = vunpack.c.0.s8 %v2521
      %v2523 = vlaneseq
      %v2524 = vshrl.u32 %v2523, 7
      %v2525 = vsub.s32 %v2522, %v2524
      %v2526 = vrot.slane %v2519, %v2525
      %v2527 = vcombine.low %v2515, %v2516
      %v2529 = vunpack.c.l.s4 1983009808
      %v2530 = vunpack.c.0.s8 %v2529
      %v2531 = vlaneseq
      %v2532 = vshrl.u32 %v2531, 7
      %v2533 = vsub.s32 %v2530, %v2532
      %v2534 = vrot.slane %v2527, %v2533
      %v2535 = vcombine.low %v2507, %v2514
      %v2537 = vunpack.c.l.s4 1983009808
      %v2538 = vunpack.c.0.s8 %v2537
      %v2539 = vlaneseq
      %v2540 = vshrl.u32 %v2539, 7
      %v2541 = vsub.s32 %v2538, %v2540
      %v2542 = vrot.slane %v2535, %v2541
      %v2543 = vcombine.low %v2517, %v2518
      %v2545 = vunpack.c.l.s4 1983009808
      %v2546 = vunpack.c.0.s8 %v2545
      %v2547 = vlaneseq
      %v2548 = vshrl.u32 %v2547, 7
      %v2549 = vsub.s32 %v2546, %v2548
      %v2550 = vrot.slane %v2543, %v2549
      %v2551 = vcombine.low %v2526, %v2534
      %v2552 = vcombine.high %v2526, %v2534
      %v2554 = vunpack.c.l.s4 1934713408
      %v2555 = vunpack.c.0.s8 %v2554
      %v2556 = vlaneseq
      %v2557 = vshrl.u32 %v2556, 7
      %v2558 = vsub.s32 %v2555, %v2557
      %v2559 = vrot.slane %v2551, %v2558
      %v2561 = vunpack.c.l.s4 1934713408
      %v2562 = vunpack.c.0.s8 %v2561
      %v2563 = vlaneseq
      %v2564 = vshrl.u32 %v2563, 7
      %v2565 = vsub.s32 %v2562, %v2564
      %v2566 = vrot.slane %v2552, %v2565
      %v2567 = vcombine.low %v2542, %v2550
      %v2568 = vcombine.high %v2542, %v2550
      %v2570 = vunpack.c.l.s4 1934713408
      %v2571 = vunpack.c.0.s8 %v2570
      %v2572 = vlaneseq
      %v2573 = vshrl.u32 %v2572, 7
      %v2574 = vsub.s32 %v2571, %v2573
      %v2575 = vrot.slane %v2567, %v2574
      %v2577 = vunpack.c.l.s4 1934713408
      %v2578 = vunpack.c.0.s8 %v2577
      %v2579 = vlaneseq
      %v2580 = vshrl.u32 %v2579, 7
      %v2581 = vsub.s32 %v2578, %v2580
      %v2582 = vrot.slane %v2568, %v2581
      %v2583 = vcombine.low %v2559, %v2575
      %v2584 = vcombine.high %v2559, %v2575
      %v2585 = vcombine.low %v2566, %v2582
      %v2586 = vcombine.high %v2566, %v2582
      %2588 = vrot.lane.b32.xlu0 %v2584, 16
      %v2589 = vpop.permute.xlu0 %2588
      %2592 = vrot.lane.b32.xlu0 %v2585, 32
      %v2593 = vpop.permute.xlu0 %2592
      %2596 = vrot.lane.b32.xlu0 %v2586, 48
      %v2597 = vpop.permute.xlu0 %2596
      %v2599 = vsel %vm1245, %v2583, %v2589
      %vm2600 = vcmask 261120
      %v2601 = vsel %vm2600, %v2599, %v2593
      %vm2602 = vcmask 392192
      %v2603 = vsel %vm2602, %v2601, %v2597
      %vm2604 = vcmask 523264
      %2605 = vst.msk [vmem:[%s252] sm:$0xff] %vm2604, %v2603
      %p2606 = scmp.lt.s32.totalorder %s18, 1
      %s2607 = scalar_select %p2606, %s18, 1
      %p2608 = scmp.lt.s32.totalorder %s19, 0
      %s2609 = scalar_select %p2608, %s19, 0
      %s2610 = sadd.s32 %s2609, %s2607
      %s2611 = smul.addr %s2610, 8
      %s2612 = scalar_lea.vmem %s3, %s2611
      // Predicated region
      $region33: #{whisper_base_feats.21} parent=31 // pred_check
        %p2613 = pneg %p130
      $region34: #{whisper_base_feats.21} parent=31 // pred_check_branch
        %2615 = sbr.rel (%p2613) target = $region36
      $region35: #{whisper_base_feats.21} parent=31 // pred_region
        _
      $region36: #{whisper_base_feats.21} parent=31 // pred_fallthru
        _
    $region32: #{whisper_base_feats.21} parent=5 // pred_fallthru
      _
    %p2616 = scmp.le.s32.totalorder 2, %s9
    // Predicated region
    $region37: #{whisper_base_feats.21} parent=5 // pred_check
      %p2617 = pneg %p2616
    $region38: #{whisper_base_feats.21} parent=5 // pred_check_branch
      %2619 = sbr.rel (%p2617) target = $region40
    $region39: #{whisper_base_feats.21} parent=5 // pred_region
      %s2620 = ssub.s32 %s9, 2
      // Predicated region
      $region41: #{whisper_base_feats.21} parent=39 // pred_check
        %p2621 = pneg %p136
      $region42: #{whisper_base_feats.21} parent=39 // pred_check_branch
        %2623 = sbr.rel (%p2621) target = $region44
      $region43: #{whisper_base_feats.21} parent=39 // pred_region
        %p2624 = scmp.lt.s32.totalorder %s20, 1
        %s2625 = scalar_select %p2624, %s20, 1
        %p2626 = scmp.lt.s32.totalorder %s21, 0
        %s2627 = scalar_select %p2626, %s21, 0
        %s2628 = sadd.s32 %s2627, %s2625
        %s2629 = smul.addr %s2628, 8
        %s2630 = scalar_lea.vmem %s3, %s2629
      $region44: #{whisper_base_feats.21} parent=39 // pred_fallthru
        _
    $region40: #{whisper_base_feats.21} parent=5 // pred_fallthru
      _
  $region6: #{whisper_base_feats.21} parent=0 // loop_footer
    %s13 = sadd.s32 1, %s9
  $region7: #{whisper_base_feats.21} parent=0 // loop_footer_branch
    %8 = sbr.rel target = $region3
  $region8: #{whisper_base_feats.21} parent=0 // loop_exit
    _

</llo_original>
